<compile_context>
chip_gen: v7x
topology: tpu7x:2x2x1
jax: 0.10.0
libtpu: 0.0.40
codegen_flags: <defaults>
</compile_context>

<pallas_src>
import jax
import jax.numpy as jnp
from jax.experimental import pallas as pl
from jax.experimental.pallas import tpu as pltpu

BN_EPS = 1e-5
CPAD = 128  # every conv's output channels are zero-padded to this lane width
_VMEM = pl.BlockSpec(memory_space=pltpu.MemorySpace.VMEM)


# ----------------------------------------------------------------------------
# Pallas kernels
# ----------------------------------------------------------------------------
def _conv_kernel(p_ref, w_ref, scale_ref, shift_ref, o_ref):
    """relu((patches @ W) * scale + shift); bf16 operands, f32 accumulate."""
    z = jnp.dot(p_ref[...], w_ref[...], preferred_element_type=jnp.float32)
    z = z * scale_ref[...] + shift_ref[...]
    o_ref[...] = jnp.maximum(z, 0.0).astype(o_ref.dtype)


def _conv_residual_kernel(p_ref, w_ref, scale_ref, shift_ref,
                          ps_ref, ws_ref, sscale_ref, sshift_ref, o_ref):
    """relu(bn2(conv2(y1)) + bn_sc(conv1x1_sc(x))) fused in one kernel."""
    z = jnp.dot(p_ref[...], w_ref[...], preferred_element_type=jnp.float32)
    z = z * scale_ref[...] + shift_ref[...]
    r = jnp.dot(ps_ref[...], ws_ref[...], preferred_element_type=jnp.float32)
    r = r * sscale_ref[...] + sshift_ref[...]
    o_ref[...] = jnp.maximum(z + r, 0.0).astype(o_ref.dtype)


def _tail_kernel(p_ref, w_ref, scale_ref, shift_ref,
                 ps_ref, ws_ref, sscale_ref, sshift_ref,
                 pool_ref, fcw_ref, fcb_ref, o_ref):
    """Final block: conv2+bn2 + shortcut + add + relu + global-avg-pool + fc."""
    z = jnp.dot(p_ref[...], w_ref[...], preferred_element_type=jnp.float32)
    z = z * scale_ref[...] + shift_ref[...]
    r = jnp.dot(ps_ref[...], ws_ref[...], preferred_element_type=jnp.float32)
    r = r * sscale_ref[...] + sshift_ref[...]
    act = jnp.maximum(z + r, 0.0)                               # [M, C] f32
    pooled = jnp.dot(pool_ref[...], act,
                     preferred_element_type=jnp.float32)        # [B, C]
    logits = jnp.dot(pooled, fcw_ref[...],
                     preferred_element_type=jnp.float32) + fcb_ref[...]
    o_ref[...] = logits.astype(o_ref.dtype)


# ----------------------------------------------------------------------------
# pallas_call wrappers (M-gridded, lane-dense outputs)
# ----------------------------------------------------------------------------
def _tile_m(m):
    for t in (512, 256, 128, 64, 32, 16, 8):
        if m >= t and m % t == 0:
            return t
    return m


def fused_conv(patches, w, scale, shift):
    m, k = patches.shape
    n = w.shape[1]
    tm = _tile_m(m)
    return pl.pallas_call(
        _conv_kernel,
        out_shape=jax.ShapeDtypeStruct((m, n), jnp.bfloat16),
        grid_spec=pltpu.PrefetchScalarGridSpec(
            num_scalar_prefetch=0,
            grid=(m // tm,),
            in_specs=[
                pl.BlockSpec((tm, k), lambda i: (i, 0)),
                pl.BlockSpec((k, n), lambda i: (0, 0)),
                pl.BlockSpec((1, n), lambda i: (0, 0)),
                pl.BlockSpec((1, n), lambda i: (0, 0)),
            ],
            out_specs=pl.BlockSpec((tm, n), lambda i: (i, 0)),
        ),
        compiler_params=pltpu.CompilerParams(
            dimension_semantics=("parallel",)),
    )(patches, w, scale, shift)


def fused_conv_residual(patches, w, scale, shift, spatches, sw, sscale, sshift):
    m, k = patches.shape
    n = w.shape[1]
    ks = spatches.shape[1]
    tm = _tile_m(m)
    return pl.pallas_call(
        _conv_residual_kernel,
        out_shape=jax.ShapeDtypeStruct((m, n), jnp.bfloat16),
        grid_spec=pltpu.PrefetchScalarGridSpec(
            num_scalar_prefetch=0,
            grid=(m // tm,),
            in_specs=[
                pl.BlockSpec((tm, k), lambda i: (i, 0)),
                pl.BlockSpec((k, n), lambda i: (0, 0)),
                pl.BlockSpec((1, n), lambda i: (0, 0)),
                pl.BlockSpec((1, n), lambda i: (0, 0)),
                pl.BlockSpec((tm, ks), lambda i: (i, 0)),
                pl.BlockSpec((ks, n), lambda i: (0, 0)),
                pl.BlockSpec((1, n), lambda i: (0, 0)),
                pl.BlockSpec((1, n), lambda i: (0, 0)),
            ],
            out_specs=pl.BlockSpec((tm, n), lambda i: (i, 0)),
        ),
        compiler_params=pltpu.CompilerParams(
            dimension_semantics=("parallel",)),
    )(patches, w, scale, shift, spatches, sw, sscale, sshift)


def fused_tail(patches, w, scale, shift, spatches, sw, sscale, sshift,
               pool_mat, fc_w, fc_b):
    b = pool_mat.shape[0]
    n_out = fc_w.shape[1]
    return pl.pallas_call(
        _tail_kernel,
        out_shape=jax.ShapeDtypeStruct((b, n_out), jnp.float32),
        in_specs=[_VMEM] * 11,
        out_specs=_VMEM,
    )(patches, w, scale, shift, spatches, sw, sscale, sshift,
      pool_mat, fc_w, fc_b)


# ----------------------------------------------------------------------------
# XLA glue: im2col (bf16 patches) — stays outside the kernel (see TODO above)
# ----------------------------------------------------------------------------
def im2col(x_nhwc, kh, kw, stride, pad):
    b, h, w, c = x_nhwc.shape
    xp = jnp.pad(x_nhwc, ((0, 0), (pad, pad), (pad, pad), (0, 0)))
    oh = (h + 2 * pad - kh) // stride + 1
    ow = (w + 2 * pad - kw) // stride + 1
    cols = []
    for i in range(kh):
        for j in range(kw):
            cols.append(xp[:, i:i + stride * oh:stride,
                           j:j + stride * ow:stride, :])
    patches = jnp.stack(cols, axis=3)                 # [B, OH, OW, KH*KW, C]
    return patches.reshape(b * oh * ow, kh * kw * c), oh, ow


# ----------------------------------------------------------------------------
# One-time parameter preprocessing (outside the jitted forward)
# ----------------------------------------------------------------------------
def conv_weight_to_matrix(w_oihw, ic_pad, oc_pad):
    """[OC,IC,KH,KW] -> bf16 [KH*KW*ic_pad, oc_pad], (kh,kw,c) row order."""
    oc, ic, kh, kw = w_oihw.shape
    w = jnp.pad(w_oihw, ((0, oc_pad - oc), (0, ic_pad - ic), (0, 0), (0, 0)))
    w = jnp.transpose(w, (2, 3, 1, 0)).reshape(kh * kw * ic_pad, oc_pad)
    return w.astype(jnp.bfloat16)


def fold_bias_bn(bias, bn_scale, bn_shift, oc_pad):
    """Fold conv bias into BN affine; return (1, oc_pad) f32 scale / shift."""
    oc = bias.shape[0]
    shift = bn_scale * bias + bn_shift
    scale_p = jnp.pad(bn_scale, (0, oc_pad - oc), constant_values=1.0)
    shift_p = jnp.pad(shift, (0, oc_pad - oc))
    return (scale_p.reshape(1, oc_pad).astype(jnp.float32),
            shift_p.reshape(1, oc_pad).astype(jnp.float32))


def prepare_params(params, batch, spatial):
    pp = {}
    # stem: conv 3->32, no BN (scale = 1, shift = bias)
    pp['stem_w'] = conv_weight_to_matrix(params['conv_w'], 3, CPAD)
    pp['stem_scale'], pp['stem_shift'] = fold_bias_bn(
        params['conv_b'], jnp.ones((32,), jnp.float32),
        jnp.zeros((32,), jnp.float32), CPAD)

    def block(p):
        q = {}
        q['w1'] = conv_weight_to_matrix(p['w1'], CPAD, CPAD)
        q['s1'], q['t1'] = fold_bias_bn(p['b1'], p['bn1_scale'], p['bn1_shift'], CPAD)
        q['w2'] = conv_weight_to_matrix(p['w2'], CPAD, CPAD)
        q['s2'], q['t2'] = fold_bias_bn(p['b2'], p['bn2_scale'], p['bn2_shift'], CPAD)
        q['wsc'] = conv_weight_to_matrix(p['wsc'], CPAD, CPAD)
        q['ssc'], q['tsc'] = fold_bias_bn(p['bsc'], p['bnsc_scale'], p['bnsc_shift'], CPAD)
        return q

    pp['rb1'] = block(params['rb1'])
    pp['rb2'] = block(params['rb2'])

    pp['fc_w'] = jnp.transpose(params['fc_w'], (1, 0)).astype(jnp.float32)   # [128,10]
    pp['fc_b'] = params['fc_b'].reshape(1, -1).astype(jnp.float32)

    # global-average-pool expressed as a [B, B*Sf] matmul (Sf = final H*W)
    sf = (spatial // 4) * (spatial // 4)
    pp['pool'] = jnp.repeat(jnp.eye(batch, dtype=jnp.float32), sf, axis=1) / sf
    return pp


# ----------------------------------------------------------------------------
# Parameter initialization (deterministic, PyTorch-like shapes)
# ----------------------------------------------------------------------------
def init_conv(key, oc, ic, kh, kw):
    k1, k2 = jax.random.split(key)
    fan_in = ic * kh * kw
    bound = 1.0 / jnp.sqrt(jnp.float32(fan_in))
    w = jax.random.uniform(k1, (oc, ic, kh, kw), jnp.float32, -bound, bound)
    b = jax.random.uniform(k2, (oc,), jnp.float32, -bound, bound)
    return w, b


def init_bn(key, c):
    """Return folded eval-mode BN scale/shift."""
    k1, k2, k3, k4 = jax.random.split(key, 4)
    gamma = 1.0 + 0.1 * jax.random.normal(k1, (c,), jnp.float32)
    beta = 0.1 * jax.random.normal(k2, (c,), jnp.float32)
    mean = 0.1 * jax.random.normal(k3, (c,), jnp.float32)
    var = 1.0 + 0.1 * jax.random.uniform(k4, (c,), jnp.float32)
    scale = gamma / jnp.sqrt(var + BN_EPS)
    shift = beta - mean * scale
    return scale, shift


def init_resblock(key, cin, cout):
    ks = jax.random.split(key, 6)
    w1, b1 = init_conv(ks[0], cout, cin, 3, 3)
    s1, t1 = init_bn(ks[1], cout)
    w2, b2 = init_conv(ks[2], cout, cout, 3, 3)
    s2, t2 = init_bn(ks[3], cout)
    wsc, bsc = init_conv(ks[4], cout, cin, 1, 1)
    ssc, tsc = init_bn(ks[5], cout)
    return dict(w1=w1, b1=b1, bn1_scale=s1, bn1_shift=t1,
                w2=w2, b2=b2, bn2_scale=s2, bn2_shift=t2,
                wsc=wsc, bsc=bsc, bnsc_scale=ssc, bnsc_shift=tsc)


def init_params(key):
    ks = jax.random.split(key, 5)
    conv_w, conv_b = init_conv(ks[0], 32, 3, 3, 3)
    rb1 = init_resblock(ks[1], 32, 64)
    rb2 = init_resblock(ks[2], 64, 128)
    bound = 1.0 / jnp.sqrt(jnp.float32(128))
    fc_w = jax.random.uniform(ks[3], (10, 128), jnp.float32, -bound, bound)
    fc_b = jax.random.uniform(ks[4], (10,), jnp.float32, -bound, bound)
    return dict(conv_w=conv_w, conv_b=conv_b, rb1=rb1, rb2=rb2,
                fc_w=fc_w, fc_b=fc_b)


# ----------------------------------------------------------------------------
# Forward pass
# ----------------------------------------------------------------------------
def _resblock_front(x_nhwc, q, stride):
    """conv1+bn1+relu, plus the strided rows feeding the 1x1 shortcut."""
    b = x_nhwc.shape[0]
    p1, oh, ow = im2col(x_nhwc, 3, 3, stride, 1)
    y1 = fused_conv(p1, q['w1'], q['s1'], q['t1']).reshape(b, oh, ow, CPAD)
    xs = x_nhwc[:, ::stride, ::stride, :].reshape(b * oh * ow, x_nhwc.shape[-1])
    return y1, xs, oh, ow


def model_forward(x_nchw, pp):
    x = jnp.transpose(x_nchw, (0, 2, 3, 1)).astype(jnp.bfloat16)   # NHWC, bf16
    b = x.shape[0]

    # stem conv (3->32, 3x3, pad 1) + relu (channels zero-padded to 128)
    p0, oh, ow = im2col(x, 3, 3, 1, 1)
    y = fused_conv(p0, pp['stem_w'], pp['stem_scale'], pp['stem_shift'])
    y = y.reshape(b, oh, ow, CPAD)

    # residual block 1 (32 -> 64, stride 2); conv2 + shortcut + add + relu fused
    q = pp['rb1']
    y1, xs, oh, ow = _resblock_front(y, q, 2)
    p2, _, _ = im2col(y1, 3, 3, 1, 1)
    y = fused_conv_residual(p2, q['w2'], q['s2'], q['t2'],
                            xs, q['wsc'], q['ssc'], q['tsc'])
    y = y.reshape(b, oh, ow, CPAD)

    # residual block 2 (64 -> 128, stride 2) fused with avg-pool + fc
    q = pp['rb2']
    y2, xs, oh, ow = _resblock_front(y, q, 2)
    assert pp['pool'].shape == (b, b * oh * ow)
    p2, _, _ = im2col(y2, 3, 3, 1, 1)
    logits = fused_tail(p2, q['w2'], q['s2'], q['t2'],
                        xs, q['wsc'], q['ssc'], q['tsc'],
                        pp['pool'], pp['fc_w'], pp['fc_b'])
    return logits                                                  # [B, 10]


if __name__ == "__main__":
    key = jax.random.PRNGKey(0)
    k_param, k_input = jax.random.split(key)
    params = init_params(k_param)

    batch, spatial = 2, 16
    x = jax.random.normal(k_input, (batch, 3, spatial, spatial), jnp.float32)

    # one-time weight reshape / BN+bias fold / channel pad / bf16 cast
    prepped = prepare_params(params, batch, spatial)

    fwd = jax.jit(model_forward)
    logits = fwd(x, prepped)
    jax.block_until_ready(logits)

    assert logits.shape == (batch, 10)
    assert logits.dtype == jnp.float32
    assert bool(jnp.all(jnp.isfinite(logits)))
    print("KERNEL_OK")
</pallas_src>

<mosaic_0001>
module attributes {stable_mosaic.version = 11 : i64} {
  func.func @_conv_kernel(%arg0: i32, %arg1: memref<512x27xbf16, #tpu.memory_space<vmem>>, %arg2: memref<27x128xbf16, #tpu.memory_space<vmem>>, %arg3: memref<1x128xf32, #tpu.memory_space<vmem>>, %arg4: memref<1x128xf32, #tpu.memory_space<vmem>>, %arg5: memref<512x128xbf16, #tpu.memory_space<vmem>>) attributes {dimension_semantics = [#tpu.dimension_semantics<parallel>], iteration_bounds = array<i64: 1>, scalar_prefetch = 0 : i64, scratch_operands = 0 : i64, tpu.core_type = #tpu.core_type<tc>, window_params = [{transform_indices = @transform_0, window_bounds = array<i64: 512, 27>}, {pipeline_mode = #tpu.pipeline_mode<synchronous>, transform_indices = @transform_1, window_bounds = array<i64: 27, 128>}, {pipeline_mode = #tpu.pipeline_mode<synchronous>, transform_indices = @transform_2, window_bounds = array<i64: 1, 128>}, {pipeline_mode = #tpu.pipeline_mode<synchronous>, transform_indices = @transform_3, window_bounds = array<i64: 1, 128>}, {transform_indices = @transform_4, window_bounds = array<i64: 512, 128>}]} {
    %c0 = arith.constant 0 : index
    %c0_0 = arith.constant 0 : index
    %0 = vector.load %arg1[%c0, %c0_0] : memref<512x27xbf16, #tpu.memory_space<vmem>>, vector<512x27xbf16>
    %c0_1 = arith.constant 0 : index
    %c0_2 = arith.constant 0 : index
    %1 = vector.load %arg2[%c0_1, %c0_2] : memref<27x128xbf16, #tpu.memory_space<vmem>>, vector<27x128xbf16>
    %cst = arith.constant dense<0.000000e+00> : vector<512x128xf32>
    %2 = tpu.matmul %0, %1, %cst {dimension_numbers = #tpu.dot_dimension_numbers<[1], [0], [0], [1], [0, 0, 1, 1], [], []>} : vector<512x27xbf16>, vector<27x128xbf16>, vector<512x128xf32> -> vector<512x128xf32>
    %c0_3 = arith.constant 0 : index
    %c0_4 = arith.constant 0 : index
    %3 = vector.load %arg3[%c0_3, %c0_4] : memref<1x128xf32, #tpu.memory_space<vmem>>, vector<1x128xf32>
    %4 = vector.broadcast %3 : vector<1x128xf32> to vector<512x128xf32>
    %5 = arith.mulf %2, %4 : vector<512x128xf32>
    %c0_5 = arith.constant 0 : index
    %c0_6 = arith.constant 0 : index
    %6 = vector.load %arg4[%c0_5, %c0_6] : memref<1x128xf32, #tpu.memory_space<vmem>>, vector<1x128xf32>
    %7 = vector.broadcast %6 : vector<1x128xf32> to vector<512x128xf32>
    %8 = arith.addf %5, %7 : vector<512x128xf32>
    %cst_7 = arith.constant 0.000000e+00 : f32
    %9 = vector.broadcast %cst_7 : f32 to vector<512x128xf32>
    %10 = arith.maximumf %8, %9 : vector<512x128xf32>
    %11 = arith.truncf %10 : vector<512x128xf32> to vector<512x128xbf16>
    %c0_8 = arith.constant 0 : index
    %c0_9 = arith.constant 0 : index
    %12 = vector.load %arg5[%c0_8, %c0_9] : memref<512x128xbf16, #tpu.memory_space<vmem>>, vector<512x128xbf16>
    tpu.vector_store %arg5[%c0_8, %c0_9], %11 {strides = array<i32>} : memref<512x128xbf16, #tpu.memory_space<vmem>>, vector<512x128xbf16>,
    return
  }
  func.func @transform_0(%arg0: i32) -> (i32, i32) {
    %c0_i32 = arith.constant 0 : i32
    %c0_i32_0 = arith.constant 0 : i32
    return %arg0, %c0_i32 : i32, i32
  }
  func.func @transform_1(%arg0: i32) -> (i32, i32) {
    %c0_i32 = arith.constant 0 : i32
    %c0_i32_0 = arith.constant 0 : i32
    %c0_i32_1 = arith.constant 0 : i32
    return %c0_i32, %c0_i32_0 : i32, i32
  }
  func.func @transform_2(%arg0: i32) -> (i32, i32) {
    %c0_i32 = arith.constant 0 : i32
    %c0_i32_0 = arith.constant 0 : i32
    %c0_i32_1 = arith.constant 0 : i32
    return %c0_i32, %c0_i32_0 : i32, i32
  }
  func.func @transform_3(%arg0: i32) -> (i32, i32) {
    %c0_i32 = arith.constant 0 : i32
    %c0_i32_0 = arith.constant 0 : i32
    %c0_i32_1 = arith.constant 0 : i32
    return %c0_i32, %c0_i32_0 : i32, i32
  }
  func.func @transform_4(%arg0: i32) -> (i32, i32) {
    %c0_i32 = arith.constant 0 : i32
    %c0_i32_0 = arith.constant 0 : i32
    return %arg0, %c0_i32 : i32, i32
  }
}

module attributes {stable_mosaic.version = 11 : i64} {
  func.func @_conv_kernel(%arg0: i32, %arg1: memref<128x1152xbf16, #tpu.memory_space<vmem>>, %arg2: memref<1152x128xbf16, #tpu.memory_space<vmem>>, %arg3: memref<1x128xf32, #tpu.memory_space<vmem>>, %arg4: memref<1x128xf32, #tpu.memory_space<vmem>>, %arg5: memref<128x128xbf16, #tpu.memory_space<vmem>>) attributes {dimension_semantics = [#tpu.dimension_semantics<parallel>], iteration_bounds = array<i64: 1>, scalar_prefetch = 0 : i64, scratch_operands = 0 : i64, tpu.core_type = #tpu.core_type<tc>, window_params = [{transform_indices = @transform_0, window_bounds = array<i64: 128, 1152>}, {pipeline_mode = #tpu.pipeline_mode<synchronous>, transform_indices = @transform_1, window_bounds = array<i64: 1152, 128>}, {pipeline_mode = #tpu.pipeline_mode<synchronous>, transform_indices = @transform_2, window_bounds = array<i64: 1, 128>}, {pipeline_mode = #tpu.pipeline_mode<synchronous>, transform_indices = @transform_3, window_bounds = array<i64: 1, 128>}, {transform_indices = @transform_4, window_bounds = array<i64: 128, 128>}]} {
    %c0 = arith.constant 0 : index
    %c0_0 = arith.constant 0 : index
    %0 = vector.load %arg1[%c0, %c0_0] : memref<128x1152xbf16, #tpu.memory_space<vmem>>, vector<128x1152xbf16>
    %c0_1 = arith.constant 0 : index
    %c0_2 = arith.constant 0 : index
    %1 = vector.load %arg2[%c0_1, %c0_2] : memref<1152x128xbf16, #tpu.memory_space<vmem>>, vector<1152x128xbf16>
    %cst = arith.constant dense<0.000000e+00> : vector<128x128xf32>
    %2 = tpu.matmul %0, %1, %cst {dimension_numbers = #tpu.dot_dimension_numbers<[1], [0], [0], [1], [0, 0, 1, 1], [], []>} : vector<128x1152xbf16>, vector<1152x128xbf16>, vector<128x128xf32> -> vector<128x128xf32>
    %c0_3 = arith.constant 0 : index
    %c0_4 = arith.constant 0 : index
    %3 = vector.load %arg3[%c0_3, %c0_4] : memref<1x128xf32, #tpu.memory_space<vmem>>, vector<1x128xf32>
    %4 = vector.broadcast %3 : vector<1x128xf32> to vector<128x128xf32>
    %5 = arith.mulf %2, %4 : vector<128x128xf32>
    %c0_5 = arith.constant 0 : index
    %c0_6 = arith.constant 0 : index
    %6 = vector.load %arg4[%c0_5, %c0_6] : memref<1x128xf32, #tpu.memory_space<vmem>>, vector<1x128xf32>
    %7 = vector.broadcast %6 : vector<1x128xf32> to vector<128x128xf32>
    %8 = arith.addf %5, %7 : vector<128x128xf32>
    %cst_7 = arith.constant 0.000000e+00 : f32
    %9 = vector.broadcast %cst_7 : f32 to vector<128x128xf32>
    %10 = arith.maximumf %8, %9 : vector<128x128xf32>
    %11 = arith.truncf %10 : vector<128x128xf32> to vector<128x128xbf16>
    %c0_8 = arith.constant 0 : index
    %c0_9 = arith.constant 0 : index
    %12 = vector.load %arg5[%c0_8, %c0_9] : memref<128x128xbf16, #tpu.memory_space<vmem>>, vector<128x128xbf16>
    tpu.vector_store %arg5[%c0_8, %c0_9], %11 {strides = array<i32>} : memref<128x128xbf16, #tpu.memory_space<vmem>>, vector<128x128xbf16>,
    return
  }
  func.func @transform_0(%arg0: i32) -> (i32, i32) {
    %c0_i32 = arith.constant 0 : i32
    %c0_i32_0 = arith.constant 0 : i32
    return %arg0, %c0_i32 : i32, i32
  }
  func.func @transform_1(%arg0: i32) -> (i32, i32) {
    %c0_i32 = arith.constant 0 : i32
    %c0_i32_0 = arith.constant 0 : i32
    %c0_i32_1 = arith.constant 0 : i32
    return %c0_i32, %c0_i32_0 : i32, i32
  }
  func.func @transform_2(%arg0: i32) -> (i32, i32) {
    %c0_i32 = arith.constant 0 : i32
    %c0_i32_0 = arith.constant 0 : i32
    %c0_i32_1 = arith.constant 0 : i32
    return %c0_i32, %c0_i32_0 : i32, i32
  }
  func.func @transform_3(%arg0: i32) -> (i32, i32) {
    %c0_i32 = arith.constant 0 : i32
    %c0_i32_0 = arith.constant 0 : i32
    %c0_i32_1 = arith.constant 0 : i32
    return %c0_i32, %c0_i32_0 : i32, i32
  }
  func.func @transform_4(%arg0: i32) -> (i32, i32) {
    %c0_i32 = arith.constant 0 : i32
    %c0_i32_0 = arith.constant 0 : i32
    return %arg0, %c0_i32 : i32, i32
  }
}

module attributes {stable_mosaic.version = 11 : i64} {
  func.func @_conv_residual_kernel(%arg0: i32, %arg1: memref<128x1152xbf16, #tpu.memory_space<vmem>>, %arg2: memref<1152x128xbf16, #tpu.memory_space<vmem>>, %arg3: memref<1x128xf32, #tpu.memory_space<vmem>>, %arg4: memref<1x128xf32, #tpu.memory_space<vmem>>, %arg5: memref<128x128xbf16, #tpu.memory_space<vmem>>, %arg6: memref<128x128xbf16, #tpu.memory_space<vmem>>, %arg7: memref<1x128xf32, #tpu.memory_space<vmem>>, %arg8: memref<1x128xf32, #tpu.memory_space<vmem>>, %arg9: memref<128x128xbf16, #tpu.memory_space<vmem>>) attributes {dimension_semantics = [#tpu.dimension_semantics<parallel>], iteration_bounds = array<i64: 1>, scalar_prefetch = 0 : i64, scratch_operands = 0 : i64, tpu.core_type = #tpu.core_type<tc>, window_params = [{transform_indices = @transform_0, window_bounds = array<i64: 128, 1152>}, {pipeline_mode = #tpu.pipeline_mode<synchronous>, transform_indices = @transform_1, window_bounds = array<i64: 1152, 128>}, {pipeline_mode = #tpu.pipeline_mode<synchronous>, transform_indices = @transform_2, window_bounds = array<i64: 1, 128>}, {pipeline_mode = #tpu.pipeline_mode<synchronous>, transform_indices = @transform_3, window_bounds = array<i64: 1, 128>}, {transform_indices = @transform_4, window_bounds = array<i64: 128, 128>}, {pipeline_mode = #tpu.pipeline_mode<synchronous>, transform_indices = @transform_5, window_bounds = array<i64: 128, 128>}, {pipeline_mode = #tpu.pipeline_mode<synchronous>, transform_indices = @transform_6, window_bounds = array<i64: 1, 128>}, {pipeline_mode = #tpu.pipeline_mode<synchronous>, transform_indices = @transform_7, window_bounds = array<i64: 1, 128>}, {transform_indices = @transform_8, window_bounds = array<i64: 128, 128>}]} {
    %c0 = arith.constant 0 : index
    %c0_0 = arith.constant 0 : index
    %0 = vector.load %arg1[%c0, %c0_0] : memref<128x1152xbf16, #tpu.memory_space<vmem>>, vector<128x1152xbf16>
    %c0_1 = arith.constant 0 : index
    %c0_2 = arith.constant 0 : index
    %1 = vector.load %arg2[%c0_1, %c0_2] : memref<1152x128xbf16, #tpu.memory_space<vmem>>, vector<1152x128xbf16>
    %cst = arith.constant dense<0.000000e+00> : vector<128x128xf32>
    %2 = tpu.matmul %0, %1, %cst {dimension_numbers = #tpu.dot_dimension_numbers<[1], [0], [0], [1], [0, 0, 1, 1], [], []>} : vector<128x1152xbf16>, vector<1152x128xbf16>, vector<128x128xf32> -> vector<128x128xf32>
    %c0_3 = arith.constant 0 : index
    %c0_4 = arith.constant 0 : index
    %3 = vector.load %arg3[%c0_3, %c0_4] : memref<1x128xf32, #tpu.memory_space<vmem>>, vector<1x128xf32>
    %4 = vector.broadcast %3 : vector<1x128xf32> to vector<128x128xf32>
    %5 = arith.mulf %2, %4 : vector<128x128xf32>
    %c0_5 = arith.constant 0 : index
    %c0_6 = arith.constant 0 : index
    %6 = vector.load %arg4[%c0_5, %c0_6] : memref<1x128xf32, #tpu.memory_space<vmem>>, vector<1x128xf32>
    %7 = vector.broadcast %6 : vector<1x128xf32> to vector<128x128xf32>
    %8 = arith.addf %5, %7 : vector<128x128xf32>
    %c0_7 = arith.constant 0 : index
    %c0_8 = arith.constant 0 : index
    %9 = vector.load %arg5[%c0_7, %c0_8] : memref<128x128xbf16, #tpu.memory_space<vmem>>, vector<128x128xbf16>
    %c0_9 = arith.constant 0 : index
    %c0_10 = arith.constant 0 : index
    %10 = vector.load %arg6[%c0_9, %c0_10] : memref<128x128xbf16, #tpu.memory_space<vmem>>, vector<128x128xbf16>
    %cst_11 = arith.constant dense<0.000000e+00> : vector<128x128xf32>
    %11 = tpu.matmul %9, %10, %cst_11 {dimension_numbers = #tpu.dot_dimension_numbers<[1], [0], [0], [1], [0, 0, 1, 1], [], []>} : vector<128x128xbf16>, vector<128x128xbf16>, vector<128x128xf32> -> vector<128x128xf32>
    %c0_12 = arith.constant 0 : index
    %c0_13 = arith.constant 0 : index
    %12 = vector.load %arg7[%c0_12, %c0_13] : memref<1x128xf32, #tpu.memory_space<vmem>>, vector<1x128xf32>
    %13 = vector.broadcast %12 : vector<1x128xf32> to vector<128x128xf32>
    %14 = arith.mulf %11, %13 : vector<128x128xf32>
    %c0_14 = arith.constant 0 : index
    %c0_15 = arith.constant 0 : index
    %15 = vector.load %arg8[%c0_14, %c0_15] : memref<1x128xf32, #tpu.memory_space<vmem>>, vector<1x128xf32>
    %16 = vector.broadcast %15 : vector<1x128xf32> to vector<128x128xf32>
    %17 = arith.addf %14, %16 : vector<128x128xf32>
    %18 = arith.addf %8, %17 : vector<128x128xf32>
    %cst_16 = arith.constant 0.000000e+00 : f32
    %19 = vector.broadcast %cst_16 : f32 to vector<128x128xf32>
    %20 = arith.maximumf %18, %19 : vector<128x128xf32>
    %21 = arith.truncf %20 : vector<128x128xf32> to vector<128x128xbf16>
    %c0_17 = arith.constant 0 : index
    %c0_18 = arith.constant 0 : index
    %22 = vector.load %arg9[%c0_17, %c0_18] : memref<128x128xbf16, #tpu.memory_space<vmem>>, vector<128x128xbf16>
    tpu.vector_store %arg9[%c0_17, %c0_18], %21 {strides = array<i32>} : memref<128x128xbf16, #tpu.memory_space<vmem>>, vector<128x128xbf16>,
    return
  }
  func.func @transform_0(%arg0: i32) -> (i32, i32) {
    %c0_i32 = arith.constant 0 : i32
    %c0_i32_0 = arith.constant 0 : i32
    return %arg0, %c0_i32 : i32, i32
  }
  func.func @transform_1(%arg0: i32) -> (i32, i32) {
    %c0_i32 = arith.constant 0 : i32
    %c0_i32_0 = arith.constant 0 : i32
    %c0_i32_1 = arith.constant 0 : i32
    return %c0_i32, %c0_i32_0 : i32, i32
  }
  func.func @transform_2(%arg0: i32) -> (i32, i32) {
    %c0_i32 = arith.constant 0 : i32
    %c0_i32_0 = arith.constant 0 : i32
    %c0_i32_1 = arith.constant 0 : i32
    return %c0_i32, %c0_i32_0 : i32, i32
  }
  func.func @transform_3(%arg0: i32) -> (i32, i32) {
    %c0_i32 = arith.constant 0 : i32
    %c0_i32_0 = arith.constant 0 : i32
    %c0_i32_1 = arith.constant 0 : i32
    return %c0_i32, %c0_i32_0 : i32, i32
  }
  func.func @transform_4(%arg0: i32) -> (i32, i32) {
    %c0_i32 = arith.constant 0 : i32
    %c0_i32_0 = arith.constant 0 : i32
    return %arg0, %c0_i32 : i32, i32
  }
  func.func @transform_5(%arg0: i32) -> (i32, i32) {
    %c0_i32 = arith.constant 0 : i32
    %c0_i32_0 = arith.constant 0 : i32
    %c0_i32_1 = arith.constant 0 : i32
    return %c0_i32, %c0_i32_0 : i32, i32
  }
  func.func @transform_6(%arg0: i32) -> (i32, i32) {
    %c0_i32 = arith.constant 0 : i32
    %c0_i32_0 = arith.constant 0 : i32
    %c0_i32_1 = arith.constant 0 : i32
    return %c0_i32, %c0_i32_0 : i32, i32
  }
  func.func @transform_7(%arg0: i32) -> (i32, i32) {
    %c0_i32 = arith.constant 0 : i32
    %c0_i32_0 = arith.constant 0 : i32
    %c0_i32_1 = arith.constant 0 : i32
    return %c0_i32, %c0_i32_0 : i32, i32
  }
  func.func @transform_8(%arg0: i32) -> (i32, i32) {
    %c0_i32 = arith.constant 0 : i32
    %c0_i32_0 = arith.constant 0 : i32
    return %arg0, %c0_i32 : i32, i32
  }
}

module attributes {stable_mosaic.version = 11 : i64} {
  func.func @_conv_kernel(%arg0: i32, %arg1: memref<32x1152xbf16, #tpu.memory_space<vmem>>, %arg2: memref<1152x128xbf16, #tpu.memory_space<vmem>>, %arg3: memref<1x128xf32, #tpu.memory_space<vmem>>, %arg4: memref<1x128xf32, #tpu.memory_space<vmem>>, %arg5: memref<32x128xbf16, #tpu.memory_space<vmem>>) attributes {dimension_semantics = [#tpu.dimension_semantics<parallel>], iteration_bounds = array<i64: 1>, scalar_prefetch = 0 : i64, scratch_operands = 0 : i64, tpu.core_type = #tpu.core_type<tc>, window_params = [{transform_indices = @transform_0, window_bounds = array<i64: 32, 1152>}, {pipeline_mode = #tpu.pipeline_mode<synchronous>, transform_indices = @transform_1, window_bounds = array<i64: 1152, 128>}, {pipeline_mode = #tpu.pipeline_mode<synchronous>, transform_indices = @transform_2, window_bounds = array<i64: 1, 128>}, {pipeline_mode = #tpu.pipeline_mode<synchronous>, transform_indices = @transform_3, window_bounds = array<i64: 1, 128>}, {transform_indices = @transform_4, window_bounds = array<i64: 32, 128>}]} {
    %c0 = arith.constant 0 : index
    %c0_0 = arith.constant 0 : index
    %0 = vector.load %arg1[%c0, %c0_0] : memref<32x1152xbf16, #tpu.memory_space<vmem>>, vector<32x1152xbf16>
    %c0_1 = arith.constant 0 : index
    %c0_2 = arith.constant 0 : index
    %1 = vector.load %arg2[%c0_1, %c0_2] : memref<1152x128xbf16, #tpu.memory_space<vmem>>, vector<1152x128xbf16>
    %cst = arith.constant dense<0.000000e+00> : vector<32x128xf32>
    %2 = tpu.matmul %0, %1, %cst {dimension_numbers = #tpu.dot_dimension_numbers<[1], [0], [0], [1], [0, 0, 1, 1], [], []>} : vector<32x1152xbf16>, vector<1152x128xbf16>, vector<32x128xf32> -> vector<32x128xf32>
    %c0_3 = arith.constant 0 : index
    %c0_4 = arith.constant 0 : index
    %3 = vector.load %arg3[%c0_3, %c0_4] : memref<1x128xf32, #tpu.memory_space<vmem>>, vector<1x128xf32>
    %4 = vector.broadcast %3 : vector<1x128xf32> to vector<32x128xf32>
    %5 = arith.mulf %2, %4 : vector<32x128xf32>
    %c0_5 = arith.constant 0 : index
    %c0_6 = arith.constant 0 : index
    %6 = vector.load %arg4[%c0_5, %c0_6] : memref<1x128xf32, #tpu.memory_space<vmem>>, vector<1x128xf32>
    %7 = vector.broadcast %6 : vector<1x128xf32> to vector<32x128xf32>
    %8 = arith.addf %5, %7 : vector<32x128xf32>
    %cst_7 = arith.constant 0.000000e+00 : f32
    %9 = vector.broadcast %cst_7 : f32 to vector<32x128xf32>
    %10 = arith.maximumf %8, %9 : vector<32x128xf32>
    %11 = arith.truncf %10 : vector<32x128xf32> to vector<32x128xbf16>
    %c0_8 = arith.constant 0 : index
    %c0_9 = arith.constant 0 : index
    %12 = vector.load %arg5[%c0_8, %c0_9] : memref<32x128xbf16, #tpu.memory_space<vmem>>, vector<32x128xbf16>
    tpu.vector_store %arg5[%c0_8, %c0_9], %11 {strides = array<i32>} : memref<32x128xbf16, #tpu.memory_space<vmem>>, vector<32x128xbf16>,
    return
  }
  func.func @transform_0(%arg0: i32) -> (i32, i32) {
    %c0_i32 = arith.constant 0 : i32
    %c0_i32_0 = arith.constant 0 : i32
    return %arg0, %c0_i32 : i32, i32
  }
  func.func @transform_1(%arg0: i32) -> (i32, i32) {
    %c0_i32 = arith.constant 0 : i32
    %c0_i32_0 = arith.constant 0 : i32
    %c0_i32_1 = arith.constant 0 : i32
    return %c0_i32, %c0_i32_0 : i32, i32
  }
  func.func @transform_2(%arg0: i32) -> (i32, i32) {
    %c0_i32 = arith.constant 0 : i32
    %c0_i32_0 = arith.constant 0 : i32
    %c0_i32_1 = arith.constant 0 : i32
    return %c0_i32, %c0_i32_0 : i32, i32
  }
  func.func @transform_3(%arg0: i32) -> (i32, i32) {
    %c0_i32 = arith.constant 0 : i32
    %c0_i32_0 = arith.constant 0 : i32
    %c0_i32_1 = arith.constant 0 : i32
    return %c0_i32, %c0_i32_0 : i32, i32
  }
  func.func @transform_4(%arg0: i32) -> (i32, i32) {
    %c0_i32 = arith.constant 0 : i32
    %c0_i32_0 = arith.constant 0 : i32
    return %arg0, %c0_i32 : i32, i32
  }
}

module attributes {stable_mosaic.version = 11 : i64} {
  func.func @_tail_kernel(%arg0: memref<32x1152xbf16, #tpu.memory_space<vmem>>, %arg1: memref<1152x128xbf16, #tpu.memory_space<vmem>>, %arg2: memref<1x128xf32, #tpu.memory_space<vmem>>, %arg3: memref<1x128xf32, #tpu.memory_space<vmem>>, %arg4: memref<32x128xbf16, #tpu.memory_space<vmem>>, %arg5: memref<128x128xbf16, #tpu.memory_space<vmem>>, %arg6: memref<1x128xf32, #tpu.memory_space<vmem>>, %arg7: memref<1x128xf32, #tpu.memory_space<vmem>>, %arg8: memref<2x32xf32, #tpu.memory_space<vmem>>, %arg9: memref<128x10xf32, #tpu.memory_space<vmem>>, %arg10: memref<1x10xf32, #tpu.memory_space<vmem>>, %arg11: memref<2x10xf32, #tpu.memory_space<vmem>>) attributes {dimension_semantics = [], scalar_prefetch = 0 : i64, scratch_operands = 0 : i64, tpu.core_type = #tpu.core_type<tc>} {
    %c0 = arith.constant 0 : index
    %c0_0 = arith.constant 0 : index
    %0 = vector.load %arg0[%c0, %c0_0] : memref<32x1152xbf16, #tpu.memory_space<vmem>>, vector<32x1152xbf16>
    %c0_1 = arith.constant 0 : index
    %c0_2 = arith.constant 0 : index
    %1 = vector.load %arg1[%c0_1, %c0_2] : memref<1152x128xbf16, #tpu.memory_space<vmem>>, vector<1152x128xbf16>
    %cst = arith.constant dense<0.000000e+00> : vector<32x128xf32>
    %2 = tpu.matmul %0, %1, %cst {dimension_numbers = #tpu.dot_dimension_numbers<[1], [0], [0], [1], [0, 0, 1, 1], [], []>} : vector<32x1152xbf16>, vector<1152x128xbf16>, vector<32x128xf32> -> vector<32x128xf32>
    %c0_3 = arith.constant 0 : index
    %c0_4 = arith.constant 0 : index
    %3 = vector.load %arg2[%c0_3, %c0_4] : memref<1x128xf32, #tpu.memory_space<vmem>>, vector<1x128xf32>
    %4 = vector.broadcast %3 : vector<1x128xf32> to vector<32x128xf32>
    %5 = arith.mulf %2, %4 : vector<32x128xf32>
    %c0_5 = arith.constant 0 : index
    %c0_6 = arith.constant 0 : index
    %6 = vector.load %arg3[%c0_5, %c0_6] : memref<1x128xf32, #tpu.memory_space<vmem>>, vector<1x128xf32>
    %7 = vector.broadcast %6 : vector<1x128xf32> to vector<32x128xf32>
    %8 = arith.addf %5, %7 : vector<32x128xf32>
    %c0_7 = arith.constant 0 : index
    %c0_8 = arith.constant 0 : index
    %9 = vector.load %arg4[%c0_7, %c0_8] : memref<32x128xbf16, #tpu.memory_space<vmem>>, vector<32x128xbf16>
    %c0_9 = arith.constant 0 : index
    %c0_10 = arith.constant 0 : index
    %10 = vector.load %arg5[%c0_9, %c0_10] : memref<128x128xbf16, #tpu.memory_space<vmem>>, vector<128x128xbf16>
    %cst_11 = arith.constant dense<0.000000e+00> : vector<32x128xf32>
    %11 = tpu.matmul %9, %10, %cst_11 {dimension_numbers = #tpu.dot_dimension_numbers<[1], [0], [0], [1], [0, 0, 1, 1], [], []>} : vector<32x128xbf16>, vector<128x128xbf16>, vector<32x128xf32> -> vector<32x128xf32>
    %c0_12 = arith.constant 0 : index
    %c0_13 = arith.constant 0 : index
    %12 = vector.load %arg6[%c0_12, %c0_13] : memref<1x128xf32, #tpu.memory_space<vmem>>, vector<1x128xf32>
    %13 = vector.broadcast %12 : vector<1x128xf32> to vector<32x128xf32>
    %14 = arith.mulf %11, %13 : vector<32x128xf32>
    %c0_14 = arith.constant 0 : index
    %c0_15 = arith.constant 0 : index
    %15 = vector.load %arg7[%c0_14, %c0_15] : memref<1x128xf32, #tpu.memory_space<vmem>>, vector<1x128xf32>
    %16 = vector.broadcast %15 : vector<1x128xf32> to vector<32x128xf32>
    %17 = arith.addf %14, %16 : vector<32x128xf32>
    %18 = arith.addf %8, %17 : vector<32x128xf32>
    %cst_16 = arith.constant 0.000000e+00 : f32
    %19 = vector.broadcast %cst_16 : f32 to vector<32x128xf32>
    %20 = arith.maximumf %18, %19 : vector<32x128xf32>
    %c0_17 = arith.constant 0 : index
    %c0_18 = arith.constant 0 : index
    %21 = vector.load %arg8[%c0_17, %c0_18] : memref<2x32xf32, #tpu.memory_space<vmem>>, vector<2x32xf32>
    %cst_19 = arith.constant dense<0.000000e+00> : vector<2x128xf32>
    %22 = tpu.matmul %21, %20, %cst_19 {dimension_numbers = #tpu.dot_dimension_numbers<[1], [0], [0], [1], [0, 0, 1, 1], [], []>} : vector<2x32xf32>, vector<32x128xf32>, vector<2x128xf32> -> vector<2x128xf32>
    %c0_20 = arith.constant 0 : index
    %c0_21 = arith.constant 0 : index
    %23 = vector.load %arg9[%c0_20, %c0_21] : memref<128x10xf32, #tpu.memory_space<vmem>>, vector<128x10xf32>
    %cst_22 = arith.constant dense<0.000000e+00> : vector<2x10xf32>
    %24 = tpu.matmul %22, %23, %cst_22 {dimension_numbers = #tpu.dot_dimension_numbers<[1], [0], [0], [1], [0, 0, 1, 1], [], []>} : vector<2x128xf32>, vector<128x10xf32>, vector<2x10xf32> -> vector<2x10xf32>
    %c0_23 = arith.constant 0 : index
    %c0_24 = arith.constant 0 : index
    %25 = vector.load %arg10[%c0_23, %c0_24] : memref<1x10xf32, #tpu.memory_space<vmem>>, vector<1x10xf32>
    %26 = vector.broadcast %25 : vector<1x10xf32> to vector<2x10xf32>
    %27 = arith.addf %24, %26 : vector<2x10xf32>
    %c0_25 = arith.constant 0 : index
    %c0_26 = arith.constant 0 : index
    %28 = vector.load %arg11[%c0_25, %c0_26] : memref<2x10xf32, #tpu.memory_space<vmem>>, vector<2x10xf32>
    tpu.vector_store %arg11[%c0_25, %c0_26], %27 {strides = array<i32>} : memref<2x10xf32, #tpu.memory_space<vmem>>, vector<2x10xf32>,
    return
  }
}

</mosaic_0001>

<llo_original>
// kernel: model_forward.5
$region0: #{model_forward.5}
  #allocation0 [shape = 'u32[]', space=smem, size = 0x4, offset = 0x4, fixed_abs, tag = 'smem constant byte address 0x4 - core index']
  #allocation1 [shape = 'u32[144,128]{1,0:T(1,128)}', space=vmem, size = 0x12000, scoped, tag = 'internal scratch']
  %s0 = inlined_call_operand.vmem [shape: bf16[512,27], index: 0, kind: input, shape index: {}]
  %s1 = inlined_call_operand.vmem [shape: bf16[27,128], index: 1, kind: input, shape index: {}]
  %s2 = inlined_call_operand.vmem [shape: f32[1,128], index: 2, kind: input, shape index: {}]
  %s3 = inlined_call_operand.vmem [shape: f32[1,128], index: 3, kind: input, shape index: {}]
  %s4 = inlined_call_operand.vmem [shape: bf16[512,128], index: 4, kind: output, shape index: {}]
  %s5 = sld [smem:[#allocation0]]
  $region26: #{model_forward.5} parent=0
    _
  %s7 = ssub.s32 1, %s5
  %s8 = scalar_select 0, %s7, %s5
  // Predicated region
  $region2: #{model_forward.5} parent=0 // pred_check
    _
  $region3: #{model_forward.5} parent=0 // pred_check_branch
    %10 = sbr.rel (0) target = $region5
  $region4: #{model_forward.5} parent=0 // pred_region
    _
  $region5: #{model_forward.5} parent=0 // pred_fallthru
    _
  // Predicated region
  $region6: #{model_forward.5} parent=0 // pred_check
    _
  $region7: #{model_forward.5} parent=0 // pred_check_branch
    %12 = sbr.rel (0) target = $region9
  $region8: #{model_forward.5} parent=0 // pred_region
    _
  $region9: #{model_forward.5} parent=0 // pred_fallthru
    _
  // Predicated region
  $region10: #{model_forward.5} parent=0 // pred_check
    _
  $region11: #{model_forward.5} parent=0 // pred_check_branch
    %14 = sbr.rel (0) target = $region13
  $region12: #{model_forward.5} parent=0 // pred_region
    _
  $region13: #{model_forward.5} parent=0 // pred_fallthru
    _
  // Predicated region
  $region14: #{model_forward.5} parent=0 // pred_check
    _
  $region15: #{model_forward.5} parent=0 // pred_check_branch
    %16 = sbr.rel (0) target = $region17
  $region16: #{model_forward.5} parent=0 // pred_region
    _
  $region17: #{model_forward.5} parent=0 // pred_fallthru
    _
  %v18 = vld [vmem:[%s0] sm:$0xf]
  %v19 = vld [vmem:[%s0 + $0x4] sm:$0xf]
  %v20 = vld [vmem:[%s0 + $0x8] sm:$0xf]
  %v21 = vld [vmem:[%s0 + $0xc] sm:$0xf]
  %v22 = vld [vmem:[%s0 + $0x10] sm:$0xf]
  %v23 = vld [vmem:[%s0 + $0x14] sm:$0xf]
  %v24 = vld [vmem:[%s0 + $0x18] sm:$0xf]
  %v25 = vld [vmem:[%s0 + $0x1c] sm:$0xf]
  %v26 = vld [vmem:[%s0 + $0x20] sm:$0xf]
  %v27 = vld [vmem:[%s0 + $0x24] sm:$0xf]
  %v28 = vld [vmem:[%s0 + $0x28] sm:$0xf]
  %v29 = vld [vmem:[%s0 + $0x2c] sm:$0xf]
  %v30 = vld [vmem:[%s0 + $0x30] sm:$0xf]
  %v31 = vld [vmem:[%s0 + $0x34] sm:$0xf]
  %v32 = vld [vmem:[%s0 + $0x38] sm:$0xf]
  %v33 = vld [vmem:[%s0 + $0x3c] sm:$0xf]
  %v34 = vld [vmem:[%s0 + $0x40] sm:$0xf]
  %v35 = vld [vmem:[%s0 + $0x44] sm:$0xf]
  %v36 = vld [vmem:[%s0 + $0x48] sm:$0xf]
  %v37 = vld [vmem:[%s0 + $0x4c] sm:$0xf]
  %v38 = vld [vmem:[%s0 + $0x50] sm:$0xf]
  %v39 = vld [vmem:[%s0 + $0x54] sm:$0xf]
  %v40 = vld [vmem:[%s0 + $0x58] sm:$0xf]
  %v41 = vld [vmem:[%s0 + $0x5c] sm:$0xf]
  %v42 = vld [vmem:[%s0 + $0x60] sm:$0xf]
  %v43 = vld [vmem:[%s0 + $0x64] sm:$0xf]
  %v44 = vld [vmem:[%s0 + $0x68] sm:$0xf]
  %v45 = vld [vmem:[%s0 + $0x6c] sm:$0xf]
  %v46 = vld [vmem:[%s0 + $0x70] sm:$0xf]
  %v47 = vld [vmem:[%s0 + $0x74] sm:$0xf]
  %v48 = vld [vmem:[%s0 + $0x78] sm:$0xf]
  %v49 = vld [vmem:[%s0 + $0x7c] sm:$0xf]
  %v50 = vld [vmem:[%s0 + $0x80] sm:$0xf]
  %v51 = vld [vmem:[%s0 + $0x84] sm:$0xf]
  %v52 = vld [vmem:[%s0 + $0x88] sm:$0xf]
  %v53 = vld [vmem:[%s0 + $0x8c] sm:$0xf]
  %v54 = vld [vmem:[%s0 + $0x90] sm:$0xf]
  %v55 = vld [vmem:[%s0 + $0x94] sm:$0xf]
  %v56 = vld [vmem:[%s0 + $0x98] sm:$0xf]
  %v57 = vld [vmem:[%s0 + $0x9c] sm:$0xf]
  %v58 = vld [vmem:[%s0 + $0xa0] sm:$0xf]
  %v59 = vld [vmem:[%s0 + $0xa4] sm:$0xf]
  %v60 = vld [vmem:[%s0 + $0xa8] sm:$0xf]
  %v61 = vld [vmem:[%s0 + $0xac] sm:$0xf]
  %v62 = vld [vmem:[%s0 + $0xb0] sm:$0xf]
  %v63 = vld [vmem:[%s0 + $0xb4] sm:$0xf]
  %v64 = vld [vmem:[%s0 + $0xb8] sm:$0xf]
  %v65 = vld [vmem:[%s0 + $0xbc] sm:$0xf]
  %v66 = vld [vmem:[%s0 + $0xc0] sm:$0xf]
  %v67 = vld [vmem:[%s0 + $0xc4] sm:$0xf]
  %v68 = vld [vmem:[%s0 + $0xc8] sm:$0xf]
  %v69 = vld [vmem:[%s0 + $0xcc] sm:$0xf]
  %v70 = vld [vmem:[%s0 + $0xd0] sm:$0xf]
  %v71 = vld [vmem:[%s0 + $0xd4] sm:$0xf]
  %v72 = vld [vmem:[%s0 + $0xd8] sm:$0xf]
  %v73 = vld [vmem:[%s0 + $0xdc] sm:$0xf]
  %v74 = vld [vmem:[%s0 + $0xe0] sm:$0xf]
  %v75 = vld [vmem:[%s0 + $0xe4] sm:$0xf]
  %v76 = vld [vmem:[%s0 + $0xe8] sm:$0xf]
  %v77 = vld [vmem:[%s0 + $0xec] sm:$0xf]
  %v78 = vld [vmem:[%s0 + $0xf0] sm:$0xf]
  %v79 = vld [vmem:[%s0 + $0xf4] sm:$0xf]
  %v80 = vld [vmem:[%s0 + $0xf8] sm:$0xf]
  %v81 = vld [vmem:[%s0 + $0xfc] sm:$0xf]
  %v82 = vld [vmem:[%s1] sm:$0xf]
  %v83 = vld [vmem:[%s1 + $0x4] sm:$0xf]
  %v84 = vld [vmem:[%s1 + $0x8] sm:$0xf]
  %v85 = vld [vmem:[%s1 + $0xc] sm:$0x3]
  %v150 = vunpack.c.l.b16 %v18
  %v151 = vunpack.c.l.b16 %v19
  %v152 = vunpack.c.l.b16 %v20
  %v153 = vunpack.c.l.b16 %v21
  %v154 = vunpack.c.l.b16 %v22
  %v155 = vunpack.c.l.b16 %v23
  %v156 = vunpack.c.l.b16 %v24
  %v157 = vunpack.c.l.b16 %v25
  %v158 = vunpack.c.l.b16 %v26
  %v159 = vunpack.c.l.b16 %v27
  %v160 = vunpack.c.l.b16 %v28
  %v161 = vunpack.c.l.b16 %v29
  %v162 = vunpack.c.l.b16 %v30
  %v163 = vunpack.c.l.b16 %v31
  %v164 = vunpack.c.l.b16 %v32
  %v165 = vunpack.c.l.b16 %v33
  %v166 = vunpack.c.l.b16 %v34
  %v167 = vunpack.c.l.b16 %v35
  %v168 = vunpack.c.l.b16 %v36
  %v169 = vunpack.c.l.b16 %v37
  %v170 = vunpack.c.l.b16 %v38
  %v171 = vunpack.c.l.b16 %v39
  %v172 = vunpack.c.l.b16 %v40
  %v173 = vunpack.c.l.b16 %v41
  %v174 = vunpack.c.l.b16 %v42
  %v175 = vunpack.c.l.b16 %v43
  %v176 = vunpack.c.l.b16 %v44
  %v177 = vunpack.c.l.b16 %v45
  %v178 = vunpack.c.l.b16 %v46
  %v179 = vunpack.c.l.b16 %v47
  %v180 = vunpack.c.l.b16 %v48
  %v181 = vunpack.c.l.b16 %v49
  %v182 = vunpack.c.l.b16 %v50
  %v183 = vunpack.c.l.b16 %v51
  %v184 = vunpack.c.l.b16 %v52
  %v185 = vunpack.c.l.b16 %v53
  %v186 = vunpack.c.l.b16 %v54
  %v187 = vunpack.c.l.b16 %v55
  %v188 = vunpack.c.l.b16 %v56
  %v189 = vunpack.c.l.b16 %v57
  %v190 = vunpack.c.l.b16 %v58
  %v191 = vunpack.c.l.b16 %v59
  %v192 = vunpack.c.l.b16 %v60
  %v193 = vunpack.c.l.b16 %v61
  %v194 = vunpack.c.l.b16 %v62
  %v195 = vunpack.c.l.b16 %v63
  %v196 = vunpack.c.l.b16 %v64
  %v197 = vunpack.c.l.b16 %v65
  %v198 = vunpack.c.l.b16 %v66
  %v199 = vunpack.c.l.b16 %v67
  %v200 = vunpack.c.l.b16 %v68
  %v201 = vunpack.c.l.b16 %v69
  %v202 = vunpack.c.l.b16 %v70
  %v203 = vunpack.c.l.b16 %v71
  %v204 = vunpack.c.l.b16 %v72
  %v205 = vunpack.c.l.b16 %v73
  %v206 = vunpack.c.l.b16 %v74
  %v207 = vunpack.c.l.b16 %v75
  %v208 = vunpack.c.l.b16 %v76
  %v209 = vunpack.c.l.b16 %v77
  %v210 = vunpack.c.l.b16 %v78
  %v211 = vunpack.c.l.b16 %v79
  %v212 = vunpack.c.l.b16 %v80
  %v213 = vunpack.c.l.b16 %v81
  %v214 = vpack.c.b16 %v151, %v150
  %v215 = vpack.c.b16 %v153, %v152
  %v216 = vpack.c.b16 %v155, %v154
  %v217 = vpack.c.b16 %v157, %v156
  %v218 = vpack.c.b16 %v159, %v158
  %v219 = vpack.c.b16 %v161, %v160
  %v220 = vpack.c.b16 %v163, %v162
  %v221 = vpack.c.b16 %v165, %v164
  %v222 = vpack.c.b16 %v167, %v166
  %v223 = vpack.c.b16 %v169, %v168
  %v224 = vpack.c.b16 %v171, %v170
  %v225 = vpack.c.b16 %v173, %v172
  %v226 = vpack.c.b16 %v175, %v174
  %v227 = vpack.c.b16 %v177, %v176
  %v228 = vpack.c.b16 %v179, %v178
  %v229 = vpack.c.b16 %v181, %v180
  %v230 = vpack.c.b16 %v183, %v182
  %v231 = vpack.c.b16 %v185, %v184
  %v232 = vpack.c.b16 %v187, %v186
  %v233 = vpack.c.b16 %v189, %v188
  %v234 = vpack.c.b16 %v191, %v190
  %v235 = vpack.c.b16 %v193, %v192
  %v236 = vpack.c.b16 %v195, %v194
  %v237 = vpack.c.b16 %v197, %v196
  %v238 = vpack.c.b16 %v199, %v198
  %v239 = vpack.c.b16 %v201, %v200
  %v240 = vpack.c.b16 %v203, %v202
  %v241 = vpack.c.b16 %v205, %v204
  %v242 = vpack.c.b16 %v207, %v206
  %v243 = vpack.c.b16 %v209, %v208
  %v244 = vpack.c.b16 %v211, %v210
  %v245 = vpack.c.b16 %v213, %v212
  %v250 = vunpack.c.l.b16 %v82
  %v251 = vunpack.c.l.b16 %v83
  %v252 = vunpack.c.l.b16 %v84
  %v253 = vunpack.c.l.b16 %v85
  %v254 = vpack.c.b16 %v251, %v250
  %v255 = vpack.c.b16 %v253, %v252
  %vm257 = vcmask 220160
  %v259 = vsel %vm257, %v214, 0
  %v262 = vsel %vm257, %v215, 0
  %v265 = vsel %vm257, %v216, 0
  %v268 = vsel %vm257, %v217, 0
  %v271 = vsel %vm257, %v218, 0
  %v274 = vsel %vm257, %v219, 0
  %v277 = vsel %vm257, %v220, 0
  %v280 = vsel %vm257, %v221, 0
  %v283 = vsel %vm257, %v222, 0
  %v286 = vsel %vm257, %v223, 0
  %v289 = vsel %vm257, %v224, 0
  %v292 = vsel %vm257, %v225, 0
  %v295 = vsel %vm257, %v226, 0
  %v298 = vsel %vm257, %v227, 0
  %v301 = vsel %vm257, %v228, 0
  %v304 = vsel %vm257, %v229, 0
  %v307 = vsel %vm257, %v230, 0
  %v310 = vsel %vm257, %v231, 0
  %v313 = vsel %vm257, %v232, 0
  %v316 = vsel %vm257, %v233, 0
  %v319 = vsel %vm257, %v234, 0
  %v322 = vsel %vm257, %v235, 0
  %v325 = vsel %vm257, %v236, 0
  %v328 = vsel %vm257, %v237, 0
  %v331 = vsel %vm257, %v238, 0
  %v334 = vsel %vm257, %v239, 0
  %v337 = vsel %vm257, %v240, 0
  %v340 = vsel %vm257, %v241, 0
  %v343 = vsel %vm257, %v242, 0
  %v346 = vsel %vm257, %v243, 0
  %v349 = vsel %vm257, %v244, 0
  %v352 = vsel %vm257, %v245, 0
  %vm354 = vcmask 1044480
  %vm355 = vcmask 1045504
  %v356 = vsel %vm354, 4294967295, 65535
  %v357 = vsel %vm355, %v356, 0
  %v359 = vand.u32 %v255, %v357
  %361 = vmatprep.subr.bf16.mxu0 0
  %362 = vmatpush1.bf16.msra.mxu0 %v254
  %363 = vmatprep.subr.bf16.mxu0 0
  %364 = vmatpush1.bf16.msra.mxu0 %v359
  %365 = vmatprep.subr.bf16.mxu0 0
  %366 = vmatpush1.bf16.msra.mxu0 0
  %367 = vmatprep.subr.bf16.mxu0 0
  %368 = vmatpush1.bf16.msra.mxu0 0
  %369 = vmatprep.subr.bf16.mxu0 0
  %370 = vmatpush1.bf16.msra.mxu0 0
  %371 = vmatprep.subr.bf16.mxu0 0
  %372 = vmatpush1.bf16.msra.mxu0 0
  %373 = vmatprep.subr.bf16.mxu0 0
  %374 = vmatpush1.bf16.msra.mxu0 0
  %375 = vmatprep.subr.bf16.mxu0 0
  %376 = vmatpush1.bf16.msra.mxu0 0
  %377 = vmatprep.subr.bf16.mxu0 0
  %378 = vmatpush1.bf16.msra.mxu0 0
  %379 = vmatprep.subr.bf16.mxu0 0
  %380 = vmatpush1.bf16.msra.mxu0 0
  %381 = vmatprep.subr.bf16.mxu0 0
  %382 = vmatpush1.bf16.msra.mxu0 0
  %383 = vmatprep.subr.bf16.mxu0 0
  %384 = vmatpush1.bf16.msra.mxu0 0
  %385 = vmatprep.subr.bf16.mxu0 0
  %386 = vmatpush1.bf16.msra.mxu0 0
  %387 = vmatprep.subr.bf16.mxu0 0
  %388 = vmatpush1.bf16.msra.mxu0 0
  %389 = vmatprep.subr.bf16.mxu0 0
  %390 = vmatpush1.bf16.msra.mxu0 0
  %391 = vmatprep.subr.bf16.mxu0 0
  %392 = vmatpush1.bf16.msra.mxu0 0
  %393 = vmatprep.mubr.bf16.mxu0 0
  %394 = vmatmul.mubr.bf16.gmra.mrb[0].mxu0 %v259
  %v395 = vpop.f32.mrb[0].mxu0
  %v396 = vadd.f32 0.0, %v395
  %v397 = vpop.f32.mrb[0].mxu0
  %v398 = vpop.f32.mrb[0].mxu0
  %v399 = vadd.f32 0.0, %v398
  %v400 = vpop.f32.mrb[0].mxu0
  %401 = vmatprep.mubr.bf16.mxu0 0
  %402 = vmatmul.mubr.bf16.gmra.mrb[0].mxu0 %v262
  %v403 = vpop.f32.mrb[0].mxu0
  %v404 = vadd.f32 0.0, %v403
  %v405 = vpop.f32.mrb[0].mxu0
  %v406 = vpop.f32.mrb[0].mxu0
  %v407 = vadd.f32 0.0, %v406
  %v408 = vpop.f32.mrb[0].mxu0
  %409 = vmatprep.mubr.bf16.mxu0 0
  %410 = vmatmul.mubr.bf16.gmra.mrb[0].mxu0 %v265
  %v411 = vpop.f32.mrb[0].mxu0
  %v412 = vadd.f32 0.0, %v411
  %v413 = vpop.f32.mrb[0].mxu0
  %v414 = vpop.f32.mrb[0].mxu0
  %v415 = vadd.f32 0.0, %v414
  %v416 = vpop.f32.mrb[0].mxu0
  %417 = vmatprep.mubr.bf16.mxu0 0
  %418 = vmatmul.mubr.bf16.gmra.mrb[0].mxu0 %v268
  %v419 = vpop.f32.mrb[0].mxu0
  %v420 = vadd.f32 0.0, %v419
  %v421 = vpop.f32.mrb[0].mxu0
  %v422 = vpop.f32.mrb[0].mxu0
  %v423 = vadd.f32 0.0, %v422
  %v424 = vpop.f32.mrb[0].mxu0
  %425 = vmatprep.mubr.bf16.mxu0 0
  %426 = vmatmul.mubr.bf16.gmra.mrb[0].mxu0 %v271
  %v427 = vpop.f32.mrb[0].mxu0
  %v428 = vadd.f32 0.0, %v427
  %v429 = vpop.f32.mrb[0].mxu0
  %v430 = vpop.f32.mrb[0].mxu0
  %v431 = vadd.f32 0.0, %v430
  %v432 = vpop.f32.mrb[0].mxu0
  %433 = vmatprep.mubr.bf16.mxu0 0
  %434 = vmatmul.mubr.bf16.gmra.mrb[0].mxu0 %v274
  %v435 = vpop.f32.mrb[0].mxu0
  %v436 = vadd.f32 0.0, %v435
  %v437 = vpop.f32.mrb[0].mxu0
  %v438 = vpop.f32.mrb[0].mxu0
  %v439 = vadd.f32 0.0, %v438
  %v440 = vpop.f32.mrb[0].mxu0
  %441 = vmatprep.mubr.bf16.mxu0 0
  %442 = vmatmul.mubr.bf16.gmra.mrb[0].mxu0 %v277
  %v443 = vpop.f32.mrb[0].mxu0
  %v444 = vadd.f32 0.0, %v443
  %v445 = vpop.f32.mrb[0].mxu0
  %v446 = vpop.f32.mrb[0].mxu0
  %v447 = vadd.f32 0.0, %v446
  %v448 = vpop.f32.mrb[0].mxu0
  %449 = vmatprep.mubr.bf16.mxu0 0
  %450 = vmatmul.mubr.bf16.gmra.mrb[0].mxu0 %v280
  %v451 = vpop.f32.mrb[0].mxu0
  %v452 = vadd.f32 0.0, %v451
  %v453 = vpop.f32.mrb[0].mxu0
  %v454 = vpop.f32.mrb[0].mxu0
  %v455 = vadd.f32 0.0, %v454
  %v456 = vpop.f32.mrb[0].mxu0
  %457 = vmatprep.mubr.bf16.mxu0 0
  %458 = vmatmul.mubr.bf16.gmra.mrb[0].mxu0 %v283
  %v459 = vpop.f32.mrb[0].mxu0
  %v460 = vadd.f32 0.0, %v459
  %v461 = vpop.f32.mrb[0].mxu0
  %v462 = vpop.f32.mrb[0].mxu0
  %v463 = vadd.f32 0.0, %v462
  %v464 = vpop.f32.mrb[0].mxu0
  %465 = vmatprep.mubr.bf16.mxu0 0
  %466 = vmatmul.mubr.bf16.gmra.mrb[0].mxu0 %v286
  %v467 = vpop.f32.mrb[0].mxu0
  %v468 = vadd.f32 0.0, %v467
  %v469 = vpop.f32.mrb[0].mxu0
  %v470 = vpop.f32.mrb[0].mxu0
  %v471 = vadd.f32 0.0, %v470
  %v472 = vpop.f32.mrb[0].mxu0
  %473 = vmatprep.mubr.bf16.mxu0 0
  %474 = vmatmul.mubr.bf16.gmra.mrb[0].mxu0 %v289
  %v475 = vpop.f32.mrb[0].mxu0
  %v476 = vadd.f32 0.0, %v475
  %v477 = vpop.f32.mrb[0].mxu0
  %v478 = vpop.f32.mrb[0].mxu0
  %v479 = vadd.f32 0.0, %v478
  %v480 = vpop.f32.mrb[0].mxu0
  %481 = vmatprep.mubr.bf16.mxu0 0
  %482 = vmatmul.mubr.bf16.gmra.mrb[0].mxu0 %v292
  %v483 = vpop.f32.mrb[0].mxu0
  %v484 = vadd.f32 0.0, %v483
  %v485 = vpop.f32.mrb[0].mxu0
  %v486 = vpop.f32.mrb[0].mxu0
  %v487 = vadd.f32 0.0, %v486
  %v488 = vpop.f32.mrb[0].mxu0
  %489 = vmatprep.mubr.bf16.mxu0 0
  %490 = vmatmul.mubr.bf16.gmra.mrb[0].mxu0 %v295
  %v491 = vpop.f32.mrb[0].mxu0
  %v492 = vadd.f32 0.0, %v491
  %v493 = vpop.f32.mrb[0].mxu0
  %v494 = vpop.f32.mrb[0].mxu0
  %v495 = vadd.f32 0.0, %v494
  %v496 = vpop.f32.mrb[0].mxu0
  %497 = vmatprep.mubr.bf16.mxu0 0
  %498 = vmatmul.mubr.bf16.gmra.mrb[0].mxu0 %v298
  %v499 = vpop.f32.mrb[0].mxu0
  %v500 = vadd.f32 0.0, %v499
  %v501 = vpop.f32.mrb[0].mxu0
  %v502 = vpop.f32.mrb[0].mxu0
  %v503 = vadd.f32 0.0, %v502
  %v504 = vpop.f32.mrb[0].mxu0
  %505 = vmatprep.mubr.bf16.mxu0 0
  %506 = vmatmul.mubr.bf16.gmra.mrb[0].mxu0 %v301
  %v507 = vpop.f32.mrb[0].mxu0
  %v508 = vadd.f32 0.0, %v507
  %v509 = vpop.f32.mrb[0].mxu0
  %v510 = vpop.f32.mrb[0].mxu0
  %v511 = vadd.f32 0.0, %v510
  %v512 = vpop.f32.mrb[0].mxu0
  %513 = vmatprep.mubr.bf16.mxu0 0
  %514 = vmatmul.mubr.bf16.gmra.mrb[0].mxu0 %v304
  %v515 = vpop.f32.mrb[0].mxu0
  %v516 = vadd.f32 0.0, %v515
  %v517 = vpop.f32.mrb[0].mxu0
  %v518 = vpop.f32.mrb[0].mxu0
  %v519 = vadd.f32 0.0, %v518
  %v520 = vpop.f32.mrb[0].mxu0
  %521 = vmatprep.mubr.bf16.mxu0 0
  %522 = vmatmul.mubr.bf16.gmra.mrb[0].mxu0 %v307
  %v523 = vpop.f32.mrb[0].mxu0
  %v524 = vadd.f32 0.0, %v523
  %v525 = vpop.f32.mrb[0].mxu0
  %v526 = vpop.f32.mrb[0].mxu0
  %v527 = vadd.f32 0.0, %v526
  %v528 = vpop.f32.mrb[0].mxu0
  %529 = vmatprep.mubr.bf16.mxu0 0
  %530 = vmatmul.mubr.bf16.gmra.mrb[0].mxu0 %v310
  %v531 = vpop.f32.mrb[0].mxu0
  %v532 = vadd.f32 0.0, %v531
  %v533 = vpop.f32.mrb[0].mxu0
  %v534 = vpop.f32.mrb[0].mxu0
  %v535 = vadd.f32 0.0, %v534
  %v536 = vpop.f32.mrb[0].mxu0
  %537 = vmatprep.mubr.bf16.mxu0 0
  %538 = vmatmul.mubr.bf16.gmra.mrb[0].mxu0 %v313
  %v539 = vpop.f32.mrb[0].mxu0
  %v540 = vadd.f32 0.0, %v539
  %v541 = vpop.f32.mrb[0].mxu0
  %v542 = vpop.f32.mrb[0].mxu0
  %v543 = vadd.f32 0.0, %v542
  %v544 = vpop.f32.mrb[0].mxu0
  %545 = vmatprep.mubr.bf16.mxu0 0
  %546 = vmatmul.mubr.bf16.gmra.mrb[0].mxu0 %v316
  %v547 = vpop.f32.mrb[0].mxu0
  %v548 = vadd.f32 0.0, %v547
  %v549 = vpop.f32.mrb[0].mxu0
  %v550 = vpop.f32.mrb[0].mxu0
  %v551 = vadd.f32 0.0, %v550
  %v552 = vpop.f32.mrb[0].mxu0
  %553 = vmatprep.mubr.bf16.mxu0 0
  %554 = vmatmul.mubr.bf16.gmra.mrb[0].mxu0 %v319
  %v555 = vpop.f32.mrb[0].mxu0
  %v556 = vadd.f32 0.0, %v555
  %v557 = vpop.f32.mrb[0].mxu0
  %v558 = vpop.f32.mrb[0].mxu0
  %v559 = vadd.f32 0.0, %v558
  %v560 = vpop.f32.mrb[0].mxu0
  %561 = vmatprep.mubr.bf16.mxu0 0
  %562 = vmatmul.mubr.bf16.gmra.mrb[0].mxu0 %v322
  %v563 = vpop.f32.mrb[0].mxu0
  %v564 = vadd.f32 0.0, %v563
  %v565 = vpop.f32.mrb[0].mxu0
  %v566 = vpop.f32.mrb[0].mxu0
  %v567 = vadd.f32 0.0, %v566
  %v568 = vpop.f32.mrb[0].mxu0
  %569 = vmatprep.mubr.bf16.mxu0 0
  %570 = vmatmul.mubr.bf16.gmra.mrb[0].mxu0 %v325
  %v571 = vpop.f32.mrb[0].mxu0
  %v572 = vadd.f32 0.0, %v571
  %v573 = vpop.f32.mrb[0].mxu0
  %v574 = vpop.f32.mrb[0].mxu0
  %v575 = vadd.f32 0.0, %v574
  %v576 = vpop.f32.mrb[0].mxu0
  %577 = vmatprep.mubr.bf16.mxu0 0
  %578 = vmatmul.mubr.bf16.gmra.mrb[0].mxu0 %v328
  %v579 = vpop.f32.mrb[0].mxu0
  %v580 = vadd.f32 0.0, %v579
  %v581 = vpop.f32.mrb[0].mxu0
  %v582 = vpop.f32.mrb[0].mxu0
  %v583 = vadd.f32 0.0, %v582
  %v584 = vpop.f32.mrb[0].mxu0
  %585 = vmatprep.mubr.bf16.mxu0 0
  %586 = vmatmul.mubr.bf16.gmra.mrb[0].mxu0 %v331
  %v587 = vpop.f32.mrb[0].mxu0
  %v588 = vadd.f32 0.0, %v587
  %v589 = vpop.f32.mrb[0].mxu0
  %v590 = vpop.f32.mrb[0].mxu0
  %v591 = vadd.f32 0.0, %v590
  %v592 = vpop.f32.mrb[0].mxu0
  %593 = vmatprep.mubr.bf16.mxu0 0
  %594 = vmatmul.mubr.bf16.gmra.mrb[0].mxu0 %v334
  %v595 = vpop.f32.mrb[0].mxu0
  %v596 = vadd.f32 0.0, %v595
  %v597 = vpop.f32.mrb[0].mxu0
  %v598 = vpop.f32.mrb[0].mxu0
  %v599 = vadd.f32 0.0, %v598
  %v600 = vpop.f32.mrb[0].mxu0
  %601 = vmatprep.mubr.bf16.mxu0 0
  %602 = vmatmul.mubr.bf16.gmra.mrb[0].mxu0 %v337
  %v603 = vpop.f32.mrb[0].mxu0
  %v604 = vadd.f32 0.0, %v603
  %v605 = vpop.f32.mrb[0].mxu0
  %v606 = vpop.f32.mrb[0].mxu0
  %v607 = vadd.f32 0.0, %v606
  %v608 = vpop.f32.mrb[0].mxu0
  %609 = vmatprep.mubr.bf16.mxu0 0
  %610 = vmatmul.mubr.bf16.gmra.mrb[0].mxu0 %v340
  %v611 = vpop.f32.mrb[0].mxu0
  %v612 = vadd.f32 0.0, %v611
  %v613 = vpop.f32.mrb[0].mxu0
  %v614 = vpop.f32.mrb[0].mxu0
  %v615 = vadd.f32 0.0, %v614
  %v616 = vpop.f32.mrb[0].mxu0
  %617 = vmatprep.mubr.bf16.mxu0 0
  %618 = vmatmul.mubr.bf16.gmra.mrb[0].mxu0 %v343
  %v619 = vpop.f32.mrb[0].mxu0
  %v620 = vadd.f32 0.0, %v619
  %v621 = vpop.f32.mrb[0].mxu0
  %v622 = vpop.f32.mrb[0].mxu0
  %v623 = vadd.f32 0.0, %v622
  %v624 = vpop.f32.mrb[0].mxu0
  %625 = vmatprep.mubr.bf16.mxu0 0
  %626 = vmatmul.mubr.bf16.gmra.mrb[0].mxu0 %v346
  %v627 = vpop.f32.mrb[0].mxu0
  %v628 = vadd.f32 0.0, %v627
  %v629 = vpop.f32.mrb[0].mxu0
  %v630 = vpop.f32.mrb[0].mxu0
  %v631 = vadd.f32 0.0, %v630
  %v632 = vpop.f32.mrb[0].mxu0
  %633 = vmatprep.mubr.bf16.mxu0 0
  %634 = vmatmul.mubr.bf16.gmra.mrb[0].mxu0 %v349
  %v635 = vpop.f32.mrb[0].mxu0
  %v636 = vadd.f32 0.0, %v635
  %v637 = vpop.f32.mrb[0].mxu0
  %v638 = vpop.f32.mrb[0].mxu0
  %v639 = vadd.f32 0.0, %v638
  %v640 = vpop.f32.mrb[0].mxu0
  %641 = vmatprep.mubr.bf16.mxu0 0
  %642 = vmatmul.mubr.bf16.gmra.mrb[0].mxu0 %v352
  %v643 = vpop.f32.mrb[0].mxu0
  %v644 = vadd.f32 0.0, %v643
  %v645 = vpop.f32.mrb[0].mxu0
  %v646 = vpop.f32.mrb[0].mxu0
  %v647 = vadd.f32 0.0, %v646
  %v648 = vpop.f32.mrb[0].mxu0
  %649 = vdwg.mxu0
  %v650 = vld [vmem:[%s2] sm:$0x1]
  %v652 = vlaneseq
  %v653 = vshrl.u32 %v652, 7
  %v654 = vsub.s32 0, %v653
  %v655 = vrot.slane %v650, %v654
  %v657 = vmul.f32 %v396, %v655
  %v658 = vmul.f32 %v399, %v655
  %v659 = vmul.f32 %v404, %v655
  %v660 = vmul.f32 %v407, %v655
  %v661 = vmul.f32 %v412, %v655
  %v662 = vmul.f32 %v415, %v655
  %v663 = vmul.f32 %v420, %v655
  %v664 = vmul.f32 %v423, %v655
  %v665 = vmul.f32 %v428, %v655
  %v666 = vmul.f32 %v431, %v655
  %v667 = vmul.f32 %v436, %v655
  %v668 = vmul.f32 %v439, %v655
  %v669 = vmul.f32 %v444, %v655
  %v670 = vmul.f32 %v447, %v655
  %v671 = vmul.f32 %v452, %v655
  %v672 = vmul.f32 %v455, %v655
  %v673 = vmul.f32 %v460, %v655
  %v674 = vmul.f32 %v463, %v655
  %v675 = vmul.f32 %v468, %v655
  %v676 = vmul.f32 %v471, %v655
  %v677 = vmul.f32 %v476, %v655
  %v678 = vmul.f32 %v479, %v655
  %v679 = vmul.f32 %v484, %v655
  %v680 = vmul.f32 %v487, %v655
  %v681 = vmul.f32 %v492, %v655
  %v682 = vmul.f32 %v495, %v655
  %v683 = vmul.f32 %v500, %v655
  %v684 = vmul.f32 %v503, %v655
  %v685 = vmul.f32 %v508, %v655
  %v686 = vmul.f32 %v511, %v655
  %v687 = vmul.f32 %v516, %v655
  %v688 = vmul.f32 %v519, %v655
  %v689 = vmul.f32 %v524, %v655
  %v690 = vmul.f32 %v527, %v655
  %v691 = vmul.f32 %v532, %v655
  %v692 = vmul.f32 %v535, %v655
  %v693 = vmul.f32 %v540, %v655
  %v694 = vmul.f32 %v543, %v655
  %v695 = vmul.f32 %v548, %v655
  %v696 = vmul.f32 %v551, %v655
  %v697 = vmul.f32 %v556, %v655
  %v698 = vmul.f32 %v559, %v655
  %v699 = vmul.f32 %v564, %v655
  %v700 = vmul.f32 %v567, %v655
  %v701 = vmul.f32 %v572, %v655
  %v702 = vmul.f32 %v575, %v655
  %v703 = vmul.f32 %v580, %v655
  %v704 = vmul.f32 %v583, %v655
  %v705 = vmul.f32 %v588, %v655
  %v706 = vmul.f32 %v591, %v655
  %v707 = vmul.f32 %v596, %v655
  %v708 = vmul.f32 %v599, %v655
  %v709 = vmul.f32 %v604, %v655
  %v710 = vmul.f32 %v607, %v655
  %v711 = vmul.f32 %v612, %v655
  %v712 = vmul.f32 %v615, %v655
  %v713 = vmul.f32 %v620, %v655
  %v714 = vmul.f32 %v623, %v655
  %v715 = vmul.f32 %v628, %v655
  %v716 = vmul.f32 %v631, %v655
  %v717 = vmul.f32 %v636, %v655
  %v718 = vmul.f32 %v639, %v655
  %v719 = vmul.f32 %v644, %v655
  %v720 = vmul.f32 %v647, %v655
  %v721 = vld [vmem:[%s3] sm:$0x1]
  %v723 = vlaneseq
  %v724 = vshrl.u32 %v723, 7
  %v725 = vsub.s32 0, %v724
  %v726 = vrot.slane %v721, %v725
  %v728 = vadd.f32 %v657, %v726
  %v729 = vadd.f32 %v658, %v726
  %v730 = vadd.f32 %v659, %v726
  %v731 = vadd.f32 %v660, %v726
  %v732 = vadd.f32 %v661, %v726
  %v733 = vadd.f32 %v662, %v726
  %v734 = vadd.f32 %v663, %v726
  %v735 = vadd.f32 %v664, %v726
  %v736 = vadd.f32 %v665, %v726
  %v737 = vadd.f32 %v666, %v726
  %v738 = vadd.f32 %v667, %v726
  %v739 = vadd.f32 %v668, %v726
  %v740 = vadd.f32 %v669, %v726
  %v741 = vadd.f32 %v670, %v726
  %v742 = vadd.f32 %v671, %v726
  %v743 = vadd.f32 %v672, %v726
  %v744 = vadd.f32 %v673, %v726
  %v745 = vadd.f32 %v674, %v726
  %v746 = vadd.f32 %v675, %v726
  %v747 = vadd.f32 %v676, %v726
  %v748 = vadd.f32 %v677, %v726
  %v749 = vadd.f32 %v678, %v726
  %v750 = vadd.f32 %v679, %v726
  %v751 = vadd.f32 %v680, %v726
  %v752 = vadd.f32 %v681, %v726
  %v753 = vadd.f32 %v682, %v726
  %v754 = vadd.f32 %v683, %v726
  %v755 = vadd.f32 %v684, %v726
  %v756 = vadd.f32 %v685, %v726
  %v757 = vadd.f32 %v686, %v726
  %v758 = vadd.f32 %v687, %v726
  %v759 = vadd.f32 %v688, %v726
  %v760 = vadd.f32 %v689, %v726
  %v761 = vadd.f32 %v690, %v726
  %v762 = vadd.f32 %v691, %v726
  %v763 = vadd.f32 %v692, %v726
  %v764 = vadd.f32 %v693, %v726
  %v765 = vadd.f32 %v694, %v726
  %v766 = vadd.f32 %v695, %v726
  %v767 = vadd.f32 %v696, %v726
  %v768 = vadd.f32 %v697, %v726
  %v769 = vadd.f32 %v698, %v726
  %v770 = vadd.f32 %v699, %v726
  %v771 = vadd.f32 %v700, %v726
  %v772 = vadd.f32 %v701, %v726
  %v773 = vadd.f32 %v702, %v726
  %v774 = vadd.f32 %v703, %v726
  %v775 = vadd.f32 %v704, %v726
  %v776 = vadd.f32 %v705, %v726
  %v777 = vadd.f32 %v706, %v726
  %v778 = vadd.f32 %v707, %v726
  %v779 = vadd.f32 %v708, %v726
  %v780 = vadd.f32 %v709, %v726
  %v781 = vadd.f32 %v710, %v726
  %v782 = vadd.f32 %v711, %v726
  %v783 = vadd.f32 %v712, %v726
  %v784 = vadd.f32 %v713, %v726
  %v785 = vadd.f32 %v714, %v726
  %v786 = vadd.f32 %v715, %v726
  %v787 = vadd.f32 %v716, %v726
  %v788 = vadd.f32 %v717, %v726
  %v789 = vadd.f32 %v718, %v726
  %v790 = vadd.f32 %v719, %v726
  %v791 = vadd.f32 %v720, %v726
  %v792 = vmax.f32 %v728, 0.0
  %v793 = vmax.f32 %v729, 0.0
  %v794 = vmax.f32 %v730, 0.0
  %v795 = vmax.f32 %v731, 0.0
  %v796 = vmax.f32 %v732, 0.0
  %v797 = vmax.f32 %v733, 0.0
  %v798 = vmax.f32 %v734, 0.0
  %v799 = vmax.f32 %v735, 0.0
  %v800 = vmax.f32 %v736, 0.0
  %v801 = vmax.f32 %v737, 0.0
  %v802 = vmax.f32 %v738, 0.0
  %v803 = vmax.f32 %v739, 0.0
  %v804 = vmax.f32 %v740, 0.0
  %v805 = vmax.f32 %v741, 0.0
  %v806 = vmax.f32 %v742, 0.0
  %v807 = vmax.f32 %v743, 0.0
  %v808 = vmax.f32 %v744, 0.0
  %v809 = vmax.f32 %v745, 0.0
  %v810 = vmax.f32 %v746, 0.0
  %v811 = vmax.f32 %v747, 0.0
  %v812 = vmax.f32 %v748, 0.0
  %v813 = vmax.f32 %v749, 0.0
  %v814 = vmax.f32 %v750, 0.0
  %v815 = vmax.f32 %v751, 0.0
  %v816 = vmax.f32 %v752, 0.0
  %v817 = vmax.f32 %v753, 0.0
  %v818 = vmax.f32 %v754, 0.0
  %v819 = vmax.f32 %v755, 0.0
  %v820 = vmax.f32 %v756, 0.0
  %v821 = vmax.f32 %v757, 0.0
  %v822 = vmax.f32 %v758, 0.0
  %v823 = vmax.f32 %v759, 0.0
  %v824 = vmax.f32 %v760, 0.0
  %v825 = vmax.f32 %v761, 0.0
  %v826 = vmax.f32 %v762, 0.0
  %v827 = vmax.f32 %v763, 0.0
  %v828 = vmax.f32 %v764, 0.0
  %v829 = vmax.f32 %v765, 0.0
  %v830 = vmax.f32 %v766, 0.0
  %v831 = vmax.f32 %v767, 0.0
  %v832 = vmax.f32 %v768, 0.0
  %v833 = vmax.f32 %v769, 0.0
  %v834 = vmax.f32 %v770, 0.0
  %v835 = vmax.f32 %v771, 0.0
  %v836 = vmax.f32 %v772, 0.0
  %v837 = vmax.f32 %v773, 0.0
  %v838 = vmax.f32 %v774, 0.0
  %v839 = vmax.f32 %v775, 0.0
  %v840 = vmax.f32 %v776, 0.0
  %v841 = vmax.f32 %v777, 0.0
  %v842 = vmax.f32 %v778, 0.0
  %v843 = vmax.f32 %v779, 0.0
  %v844 = vmax.f32 %v780, 0.0
  %v845 = vmax.f32 %v781, 0.0
  %v846 = vmax.f32 %v782, 0.0
  %v847 = vmax.f32 %v783, 0.0
  %v848 = vmax.f32 %v784, 0.0
  %v849 = vmax.f32 %v785, 0.0
  %v850 = vmax.f32 %v786, 0.0
  %v851 = vmax.f32 %v787, 0.0
  %v852 = vmax.f32 %v788, 0.0
  %v853 = vmax.f32 %v789, 0.0
  %v854 = vmax.f32 %v790, 0.0
  %v855 = vmax.f32 %v791, 0.0
  %v856 = vpack.c.bf16 %v793, %v792
  %v857 = vpack.c.bf16 %v795, %v794
  %v858 = vpack.c.bf16 %v797, %v796
  %v859 = vpack.c.bf16 %v799, %v798
  %v860 = vpack.c.bf16 %v801, %v800
  %v861 = vpack.c.bf16 %v803, %v802
  %v862 = vpack.c.bf16 %v805, %v804
  %v863 = vpack.c.bf16 %v807, %v806
  %v864 = vpack.c.bf16 %v809, %v808
  %v865 = vpack.c.bf16 %v811, %v810
  %v866 = vpack.c.bf16 %v813, %v812
  %v867 = vpack.c.bf16 %v815, %v814
  %v868 = vpack.c.bf16 %v817, %v816
  %v869 = vpack.c.bf16 %v819, %v818
  %v870 = vpack.c.bf16 %v821, %v820
  %v871 = vpack.c.bf16 %v823, %v822
  %v872 = vpack.c.bf16 %v825, %v824
  %v873 = vpack.c.bf16 %v827, %v826
  %v874 = vpack.c.bf16 %v829, %v828
  %v875 = vpack.c.bf16 %v831, %v830
  %v876 = vpack.c.bf16 %v833, %v832
  %v877 = vpack.c.bf16 %v835, %v834
  %v878 = vpack.c.bf16 %v837, %v836
  %v879 = vpack.c.bf16 %v839, %v838
  %v880 = vpack.c.bf16 %v841, %v840
  %v881 = vpack.c.bf16 %v843, %v842
  %v882 = vpack.c.bf16 %v845, %v844
  %v883 = vpack.c.bf16 %v847, %v846
  %v884 = vpack.c.bf16 %v849, %v848
  %v885 = vpack.c.bf16 %v851, %v850
  %v886 = vpack.c.bf16 %v853, %v852
  %v887 = vpack.c.bf16 %v855, %v854
  %v920 = vunpack.c.l.b16 %v856
  %v921 = vunpack.c.h.b16 %v856
  %v922 = vunpack.c.l.b16 %v857
  %v923 = vunpack.c.h.b16 %v857
  %v924 = vunpack.c.l.b16 %v858
  %v925 = vunpack.c.h.b16 %v858
  %v926 = vunpack.c.l.b16 %v859
  %v927 = vunpack.c.h.b16 %v859
  %v928 = vunpack.c.l.b16 %v860
  %v929 = vunpack.c.h.b16 %v860
  %v930 = vunpack.c.l.b16 %v861
  %v931 = vunpack.c.h.b16 %v861
  %v932 = vunpack.c.l.b16 %v862
  %v933 = vunpack.c.h.b16 %v862
  %v934 = vunpack.c.l.b16 %v863
  %v935 = vunpack.c.h.b16 %v863
  %v936 = vunpack.c.l.b16 %v864
  %v937 = vunpack.c.h.b16 %v864
  %v938 = vunpack.c.l.b16 %v865
  %v939 = vunpack.c.h.b16 %v865
  %v940 = vunpack.c.l.b16 %v866
  %v941 = vunpack.c.h.b16 %v866
  %v942 = vunpack.c.l.b16 %v867
  %v943 = vunpack.c.h.b16 %v867
  %v944 = vunpack.c.l.b16 %v868
  %v945 = vunpack.c.h.b16 %v868
  %v946 = vunpack.c.l.b16 %v869
  %v947 = vunpack.c.h.b16 %v869
  %v948 = vunpack.c.l.b16 %v870
  %v949 = vunpack.c.h.b16 %v870
  %v950 = vunpack.c.l.b16 %v871
  %v951 = vunpack.c.h.b16 %v871
  %v952 = vunpack.c.l.b16 %v872
  %v953 = vunpack.c.h.b16 %v872
  %v954 = vunpack.c.l.b16 %v873
  %v955 = vunpack.c.h.b16 %v873
  %v956 = vunpack.c.l.b16 %v874
  %v957 = vunpack.c.h.b16 %v874
  %v958 = vunpack.c.l.b16 %v875
  %v959 = vunpack.c.h.b16 %v875
  %v960 = vunpack.c.l.b16 %v876
  %v961 = vunpack.c.h.b16 %v876
  %v962 = vunpack.c.l.b16 %v877
  %v963 = vunpack.c.h.b16 %v877
  %v964 = vunpack.c.l.b16 %v878
  %v965 = vunpack.c.h.b16 %v878
  %v966 = vunpack.c.l.b16 %v879
  %v967 = vunpack.c.h.b16 %v879
  %v968 = vunpack.c.l.b16 %v880
  %v969 = vunpack.c.h.b16 %v880
  %v970 = vunpack.c.l.b16 %v881
  %v971 = vunpack.c.h.b16 %v881
  %v972 = vunpack.c.l.b16 %v882
  %v973 = vunpack.c.h.b16 %v882
  %v974 = vunpack.c.l.b16 %v883
  %v975 = vunpack.c.h.b16 %v883
  %v976 = vunpack.c.l.b16 %v884
  %v977 = vunpack.c.h.b16 %v884
  %v978 = vunpack.c.l.b16 %v885
  %v979 = vunpack.c.h.b16 %v885
  %v980 = vunpack.c.l.b16 %v886
  %v981 = vunpack.c.h.b16 %v886
  %v982 = vunpack.c.l.b16 %v887
  %v983 = vunpack.c.h.b16 %v887
  %v984 = vpack.c.b16 %v920, %v920
  %v985 = vpack.c.b16 %v921, %v921
  %v986 = vpack.c.b16 %v922, %v922
  %v987 = vpack.c.b16 %v923, %v923
  %v988 = vpack.c.b16 %v924, %v924
  %v989 = vpack.c.b16 %v925, %v925
  %v990 = vpack.c.b16 %v926, %v926
  %v991 = vpack.c.b16 %v927, %v927
  %v992 = vpack.c.b16 %v928, %v928
  %v993 = vpack.c.b16 %v929, %v929
  %v994 = vpack.c.b16 %v930, %v930
  %v995 = vpack.c.b16 %v931, %v931
  %v996 = vpack.c.b16 %v932, %v932
  %v997 = vpack.c.b16 %v933, %v933
  %v998 = vpack.c.b16 %v934, %v934
  %v999 = vpack.c.b16 %v935, %v935
  %v1000 = vpack.c.b16 %v936, %v936
  %v1001 = vpack.c.b16 %v937, %v937
  %v1002 = vpack.c.b16 %v938, %v938
  %v1003 = vpack.c.b16 %v939, %v939
  %v1004 = vpack.c.b16 %v940, %v940
  %v1005 = vpack.c.b16 %v941, %v941
  %v1006 = vpack.c.b16 %v942, %v942
  %v1007 = vpack.c.b16 %v943, %v943
  %v1008 = vpack.c.b16 %v944, %v944
  %v1009 = vpack.c.b16 %v945, %v945
  %v1010 = vpack.c.b16 %v946, %v946
  %v1011 = vpack.c.b16 %v947, %v947
  %v1012 = vpack.c.b16 %v948, %v948
  %v1013 = vpack.c.b16 %v949, %v949
  %v1014 = vpack.c.b16 %v950, %v950
  %v1015 = vpack.c.b16 %v951, %v951
  %v1016 = vpack.c.b16 %v952, %v952
  %v1017 = vpack.c.b16 %v953, %v953
  %v1018 = vpack.c.b16 %v954, %v954
  %v1019 = vpack.c.b16 %v955, %v955
  %v1020 = vpack.c.b16 %v956, %v956
  %v1021 = vpack.c.b16 %v957, %v957
  %v1022 = vpack.c.b16 %v958, %v958
  %v1023 = vpack.c.b16 %v959, %v959
  %v1024 = vpack.c.b16 %v960, %v960
  %v1025 = vpack.c.b16 %v961, %v961
  %v1026 = vpack.c.b16 %v962, %v962
  %v1027 = vpack.c.b16 %v963, %v963
  %v1028 = vpack.c.b16 %v964, %v964
  %v1029 = vpack.c.b16 %v965, %v965
  %v1030 = vpack.c.b16 %v966, %v966
  %v1031 = vpack.c.b16 %v967, %v967
  %v1032 = vpack.c.b16 %v968, %v968
  %v1033 = vpack.c.b16 %v969, %v969
  %v1034 = vpack.c.b16 %v970, %v970
  %v1035 = vpack.c.b16 %v971, %v971
  %v1036 = vpack.c.b16 %v972, %v972
  %v1037 = vpack.c.b16 %v973, %v973
  %v1038 = vpack.c.b16 %v974, %v974
  %v1039 = vpack.c.b16 %v975, %v975
  %v1040 = vpack.c.b16 %v976, %v976
  %v1041 = vpack.c.b16 %v977, %v977
  %v1042 = vpack.c.b16 %v978, %v978
  %v1043 = vpack.c.b16 %v979, %v979
  %v1044 = vpack.c.b16 %v980, %v980
  %v1045 = vpack.c.b16 %v981, %v981
  %v1046 = vpack.c.b16 %v982, %v982
  %v1047 = vpack.c.b16 %v983, %v983
  %1112 = vst [vmem:[%s4] sm:$0xf] %v984
  %1113 = vst [vmem:[%s4 + $0x4] sm:$0xf] %v985
  %1114 = vst [vmem:[%s4 + $0x8] sm:$0xf] %v986
  %1115 = vst [vmem:[%s4 + $0xc] sm:$0xf] %v987
  %1116 = vst [vmem:[%s4 + $0x10] sm:$0xf] %v988
  %1117 = vst [vmem:[%s4 + $0x14] sm:$0xf] %v989
  %1118 = vst [vmem:[%s4 + $0x18] sm:$0xf] %v990
  %1119 = vst [vmem:[%s4 + $0x1c] sm:$0xf] %v991
  %1120 = vst [vmem:[%s4 + $0x20] sm:$0xf] %v992
  %1121 = vst [vmem:[%s4 + $0x24] sm:$0xf] %v993
  %1122 = vst [vmem:[%s4 + $0x28] sm:$0xf] %v994
  %1123 = vst [vmem:[%s4 + $0x2c] sm:$0xf] %v995
  %1124 = vst [vmem:[%s4 + $0x30] sm:$0xf] %v996
  %1125 = vst [vmem:[%s4 + $0x34] sm:$0xf] %v997
  %1126 = vst [vmem:[%s4 + $0x38] sm:$0xf] %v998
  %1127 = vst [vmem:[%s4 + $0x3c] sm:$0xf] %v999
  %1128 = vst [vmem:[%s4 + $0x40] sm:$0xf] %v1000
  %1129 = vst [vmem:[%s4 + $0x44] sm:$0xf] %v1001
  %1130 = vst [vmem:[%s4 + $0x48] sm:$0xf] %v1002
  %1131 = vst [vmem:[%s4 + $0x4c] sm:$0xf] %v1003
  %1132 = vst [vmem:[%s4 + $0x50] sm:$0xf] %v1004
  %1133 = vst [vmem:[%s4 + $0x54] sm:$0xf] %v1005
  %1134 = vst [vmem:[%s4 + $0x58] sm:$0xf] %v1006
  %1135 = vst [vmem:[%s4 + $0x5c] sm:$0xf] %v1007
  %1136 = vst [vmem:[%s4 + $0x60] sm:$0xf] %v1008
  %1137 = vst [vmem:[%s4 + $0x64] sm:$0xf] %v1009
  %1138 = vst [vmem:[%s4 + $0x68] sm:$0xf] %v1010
  %1139 = vst [vmem:[%s4 + $0x6c] sm:$0xf] %v1011
  %1140 = vst [vmem:[%s4 + $0x70] sm:$0xf] %v1012
  %1141 = vst [vmem:[%s4 + $0x74] sm:$0xf] %v1013
  %1142 = vst [vmem:[%s4 + $0x78] sm:$0xf] %v1014
  %1143 = vst [vmem:[%s4 + $0x7c] sm:$0xf] %v1015
  %1144 = vst [vmem:[%s4 + $0x80] sm:$0xf] %v1016
  %1145 = vst [vmem:[%s4 + $0x84] sm:$0xf] %v1017
  %1146 = vst [vmem:[%s4 + $0x88] sm:$0xf] %v1018
  %1147 = vst [vmem:[%s4 + $0x8c] sm:$0xf] %v1019
  %1148 = vst [vmem:[%s4 + $0x90] sm:$0xf] %v1020
  %1149 = vst [vmem:[%s4 + $0x94] sm:$0xf] %v1021
  %1150 = vst [vmem:[%s4 + $0x98] sm:$0xf] %v1022
  %1151 = vst [vmem:[%s4 + $0x9c] sm:$0xf] %v1023
  %1152 = vst [vmem:[%s4 + $0xa0] sm:$0xf] %v1024
  %1153 = vst [vmem:[%s4 + $0xa4] sm:$0xf] %v1025
  %1154 = vst [vmem:[%s4 + $0xa8] sm:$0xf] %v1026
  %1155 = vst [vmem:[%s4 + $0xac] sm:$0xf] %v1027
  %1156 = vst [vmem:[%s4 + $0xb0] sm:$0xf] %v1028
  %1157 = vst [vmem:[%s4 + $0xb4] sm:$0xf] %v1029
  %1158 = vst [vmem:[%s4 + $0xb8] sm:$0xf] %v1030
  %1159 = vst [vmem:[%s4 + $0xbc] sm:$0xf] %v1031
  %1160 = vst [vmem:[%s4 + $0xc0] sm:$0xf] %v1032
  %1161 = vst [vmem:[%s4 + $0xc4] sm:$0xf] %v1033
  %1162 = vst [vmem:[%s4 + $0xc8] sm:$0xf] %v1034
  %1163 = vst [vmem:[%s4 + $0xcc] sm:$0xf] %v1035
  %1164 = vst [vmem:[%s4 + $0xd0] sm:$0xf] %v1036
  %1165 = vst [vmem:[%s4 + $0xd4] sm:$0xf] %v1037
  %1166 = vst [vmem:[%s4 + $0xd8] sm:$0xf] %v1038
  %1167 = vst [vmem:[%s4 + $0xdc] sm:$0xf] %v1039
  %1168 = vst [vmem:[%s4 + $0xe0] sm:$0xf] %v1040
  %1169 = vst [vmem:[%s4 + $0xe4] sm:$0xf] %v1041
  %1170 = vst [vmem:[%s4 + $0xe8] sm:$0xf] %v1042
  %1171 = vst [vmem:[%s4 + $0xec] sm:$0xf] %v1043
  %1172 = vst [vmem:[%s4 + $0xf0] sm:$0xf] %v1044
  %1173 = vst [vmem:[%s4 + $0xf4] sm:$0xf] %v1045
  %1174 = vst [vmem:[%s4 + $0xf8] sm:$0xf] %v1046
  %1175 = vst [vmem:[%s4 + $0xfc] sm:$0xf] %v1047
  // Predicated region
  $region18: #{model_forward.5} parent=0 // pred_check
    _
  $region19: #{model_forward.5} parent=0 // pred_check_branch
    %1177 = sbr.rel (0) target = $region21
  $region20: #{model_forward.5} parent=0 // pred_region
    _
  $region21: #{model_forward.5} parent=0 // pred_fallthru
    _
  // Predicated region
  $region22: #{model_forward.5} parent=0 // pred_check
    _
  $region23: #{model_forward.5} parent=0 // pred_check_branch
    %1179 = sbr.rel (0) target = $region25
  $region24: #{model_forward.5} parent=0 // pred_region
    _
  $region25: #{model_forward.5} parent=0 // pred_fallthru
    _

// kernel: model_forward.6
$region0: #{model_forward.6}
  #allocation0 [shape = 'u32[]', space=smem, size = 0x4, offset = 0x4, fixed_abs, tag = 'smem constant byte address 0x4 - core index']
  #allocation1 [shape = 'u32[144,128]{1,0:T(1,128)}', space=vmem, size = 0x12000, scoped, tag = 'internal scratch']
  %s0 = inlined_call_operand.vmem [shape: bf16[128,1152], index: 0, kind: input, shape index: {}]
  %s1 = inlined_call_operand.vmem [shape: bf16[1152,128], index: 1, kind: input, shape index: {}]
  %s2 = inlined_call_operand.vmem [shape: f32[1,128], index: 2, kind: input, shape index: {}]
  %s3 = inlined_call_operand.vmem [shape: f32[1,128], index: 3, kind: input, shape index: {}]
  %s4 = inlined_call_operand.vmem [shape: bf16[128,128], index: 4, kind: output, shape index: {}]
  %s5 = sld [smem:[#allocation0]]
  $region26: #{model_forward.6} parent=0
    _
  %s7 = ssub.s32 1, %s5
  %s8 = scalar_select 0, %s7, %s5
  // Predicated region
  $region2: #{model_forward.6} parent=0 // pred_check
    _
  $region3: #{model_forward.6} parent=0 // pred_check_branch
    %10 = sbr.rel (0) target = $region5
  $region4: #{model_forward.6} parent=0 // pred_region
    _
  $region5: #{model_forward.6} parent=0 // pred_fallthru
    _
  // Predicated region
  $region6: #{model_forward.6} parent=0 // pred_check
    _
  $region7: #{model_forward.6} parent=0 // pred_check_branch
    %12 = sbr.rel (0) target = $region9
  $region8: #{model_forward.6} parent=0 // pred_region
    _
  $region9: #{model_forward.6} parent=0 // pred_fallthru
    _
  // Predicated region
  $region10: #{model_forward.6} parent=0 // pred_check
    _
  $region11: #{model_forward.6} parent=0 // pred_check_branch
    %14 = sbr.rel (0) target = $region13
  $region12: #{model_forward.6} parent=0 // pred_region
    _
  $region13: #{model_forward.6} parent=0 // pred_fallthru
    _
  // Predicated region
  $region14: #{model_forward.6} parent=0 // pred_check
    _
  $region15: #{model_forward.6} parent=0 // pred_check_branch
    %16 = sbr.rel (0) target = $region17
  $region16: #{model_forward.6} parent=0 // pred_region
    _
  $region17: #{model_forward.6} parent=0 // pred_fallthru
    _
  %v18 = vld [vmem:[%s0] sm:$0xff]
  %v19 = vld [vmem:[%s0 + $0x8] sm:$0xff]
  %v20 = vld [vmem:[%s0 + $0x10] sm:$0xff]
  %v21 = vld [vmem:[%s0 + $0x18] sm:$0xff]
  %v22 = vld [vmem:[%s0 + $0x20] sm:$0xf]
  %v23 = vld [vmem:[%s0 + $0x24] sm:$0xff]
  %v24 = vld [vmem:[%s0 + $0x2c] sm:$0xff]
  %v25 = vld [vmem:[%s0 + $0x34] sm:$0xff]
  %v26 = vld [vmem:[%s0 + $0x3c] sm:$0xff]
  %v27 = vld [vmem:[%s0 + $0x44] sm:$0xf]
  %v28 = vld [vmem:[%s0 + $0x48] sm:$0xff]
  %v29 = vld [vmem:[%s0 + $0x50] sm:$0xff]
  %v30 = vld [vmem:[%s0 + $0x58] sm:$0xff]
  %v31 = vld [vmem:[%s0 + $0x60] sm:$0xff]
  %v32 = vld [vmem:[%s0 + $0x68] sm:$0xf]
  %v33 = vld [vmem:[%s0 + $0x6c] sm:$0xff]
  %v34 = vld [vmem:[%s0 + $0x74] sm:$0xff]
  %v35 = vld [vmem:[%s0 + $0x7c] sm:$0xff]
  %v36 = vld [vmem:[%s0 + $0x84] sm:$0xff]
  %v37 = vld [vmem:[%s0 + $0x8c] sm:$0xf]
  %v38 = vld [vmem:[%s0 + $0x90] sm:$0xff]
  %v39 = vld [vmem:[%s0 + $0x98] sm:$0xff]
  %v40 = vld [vmem:[%s0 + $0xa0] sm:$0xff]
  %v41 = vld [vmem:[%s0 + $0xa8] sm:$0xff]
  %v42 = vld [vmem:[%s0 + $0xb0] sm:$0xf]
  %v43 = vld [vmem:[%s0 + $0xb4] sm:$0xff]
  %v44 = vld [vmem:[%s0 + $0xbc] sm:$0xff]
  %v45 = vld [vmem:[%s0 + $0xc4] sm:$0xff]
  %v46 = vld [vmem:[%s0 + $0xcc] sm:$0xff]
  %v47 = vld [vmem:[%s0 + $0xd4] sm:$0xf]
  %v48 = vld [vmem:[%s0 + $0xd8] sm:$0xff]
  %v49 = vld [vmem:[%s0 + $0xe0] sm:$0xff]
  %v50 = vld [vmem:[%s0 + $0xe8] sm:$0xff]
  %v51 = vld [vmem:[%s0 + $0xf0] sm:$0xff]
  %v52 = vld [vmem:[%s0 + $0xf8] sm:$0xf]
  %v53 = vld [vmem:[%s0 + $0xfc] sm:$0xff]
  %v54 = vld [vmem:[%s0 + $0x104] sm:$0xff]
  %v55 = vld [vmem:[%s0 + $0x10c] sm:$0xff]
  %v56 = vld [vmem:[%s0 + $0x114] sm:$0xff]
  %v57 = vld [vmem:[%s0 + $0x11c] sm:$0xf]
  %v58 = vld [vmem:[%s0 + $0x120] sm:$0xff]
  %v59 = vld [vmem:[%s0 + $0x128] sm:$0xff]
  %v60 = vld [vmem:[%s0 + $0x130] sm:$0xff]
  %v61 = vld [vmem:[%s0 + $0x138] sm:$0xff]
  %v62 = vld [vmem:[%s0 + $0x140] sm:$0xf]
  %v63 = vld [vmem:[%s0 + $0x144] sm:$0xff]
  %v64 = vld [vmem:[%s0 + $0x14c] sm:$0xff]
  %v65 = vld [vmem:[%s0 + $0x154] sm:$0xff]
  %v66 = vld [vmem:[%s0 + $0x15c] sm:$0xff]
  %v67 = vld [vmem:[%s0 + $0x164] sm:$0xf]
  %v68 = vld [vmem:[%s0 + $0x168] sm:$0xff]
  %v69 = vld [vmem:[%s0 + $0x170] sm:$0xff]
  %v70 = vld [vmem:[%s0 + $0x178] sm:$0xff]
  %v71 = vld [vmem:[%s0 + $0x180] sm:$0xff]
  %v72 = vld [vmem:[%s0 + $0x188] sm:$0xf]
  %v73 = vld [vmem:[%s0 + $0x18c] sm:$0xff]
  %v74 = vld [vmem:[%s0 + $0x194] sm:$0xff]
  %v75 = vld [vmem:[%s0 + $0x19c] sm:$0xff]
  %v76 = vld [vmem:[%s0 + $0x1a4] sm:$0xff]
  %v77 = vld [vmem:[%s0 + $0x1ac] sm:$0xf]
  %v78 = vld [vmem:[%s0 + $0x1b0] sm:$0xff]
  %v79 = vld [vmem:[%s0 + $0x1b8] sm:$0xff]
  %v80 = vld [vmem:[%s0 + $0x1c0] sm:$0xff]
  %v81 = vld [vmem:[%s0 + $0x1c8] sm:$0xff]
  %v82 = vld [vmem:[%s0 + $0x1d0] sm:$0xf]
  %v83 = vld [vmem:[%s0 + $0x1d4] sm:$0xff]
  %v84 = vld [vmem:[%s0 + $0x1dc] sm:$0xff]
  %v85 = vld [vmem:[%s0 + $0x1e4] sm:$0xff]
  %v86 = vld [vmem:[%s0 + $0x1ec] sm:$0xff]
  %v87 = vld [vmem:[%s0 + $0x1f4] sm:$0xf]
  %v88 = vld [vmem:[%s0 + $0x1f8] sm:$0xff]
  %v89 = vld [vmem:[%s0 + $0x200] sm:$0xff]
  %v90 = vld [vmem:[%s0 + $0x208] sm:$0xff]
  %v91 = vld [vmem:[%s0 + $0x210] sm:$0xff]
  %v92 = vld [vmem:[%s0 + $0x218] sm:$0xf]
  %v93 = vld [vmem:[%s0 + $0x21c] sm:$0xff]
  %v94 = vld [vmem:[%s0 + $0x224] sm:$0xff]
  %v95 = vld [vmem:[%s0 + $0x22c] sm:$0xff]
  %v96 = vld [vmem:[%s0 + $0x234] sm:$0xff]
  %v97 = vld [vmem:[%s0 + $0x23c] sm:$0xf]
  %v98 = vld [vmem:[%s1] sm:$0xf]
  %v99 = vld [vmem:[%s1 + $0x4] sm:$0xf]
  %v100 = vld [vmem:[%s1 + $0x8] sm:$0xf]
  %v101 = vld [vmem:[%s1 + $0xc] sm:$0xf]
  %v102 = vld [vmem:[%s1 + $0x10] sm:$0xf]
  %v103 = vld [vmem:[%s1 + $0x14] sm:$0xf]
  %v104 = vld [vmem:[%s1 + $0x18] sm:$0xf]
  %v105 = vld [vmem:[%s1 + $0x1c] sm:$0xf]
  %v106 = vld [vmem:[%s1 + $0x20] sm:$0xf]
  %v107 = vld [vmem:[%s1 + $0x24] sm:$0xf]
  %v108 = vld [vmem:[%s1 + $0x28] sm:$0xf]
  %v109 = vld [vmem:[%s1 + $0x2c] sm:$0xf]
  %v110 = vld [vmem:[%s1 + $0x30] sm:$0xf]
  %v111 = vld [vmem:[%s1 + $0x34] sm:$0xf]
  %v112 = vld [vmem:[%s1 + $0x38] sm:$0xf]
  %v113 = vld [vmem:[%s1 + $0x3c] sm:$0xf]
  %v114 = vld [vmem:[%s1 + $0x40] sm:$0xf]
  %v115 = vld [vmem:[%s1 + $0x44] sm:$0xf]
  %v116 = vld [vmem:[%s1 + $0x48] sm:$0xf]
  %v117 = vld [vmem:[%s1 + $0x4c] sm:$0xf]
  %v118 = vld [vmem:[%s1 + $0x50] sm:$0xf]
  %v119 = vld [vmem:[%s1 + $0x54] sm:$0xf]
  %v120 = vld [vmem:[%s1 + $0x58] sm:$0xf]
  %v121 = vld [vmem:[%s1 + $0x5c] sm:$0xf]
  %v122 = vld [vmem:[%s1 + $0x60] sm:$0xf]
  %v123 = vld [vmem:[%s1 + $0x64] sm:$0xf]
  %v124 = vld [vmem:[%s1 + $0x68] sm:$0xf]
  %v125 = vld [vmem:[%s1 + $0x6c] sm:$0xf]
  %v126 = vld [vmem:[%s1 + $0x70] sm:$0xf]
  %v127 = vld [vmem:[%s1 + $0x74] sm:$0xf]
  %v128 = vld [vmem:[%s1 + $0x78] sm:$0xf]
  %v129 = vld [vmem:[%s1 + $0x7c] sm:$0xf]
  %v130 = vld [vmem:[%s1 + $0x80] sm:$0xf]
  %v131 = vld [vmem:[%s1 + $0x84] sm:$0xf]
  %v132 = vld [vmem:[%s1 + $0x88] sm:$0xf]
  %v133 = vld [vmem:[%s1 + $0x8c] sm:$0xf]
  %v134 = vld [vmem:[%s1 + $0x90] sm:$0xf]
  %v135 = vld [vmem:[%s1 + $0x94] sm:$0xf]
  %v136 = vld [vmem:[%s1 + $0x98] sm:$0xf]
  %v137 = vld [vmem:[%s1 + $0x9c] sm:$0xf]
  %v138 = vld [vmem:[%s1 + $0xa0] sm:$0xf]
  %v139 = vld [vmem:[%s1 + $0xa4] sm:$0xf]
  %v140 = vld [vmem:[%s1 + $0xa8] sm:$0xf]
  %v141 = vld [vmem:[%s1 + $0xac] sm:$0xf]
  %v142 = vld [vmem:[%s1 + $0xb0] sm:$0xf]
  %v143 = vld [vmem:[%s1 + $0xb4] sm:$0xf]
  %v144 = vld [vmem:[%s1 + $0xb8] sm:$0xf]
  %v145 = vld [vmem:[%s1 + $0xbc] sm:$0xf]
  %v146 = vld [vmem:[%s1 + $0xc0] sm:$0xf]
  %v147 = vld [vmem:[%s1 + $0xc4] sm:$0xf]
  %v148 = vld [vmem:[%s1 + $0xc8] sm:$0xf]
  %v149 = vld [vmem:[%s1 + $0xcc] sm:$0xf]
  %v150 = vld [vmem:[%s1 + $0xd0] sm:$0xf]
  %v151 = vld [vmem:[%s1 + $0xd4] sm:$0xf]
  %v152 = vld [vmem:[%s1 + $0xd8] sm:$0xf]
  %v153 = vld [vmem:[%s1 + $0xdc] sm:$0xf]
  %v154 = vld [vmem:[%s1 + $0xe0] sm:$0xf]
  %v155 = vld [vmem:[%s1 + $0xe4] sm:$0xf]
  %v156 = vld [vmem:[%s1 + $0xe8] sm:$0xf]
  %v157 = vld [vmem:[%s1 + $0xec] sm:$0xf]
  %v158 = vld [vmem:[%s1 + $0xf0] sm:$0xf]
  %v159 = vld [vmem:[%s1 + $0xf4] sm:$0xf]
  %v160 = vld [vmem:[%s1 + $0xf8] sm:$0xf]
  %v161 = vld [vmem:[%s1 + $0xfc] sm:$0xf]
  %v162 = vld [vmem:[%s1 + $0x100] sm:$0xf]
  %v163 = vld [vmem:[%s1 + $0x104] sm:$0xf]
  %v164 = vld [vmem:[%s1 + $0x108] sm:$0xf]
  %v165 = vld [vmem:[%s1 + $0x10c] sm:$0xf]
  %v166 = vld [vmem:[%s1 + $0x110] sm:$0xf]
  %v167 = vld [vmem:[%s1 + $0x114] sm:$0xf]
  %v168 = vld [vmem:[%s1 + $0x118] sm:$0xf]
  %v169 = vld [vmem:[%s1 + $0x11c] sm:$0xf]
  %v170 = vld [vmem:[%s1 + $0x120] sm:$0xf]
  %v171 = vld [vmem:[%s1 + $0x124] sm:$0xf]
  %v172 = vld [vmem:[%s1 + $0x128] sm:$0xf]
  %v173 = vld [vmem:[%s1 + $0x12c] sm:$0xf]
  %v174 = vld [vmem:[%s1 + $0x130] sm:$0xf]
  %v175 = vld [vmem:[%s1 + $0x134] sm:$0xf]
  %v176 = vld [vmem:[%s1 + $0x138] sm:$0xf]
  %v177 = vld [vmem:[%s1 + $0x13c] sm:$0xf]
  %v178 = vld [vmem:[%s1 + $0x140] sm:$0xf]
  %v179 = vld [vmem:[%s1 + $0x144] sm:$0xf]
  %v180 = vld [vmem:[%s1 + $0x148] sm:$0xf]
  %v181 = vld [vmem:[%s1 + $0x14c] sm:$0xf]
  %v182 = vld [vmem:[%s1 + $0x150] sm:$0xf]
  %v183 = vld [vmem:[%s1 + $0x154] sm:$0xf]
  %v184 = vld [vmem:[%s1 + $0x158] sm:$0xf]
  %v185 = vld [vmem:[%s1 + $0x15c] sm:$0xf]
  %v186 = vld [vmem:[%s1 + $0x160] sm:$0xf]
  %v187 = vld [vmem:[%s1 + $0x164] sm:$0xf]
  %v188 = vld [vmem:[%s1 + $0x168] sm:$0xf]
  %v189 = vld [vmem:[%s1 + $0x16c] sm:$0xf]
  %v190 = vld [vmem:[%s1 + $0x170] sm:$0xf]
  %v191 = vld [vmem:[%s1 + $0x174] sm:$0xf]
  %v192 = vld [vmem:[%s1 + $0x178] sm:$0xf]
  %v193 = vld [vmem:[%s1 + $0x17c] sm:$0xf]
  %v194 = vld [vmem:[%s1 + $0x180] sm:$0xf]
  %v195 = vld [vmem:[%s1 + $0x184] sm:$0xf]
  %v196 = vld [vmem:[%s1 + $0x188] sm:$0xf]
  %v197 = vld [vmem:[%s1 + $0x18c] sm:$0xf]
  %v198 = vld [vmem:[%s1 + $0x190] sm:$0xf]
  %v199 = vld [vmem:[%s1 + $0x194] sm:$0xf]
  %v200 = vld [vmem:[%s1 + $0x198] sm:$0xf]
  %v201 = vld [vmem:[%s1 + $0x19c] sm:$0xf]
  %v202 = vld [vmem:[%s1 + $0x1a0] sm:$0xf]
  %v203 = vld [vmem:[%s1 + $0x1a4] sm:$0xf]
  %v204 = vld [vmem:[%s1 + $0x1a8] sm:$0xf]
  %v205 = vld [vmem:[%s1 + $0x1ac] sm:$0xf]
  %v206 = vld [vmem:[%s1 + $0x1b0] sm:$0xf]
  %v207 = vld [vmem:[%s1 + $0x1b4] sm:$0xf]
  %v208 = vld [vmem:[%s1 + $0x1b8] sm:$0xf]
  %v209 = vld [vmem:[%s1 + $0x1bc] sm:$0xf]
  %v210 = vld [vmem:[%s1 + $0x1c0] sm:$0xf]
  %v211 = vld [vmem:[%s1 + $0x1c4] sm:$0xf]
  %v212 = vld [vmem:[%s1 + $0x1c8] sm:$0xf]
  %v213 = vld [vmem:[%s1 + $0x1cc] sm:$0xf]
  %v214 = vld [vmem:[%s1 + $0x1d0] sm:$0xf]
  %v215 = vld [vmem:[%s1 + $0x1d4] sm:$0xf]
  %v216 = vld [vmem:[%s1 + $0x1d8] sm:$0xf]
  %v217 = vld [vmem:[%s1 + $0x1dc] sm:$0xf]
  %v218 = vld [vmem:[%s1 + $0x1e0] sm:$0xf]
  %v219 = vld [vmem:[%s1 + $0x1e4] sm:$0xf]
  %v220 = vld [vmem:[%s1 + $0x1e8] sm:$0xf]
  %v221 = vld [vmem:[%s1 + $0x1ec] sm:$0xf]
  %v222 = vld [vmem:[%s1 + $0x1f0] sm:$0xf]
  %v223 = vld [vmem:[%s1 + $0x1f4] sm:$0xf]
  %v224 = vld [vmem:[%s1 + $0x1f8] sm:$0xf]
  %v225 = vld [vmem:[%s1 + $0x1fc] sm:$0xf]
  %v226 = vld [vmem:[%s1 + $0x200] sm:$0xf]
  %v227 = vld [vmem:[%s1 + $0x204] sm:$0xf]
  %v228 = vld [vmem:[%s1 + $0x208] sm:$0xf]
  %v229 = vld [vmem:[%s1 + $0x20c] sm:$0xf]
  %v230 = vld [vmem:[%s1 + $0x210] sm:$0xf]
  %v231 = vld [vmem:[%s1 + $0x214] sm:$0xf]
  %v232 = vld [vmem:[%s1 + $0x218] sm:$0xf]
  %v233 = vld [vmem:[%s1 + $0x21c] sm:$0xf]
  %v234 = vld [vmem:[%s1 + $0x220] sm:$0xf]
  %v235 = vld [vmem:[%s1 + $0x224] sm:$0xf]
  %v236 = vld [vmem:[%s1 + $0x228] sm:$0xf]
  %v237 = vld [vmem:[%s1 + $0x22c] sm:$0xf]
  %v238 = vld [vmem:[%s1 + $0x230] sm:$0xf]
  %v239 = vld [vmem:[%s1 + $0x234] sm:$0xf]
  %v240 = vld [vmem:[%s1 + $0x238] sm:$0xf]
  %v241 = vld [vmem:[%s1 + $0x23c] sm:$0xf]
  %v322 = vunpack.c.l.b16 %v18
  %v323 = vunpack.c.h.b16 %v18
  %v324 = vunpack.c.l.b16 %v19
  %v325 = vunpack.c.h.b16 %v19
  %v326 = vunpack.c.l.b16 %v20
  %v327 = vunpack.c.h.b16 %v20
  %v328 = vunpack.c.l.b16 %v21
  %v329 = vunpack.c.h.b16 %v21
  %v330 = vunpack.c.l.b16 %v22
  %v331 = vunpack.c.l.b16 %v23
  %v332 = vunpack.c.h.b16 %v23
  %v333 = vunpack.c.l.b16 %v24
  %v334 = vunpack.c.h.b16 %v24
  %v335 = vunpack.c.l.b16 %v25
  %v336 = vunpack.c.h.b16 %v25
  %v337 = vunpack.c.l.b16 %v26
  %v338 = vunpack.c.h.b16 %v26
  %v339 = vunpack.c.l.b16 %v27
  %v340 = vunpack.c.l.b16 %v28
  %v341 = vunpack.c.h.b16 %v28
  %v342 = vunpack.c.l.b16 %v29
  %v343 = vunpack.c.h.b16 %v29
  %v344 = vunpack.c.l.b16 %v30
  %v345 = vunpack.c.h.b16 %v30
  %v346 = vunpack.c.l.b16 %v31
  %v347 = vunpack.c.h.b16 %v31
  %v348 = vunpack.c.l.b16 %v32
  %v349 = vunpack.c.l.b16 %v33
  %v350 = vunpack.c.h.b16 %v33
  %v351 = vunpack.c.l.b16 %v34
  %v352 = vunpack.c.h.b16 %v34
  %v353 = vunpack.c.l.b16 %v35
  %v354 = vunpack.c.h.b16 %v35
  %v355 = vunpack.c.l.b16 %v36
  %v356 = vunpack.c.h.b16 %v36
  %v357 = vunpack.c.l.b16 %v37
  %v358 = vunpack.c.l.b16 %v38
  %v359 = vunpack.c.h.b16 %v38
  %v360 = vunpack.c.l.b16 %v39
  %v361 = vunpack.c.h.b16 %v39
  %v362 = vunpack.c.l.b16 %v40
  %v363 = vunpack.c.h.b16 %v40
  %v364 = vunpack.c.l.b16 %v41
  %v365 = vunpack.c.h.b16 %v41
  %v366 = vunpack.c.l.b16 %v42
  %v367 = vunpack.c.l.b16 %v43
  %v368 = vunpack.c.h.b16 %v43
  %v369 = vunpack.c.l.b16 %v44
  %v370 = vunpack.c.h.b16 %v44
  %v371 = vunpack.c.l.b16 %v45
  %v372 = vunpack.c.h.b16 %v45
  %v373 = vunpack.c.l.b16 %v46
  %v374 = vunpack.c.h.b16 %v46
  %v375 = vunpack.c.l.b16 %v47
  %v376 = vunpack.c.l.b16 %v48
  %v377 = vunpack.c.h.b16 %v48
  %v378 = vunpack.c.l.b16 %v49
  %v379 = vunpack.c.h.b16 %v49
  %v380 = vunpack.c.l.b16 %v50
  %v381 = vunpack.c.h.b16 %v50
  %v382 = vunpack.c.l.b16 %v51
  %v383 = vunpack.c.h.b16 %v51
  %v384 = vunpack.c.l.b16 %v52
  %v385 = vunpack.c.l.b16 %v53
  %v386 = vunpack.c.h.b16 %v53
  %v387 = vunpack.c.l.b16 %v54
  %v388 = vunpack.c.h.b16 %v54
  %v389 = vunpack.c.l.b16 %v55
  %v390 = vunpack.c.h.b16 %v55
  %v391 = vunpack.c.l.b16 %v56
  %v392 = vunpack.c.h.b16 %v56
  %v393 = vunpack.c.l.b16 %v57
  %v394 = vunpack.c.l.b16 %v58
  %v395 = vunpack.c.h.b16 %v58
  %v396 = vunpack.c.l.b16 %v59
  %v397 = vunpack.c.h.b16 %v59
  %v398 = vunpack.c.l.b16 %v60
  %v399 = vunpack.c.h.b16 %v60
  %v400 = vunpack.c.l.b16 %v61
  %v401 = vunpack.c.h.b16 %v61
  %v402 = vunpack.c.l.b16 %v62
  %v403 = vunpack.c.l.b16 %v63
  %v404 = vunpack.c.h.b16 %v63
  %v405 = vunpack.c.l.b16 %v64
  %v406 = vunpack.c.h.b16 %v64
  %v407 = vunpack.c.l.b16 %v65
  %v408 = vunpack.c.h.b16 %v65
  %v409 = vunpack.c.l.b16 %v66
  %v410 = vunpack.c.h.b16 %v66
  %v411 = vunpack.c.l.b16 %v67
  %v412 = vunpack.c.l.b16 %v68
  %v413 = vunpack.c.h.b16 %v68
  %v414 = vunpack.c.l.b16 %v69
  %v415 = vunpack.c.h.b16 %v69
  %v416 = vunpack.c.l.b16 %v70
  %v417 = vunpack.c.h.b16 %v70
  %v418 = vunpack.c.l.b16 %v71
  %v419 = vunpack.c.h.b16 %v71
  %v420 = vunpack.c.l.b16 %v72
  %v421 = vunpack.c.l.b16 %v73
  %v422 = vunpack.c.h.b16 %v73
  %v423 = vunpack.c.l.b16 %v74
  %v424 = vunpack.c.h.b16 %v74
  %v425 = vunpack.c.l.b16 %v75
  %v426 = vunpack.c.h.b16 %v75
  %v427 = vunpack.c.l.b16 %v76
  %v428 = vunpack.c.h.b16 %v76
  %v429 = vunpack.c.l.b16 %v77
  %v430 = vunpack.c.l.b16 %v78
  %v431 = vunpack.c.h.b16 %v78
  %v432 = vunpack.c.l.b16 %v79
  %v433 = vunpack.c.h.b16 %v79
  %v434 = vunpack.c.l.b16 %v80
  %v435 = vunpack.c.h.b16 %v80
  %v436 = vunpack.c.l.b16 %v81
  %v437 = vunpack.c.h.b16 %v81
  %v438 = vunpack.c.l.b16 %v82
  %v439 = vunpack.c.l.b16 %v83
  %v440 = vunpack.c.h.b16 %v83
  %v441 = vunpack.c.l.b16 %v84
  %v442 = vunpack.c.h.b16 %v84
  %v443 = vunpack.c.l.b16 %v85
  %v444 = vunpack.c.h.b16 %v85
  %v445 = vunpack.c.l.b16 %v86
  %v446 = vunpack.c.h.b16 %v86
  %v447 = vunpack.c.l.b16 %v87
  %v448 = vunpack.c.l.b16 %v88
  %v449 = vunpack.c.h.b16 %v88
  %v450 = vunpack.c.l.b16 %v89
  %v451 = vunpack.c.h.b16 %v89
  %v452 = vunpack.c.l.b16 %v90
  %v453 = vunpack.c.h.b16 %v90
  %v454 = vunpack.c.l.b16 %v91
  %v455 = vunpack.c.h.b16 %v91
  %v456 = vunpack.c.l.b16 %v92
  %v457 = vunpack.c.l.b16 %v93
  %v458 = vunpack.c.h.b16 %v93
  %v459 = vunpack.c.l.b16 %v94
  %v460 = vunpack.c.h.b16 %v94
  %v461 = vunpack.c.l.b16 %v95
  %v462 = vunpack.c.h.b16 %v95
  %v463 = vunpack.c.l.b16 %v96
  %v464 = vunpack.c.h.b16 %v96
  %v465 = vunpack.c.l.b16 %v97
  %v466 = vpack.c.b16 %v331, %v322
  %v467 = vpack.c.b16 %v332, %v323
  %v468 = vpack.c.b16 %v333, %v324
  %v469 = vpack.c.b16 %v334, %v325
  %v470 = vpack.c.b16 %v335, %v326
  %v471 = vpack.c.b16 %v336, %v327
  %v472 = vpack.c.b16 %v337, %v328
  %v473 = vpack.c.b16 %v338, %v329
  %v474 = vpack.c.b16 %v339, %v330
  %v475 = vpack.c.b16 %v349, %v340
  %v476 = vpack.c.b16 %v350, %v341
  %v477 = vpack.c.b16 %v351, %v342
  %v478 = vpack.c.b16 %v352, %v343
  %v479 = vpack.c.b16 %v353, %v344
  %v480 = vpack.c.b16 %v354, %v345
  %v481 = vpack.c.b16 %v355, %v346
  %v482 = vpack.c.b16 %v356, %v347
  %v483 = vpack.c.b16 %v357, %v348
  %v484 = vpack.c.b16 %v367, %v358
  %v485 = vpack.c.b16 %v368, %v359
  %v486 = vpack.c.b16 %v369, %v360
  %v487 = vpack.c.b16 %v370, %v361
  %v488 = vpack.c.b16 %v371, %v362
  %v489 = vpack.c.b16 %v372, %v363
  %v490 = vpack.c.b16 %v373, %v364
  %v491 = vpack.c.b16 %v374, %v365
  %v492 = vpack.c.b16 %v375, %v366
  %v493 = vpack.c.b16 %v385, %v376
  %v494 = vpack.c.b16 %v386, %v377
  %v495 = vpack.c.b16 %v387, %v378
  %v496 = vpack.c.b16 %v388, %v379
  %v497 = vpack.c.b16 %v389, %v380
  %v498 = vpack.c.b16 %v390, %v381
  %v499 = vpack.c.b16 %v391, %v382
  %v500 = vpack.c.b16 %v392, %v383
  %v501 = vpack.c.b16 %v393, %v384
  %v502 = vpack.c.b16 %v403, %v394
  %v503 = vpack.c.b16 %v404, %v395
  %v504 = vpack.c.b16 %v405, %v396
  %v505 = vpack.c.b16 %v406, %v397
  %v506 = vpack.c.b16 %v407, %v398
  %v507 = vpack.c.b16 %v408, %v399
  %v508 = vpack.c.b16 %v409, %v400
  %v509 = vpack.c.b16 %v410, %v401
  %v510 = vpack.c.b16 %v411, %v402
  %v511 = vpack.c.b16 %v421, %v412
  %v512 = vpack.c.b16 %v422, %v413
  %v513 = vpack.c.b16 %v423, %v414
  %v514 = vpack.c.b16 %v424, %v415
  %v515 = vpack.c.b16 %v425, %v416
  %v516 = vpack.c.b16 %v426, %v417
  %v517 = vpack.c.b16 %v427, %v418
  %v518 = vpack.c.b16 %v428, %v419
  %v519 = vpack.c.b16 %v429, %v420
  %v520 = vpack.c.b16 %v439, %v430
  %v521 = vpack.c.b16 %v440, %v431
  %v522 = vpack.c.b16 %v441, %v432
  %v523 = vpack.c.b16 %v442, %v433
  %v524 = vpack.c.b16 %v443, %v434
  %v525 = vpack.c.b16 %v444, %v435
  %v526 = vpack.c.b16 %v445, %v436
  %v527 = vpack.c.b16 %v446, %v437
  %v528 = vpack.c.b16 %v447, %v438
  %v529 = vpack.c.b16 %v457, %v448
  %v530 = vpack.c.b16 %v458, %v449
  %v531 = vpack.c.b16 %v459, %v450
  %v532 = vpack.c.b16 %v460, %v451
  %v533 = vpack.c.b16 %v461, %v452
  %v534 = vpack.c.b16 %v462, %v453
  %v535 = vpack.c.b16 %v463, %v454
  %v536 = vpack.c.b16 %v464, %v455
  %v537 = vpack.c.b16 %v465, %v456
  %v754 = vunpack.c.l.b16 %v98
  %v755 = vunpack.c.l.b16 %v99
  %v756 = vunpack.c.l.b16 %v100
  %v757 = vunpack.c.l.b16 %v101
  %v758 = vunpack.c.l.b16 %v102
  %v759 = vunpack.c.l.b16 %v103
  %v760 = vunpack.c.l.b16 %v104
  %v761 = vunpack.c.l.b16 %v105
  %v762 = vunpack.c.l.b16 %v106
  %v763 = vunpack.c.l.b16 %v107
  %v764 = vunpack.c.l.b16 %v108
  %v765 = vunpack.c.l.b16 %v109
  %v766 = vunpack.c.l.b16 %v110
  %v767 = vunpack.c.l.b16 %v111
  %v768 = vunpack.c.l.b16 %v112
  %v769 = vunpack.c.l.b16 %v113
  %v770 = vunpack.c.l.b16 %v114
  %v771 = vunpack.c.l.b16 %v115
  %v772 = vunpack.c.l.b16 %v116
  %v773 = vunpack.c.l.b16 %v117
  %v774 = vunpack.c.l.b16 %v118
  %v775 = vunpack.c.l.b16 %v119
  %v776 = vunpack.c.l.b16 %v120
  %v777 = vunpack.c.l.b16 %v121
  %v778 = vunpack.c.l.b16 %v122
  %v779 = vunpack.c.l.b16 %v123
  %v780 = vunpack.c.l.b16 %v124
  %v781 = vunpack.c.l.b16 %v125
  %v782 = vunpack.c.l.b16 %v126
  %v783 = vunpack.c.l.b16 %v127
  %v784 = vunpack.c.l.b16 %v128
  %v785 = vunpack.c.l.b16 %v129
  %v786 = vunpack.c.l.b16 %v130
  %v787 = vunpack.c.l.b16 %v131
  %v788 = vunpack.c.l.b16 %v132
  %v789 = vunpack.c.l.b16 %v133
  %v790 = vunpack.c.l.b16 %v134
  %v791 = vunpack.c.l.b16 %v135
  %v792 = vunpack.c.l.b16 %v136
  %v793 = vunpack.c.l.b16 %v137
  %v794 = vunpack.c.l.b16 %v138
  %v795 = vunpack.c.l.b16 %v139
  %v796 = vunpack.c.l.b16 %v140
  %v797 = vunpack.c.l.b16 %v141
  %v798 = vunpack.c.l.b16 %v142
  %v799 = vunpack.c.l.b16 %v143
  %v800 = vunpack.c.l.b16 %v144
  %v801 = vunpack.c.l.b16 %v145
  %v802 = vunpack.c.l.b16 %v146
  %v803 = vunpack.c.l.b16 %v147
  %v804 = vunpack.c.l.b16 %v148
  %v805 = vunpack.c.l.b16 %v149
  %v806 = vunpack.c.l.b16 %v150
  %v807 = vunpack.c.l.b16 %v151
  %v808 = vunpack.c.l.b16 %v152
  %v809 = vunpack.c.l.b16 %v153
  %v810 = vunpack.c.l.b16 %v154
  %v811 = vunpack.c.l.b16 %v155
  %v812 = vunpack.c.l.b16 %v156
  %v813 = vunpack.c.l.b16 %v157
  %v814 = vunpack.c.l.b16 %v158
  %v815 = vunpack.c.l.b16 %v159
  %v816 = vunpack.c.l.b16 %v160
  %v817 = vunpack.c.l.b16 %v161
  %v818 = vunpack.c.l.b16 %v162
  %v819 = vunpack.c.l.b16 %v163
  %v820 = vunpack.c.l.b16 %v164
  %v821 = vunpack.c.l.b16 %v165
  %v822 = vunpack.c.l.b16 %v166
  %v823 = vunpack.c.l.b16 %v167
  %v824 = vunpack.c.l.b16 %v168
  %v825 = vunpack.c.l.b16 %v169
  %v826 = vunpack.c.l.b16 %v170
  %v827 = vunpack.c.l.b16 %v171
  %v828 = vunpack.c.l.b16 %v172
  %v829 = vunpack.c.l.b16 %v173
  %v830 = vunpack.c.l.b16 %v174
  %v831 = vunpack.c.l.b16 %v175
  %v832 = vunpack.c.l.b16 %v176
  %v833 = vunpack.c.l.b16 %v177
  %v834 = vunpack.c.l.b16 %v178
  %v835 = vunpack.c.l.b16 %v179
  %v836 = vunpack.c.l.b16 %v180
  %v837 = vunpack.c.l.b16 %v181
  %v838 = vunpack.c.l.b16 %v182
  %v839 = vunpack.c.l.b16 %v183
  %v840 = vunpack.c.l.b16 %v184
  %v841 = vunpack.c.l.b16 %v185
  %v842 = vunpack.c.l.b16 %v186
  %v843 = vunpack.c.l.b16 %v187
  %v844 = vunpack.c.l.b16 %v188
  %v845 = vunpack.c.l.b16 %v189
  %v846 = vunpack.c.l.b16 %v190
  %v847 = vunpack.c.l.b16 %v191
  %v848 = vunpack.c.l.b16 %v192
  %v849 = vunpack.c.l.b16 %v193
  %v850 = vunpack.c.l.b16 %v194
  %v851 = vunpack.c.l.b16 %v195
  %v852 = vunpack.c.l.b16 %v196
  %v853 = vunpack.c.l.b16 %v197
  %v854 = vunpack.c.l.b16 %v198
  %v855 = vunpack.c.l.b16 %v199
  %v856 = vunpack.c.l.b16 %v200
  %v857 = vunpack.c.l.b16 %v201
  %v858 = vunpack.c.l.b16 %v202
  %v859 = vunpack.c.l.b16 %v203
  %v860 = vunpack.c.l.b16 %v204
  %v861 = vunpack.c.l.b16 %v205
  %v862 = vunpack.c.l.b16 %v206
  %v863 = vunpack.c.l.b16 %v207
  %v864 = vunpack.c.l.b16 %v208
  %v865 = vunpack.c.l.b16 %v209
  %v866 = vunpack.c.l.b16 %v210
  %v867 = vunpack.c.l.b16 %v211
  %v868 = vunpack.c.l.b16 %v212
  %v869 = vunpack.c.l.b16 %v213
  %v870 = vunpack.c.l.b16 %v214
  %v871 = vunpack.c.l.b16 %v215
  %v872 = vunpack.c.l.b16 %v216
  %v873 = vunpack.c.l.b16 %v217
  %v874 = vunpack.c.l.b16 %v218
  %v875 = vunpack.c.l.b16 %v219
  %v876 = vunpack.c.l.b16 %v220
  %v877 = vunpack.c.l.b16 %v221
  %v878 = vunpack.c.l.b16 %v222
  %v879 = vunpack.c.l.b16 %v223
  %v880 = vunpack.c.l.b16 %v224
  %v881 = vunpack.c.l.b16 %v225
  %v882 = vunpack.c.l.b16 %v226
  %v883 = vunpack.c.l.b16 %v227
  %v884 = vunpack.c.l.b16 %v228
  %v885 = vunpack.c.l.b16 %v229
  %v886 = vunpack.c.l.b16 %v230
  %v887 = vunpack.c.l.b16 %v231
  %v888 = vunpack.c.l.b16 %v232
  %v889 = vunpack.c.l.b16 %v233
  %v890 = vunpack.c.l.b16 %v234
  %v891 = vunpack.c.l.b16 %v235
  %v892 = vunpack.c.l.b16 %v236
  %v893 = vunpack.c.l.b16 %v237
  %v894 = vunpack.c.l.b16 %v238
  %v895 = vunpack.c.l.b16 %v239
  %v896 = vunpack.c.l.b16 %v240
  %v897 = vunpack.c.l.b16 %v241
  %v898 = vpack.c.b16 %v755, %v754
  %v899 = vpack.c.b16 %v757, %v756
  %v900 = vpack.c.b16 %v759, %v758
  %v901 = vpack.c.b16 %v761, %v760
  %v902 = vpack.c.b16 %v763, %v762
  %v903 = vpack.c.b16 %v765, %v764
  %v904 = vpack.c.b16 %v767, %v766
  %v905 = vpack.c.b16 %v769, %v768
  %v906 = vpack.c.b16 %v771, %v770
  %v907 = vpack.c.b16 %v773, %v772
  %v908 = vpack.c.b16 %v775, %v774
  %v909 = vpack.c.b16 %v777, %v776
  %v910 = vpack.c.b16 %v779, %v778
  %v911 = vpack.c.b16 %v781, %v780
  %v912 = vpack.c.b16 %v783, %v782
  %v913 = vpack.c.b16 %v785, %v784
  %v914 = vpack.c.b16 %v787, %v786
  %v915 = vpack.c.b16 %v789, %v788
  %v916 = vpack.c.b16 %v791, %v790
  %v917 = vpack.c.b16 %v793, %v792
  %v918 = vpack.c.b16 %v795, %v794
  %v919 = vpack.c.b16 %v797, %v796
  %v920 = vpack.c.b16 %v799, %v798
  %v921 = vpack.c.b16 %v801, %v800
  %v922 = vpack.c.b16 %v803, %v802
  %v923 = vpack.c.b16 %v805, %v804
  %v924 = vpack.c.b16 %v807, %v806
  %v925 = vpack.c.b16 %v809, %v808
  %v926 = vpack.c.b16 %v811, %v810
  %v927 = vpack.c.b16 %v813, %v812
  %v928 = vpack.c.b16 %v815, %v814
  %v929 = vpack.c.b16 %v817, %v816
  %v930 = vpack.c.b16 %v819, %v818
  %v931 = vpack.c.b16 %v821, %v820
  %v932 = vpack.c.b16 %v823, %v822
  %v933 = vpack.c.b16 %v825, %v824
  %v934 = vpack.c.b16 %v827, %v826
  %v935 = vpack.c.b16 %v829, %v828
  %v936 = vpack.c.b16 %v831, %v830
  %v937 = vpack.c.b16 %v833, %v832
  %v938 = vpack.c.b16 %v835, %v834
  %v939 = vpack.c.b16 %v837, %v836
  %v940 = vpack.c.b16 %v839, %v838
  %v941 = vpack.c.b16 %v841, %v840
  %v942 = vpack.c.b16 %v843, %v842
  %v943 = vpack.c.b16 %v845, %v844
  %v944 = vpack.c.b16 %v847, %v846
  %v945 = vpack.c.b16 %v849, %v848
  %v946 = vpack.c.b16 %v851, %v850
  %v947 = vpack.c.b16 %v853, %v852
  %v948 = vpack.c.b16 %v855, %v854
  %v949 = vpack.c.b16 %v857, %v856
  %v950 = vpack.c.b16 %v859, %v858
  %v951 = vpack.c.b16 %v861, %v860
  %v952 = vpack.c.b16 %v863, %v862
  %v953 = vpack.c.b16 %v865, %v864
  %v954 = vpack.c.b16 %v867, %v866
  %v955 = vpack.c.b16 %v869, %v868
  %v956 = vpack.c.b16 %v871, %v870
  %v957 = vpack.c.b16 %v873, %v872
  %v958 = vpack.c.b16 %v875, %v874
  %v959 = vpack.c.b16 %v877, %v876
  %v960 = vpack.c.b16 %v879, %v878
  %v961 = vpack.c.b16 %v881, %v880
  %v962 = vpack.c.b16 %v883, %v882
  %v963 = vpack.c.b16 %v885, %v884
  %v964 = vpack.c.b16 %v887, %v886
  %v965 = vpack.c.b16 %v889, %v888
  %v966 = vpack.c.b16 %v891, %v890
  %v967 = vpack.c.b16 %v893, %v892
  %v968 = vpack.c.b16 %v895, %v894
  %v969 = vpack.c.b16 %v897, %v896
  %1042 = vmatprep.subr.bf16.mxu0 0
  %1043 = vmatpush1.bf16.msra.mxu0 %v898
  %1044 = vmatprep.subr.bf16.mxu0 0
  %1045 = vmatpush1.bf16.msra.mxu0 %v899
  %1046 = vmatprep.subr.bf16.mxu0 0
  %1047 = vmatpush1.bf16.msra.mxu0 %v900
  %1048 = vmatprep.subr.bf16.mxu0 0
  %1049 = vmatpush1.bf16.msra.mxu0 %v901
  %1050 = vmatprep.subr.bf16.mxu0 0
  %1051 = vmatpush1.bf16.msra.mxu0 %v902
  %1052 = vmatprep.subr.bf16.mxu0 0
  %1053 = vmatpush1.bf16.msra.mxu0 %v903
  %1054 = vmatprep.subr.bf16.mxu0 0
  %1055 = vmatpush1.bf16.msra.mxu0 %v904
  %1056 = vmatprep.subr.bf16.mxu0 0
  %1057 = vmatpush1.bf16.msra.mxu0 %v905
  %1058 = vmatprep.subr.bf16.mxu0 0
  %1059 = vmatpush1.bf16.msra.mxu0 %v906
  %1060 = vmatprep.subr.bf16.mxu0 0
  %1061 = vmatpush1.bf16.msra.mxu0 %v907
  %1062 = vmatprep.subr.bf16.mxu0 0
  %1063 = vmatpush1.bf16.msra.mxu0 %v908
  %1064 = vmatprep.subr.bf16.mxu0 0
  %1065 = vmatpush1.bf16.msra.mxu0 %v909
  %1066 = vmatprep.subr.bf16.mxu0 0
  %1067 = vmatpush1.bf16.msra.mxu0 %v910
  %1068 = vmatprep.subr.bf16.mxu0 0
  %1069 = vmatpush1.bf16.msra.mxu0 %v911
  %1070 = vmatprep.subr.bf16.mxu0 0
  %1071 = vmatpush1.bf16.msra.mxu0 %v912
  %1072 = vmatprep.subr.bf16.mxu0 0
  %1073 = vmatpush1.bf16.msra.mxu0 %v913
  %1074 = vmatprep.mubr.bf16.mxu0 %v467
  %1075 = vmatmul.mubr.bf16.gmra.mrb[0].mxu0 %v466
  %v1076 = vpop.f32.mrb[0].mxu0
  %v1077 = vadd.f32 0.0, %v1076
  %v1078 = vpop.f32.mrb[0].mxu0
  %v1079 = vpop.f32.mrb[0].mxu0
  %v1080 = vadd.f32 0.0, %v1079
  %v1081 = vpop.f32.mrb[0].mxu0
  %1082 = vmatprep.mubr.bf16.mxu0 %v476
  %1083 = vmatmul.mubr.bf16.gmra.mrb[0].mxu0 %v475
  %v1084 = vpop.f32.mrb[0].mxu0
  %v1085 = vadd.f32 0.0, %v1084
  %v1086 = vpop.f32.mrb[0].mxu0
  %v1087 = vpop.f32.mrb[0].mxu0
  %v1088 = vadd.f32 0.0, %v1087
  %v1089 = vpop.f32.mrb[0].mxu0
  %1090 = vmatprep.mubr.bf16.mxu0 %v485
  %1091 = vmatmul.mubr.bf16.gmra.mrb[0].mxu0 %v484
  %v1092 = vpop.f32.mrb[0].mxu0
  %v1093 = vadd.f32 0.0, %v1092
  %v1094 = vpop.f32.mrb[0].mxu0
  %v1095 = vpop.f32.mrb[0].mxu0
  %v1096 = vadd.f32 0.0, %v1095
  %v1097 = vpop.f32.mrb[0].mxu0
  %1098 = vmatprep.mubr.bf16.mxu0 %v494
  %1099 = vmatmul.mubr.bf16.gmra.mrb[0].mxu0 %v493
  %v1100 = vpop.f32.mrb[0].mxu0
  %v1101 = vadd.f32 0.0, %v1100
  %v1102 = vpop.f32.mrb[0].mxu0
  %v1103 = vpop.f32.mrb[0].mxu0
  %v1104 = vadd.f32 0.0, %v1103
  %v1105 = vpop.f32.mrb[0].mxu0
  %1106 = vmatprep.mubr.bf16.mxu0 %v503
  %1107 = vmatmul.mubr.bf16.gmra.mrb[0].mxu0 %v502
  %v1108 = vpop.f32.mrb[0].mxu0
  %v1109 = vadd.f32 0.0, %v1108
  %v1110 = vpop.f32.mrb[0].mxu0
  %v1111 = vpop.f32.mrb[0].mxu0
  %v1112 = vadd.f32 0.0, %v1111
  %v1113 = vpop.f32.mrb[0].mxu0
  %1114 = vmatprep.mubr.bf16.mxu0 %v512
  %1115 = vmatmul.mubr.bf16.gmra.mrb[0].mxu0 %v511
  %v1116 = vpop.f32.mrb[0].mxu0
  %v1117 = vadd.f32 0.0, %v1116
  %v1118 = vpop.f32.mrb[0].mxu0
  %v1119 = vpop.f32.mrb[0].mxu0
  %v1120 = vadd.f32 0.0, %v1119
  %v1121 = vpop.f32.mrb[0].mxu0
  %1122 = vmatprep.mubr.bf16.mxu0 %v521
  %1123 = vmatmul.mubr.bf16.gmra.mrb[0].mxu0 %v520
  %v1124 = vpop.f32.mrb[0].mxu0
  %v1125 = vadd.f32 0.0, %v1124
  %v1126 = vpop.f32.mrb[0].mxu0
  %v1127 = vpop.f32.mrb[0].mxu0
  %v1128 = vadd.f32 0.0, %v1127
  %v1129 = vpop.f32.mrb[0].mxu0
  %1130 = vmatprep.mubr.bf16.mxu0 %v530
  %1131 = vmatmul.mubr.bf16.gmra.mrb[0].mxu0 %v529
  %v1132 = vpop.f32.mrb[0].mxu0
  %v1133 = vadd.f32 0.0, %v1132
  %v1134 = vpop.f32.mrb[0].mxu0
  %v1135 = vpop.f32.mrb[0].mxu0
  %v1136 = vadd.f32 0.0, %v1135
  %v1137 = vpop.f32.mrb[0].mxu0
  %1138 = vdwg.mxu0
  %1139 = vmatprep.subr.bf16.mxu0 0
  %1140 = vmatpush1.bf16.msra.mxu0 %v914
  %1141 = vmatprep.subr.bf16.mxu0 0
  %1142 = vmatpush1.bf16.msra.mxu0 %v915
  %1143 = vmatprep.subr.bf16.mxu0 0
  %1144 = vmatpush1.bf16.msra.mxu0 %v916
  %1145 = vmatprep.subr.bf16.mxu0 0
  %1146 = vmatpush1.bf16.msra.mxu0 %v917
  %1147 = vmatprep.subr.bf16.mxu0 0
  %1148 = vmatpush1.bf16.msra.mxu0 %v918
  %1149 = vmatprep.subr.bf16.mxu0 0
  %1150 = vmatpush1.bf16.msra.mxu0 %v919
  %1151 = vmatprep.subr.bf16.mxu0 0
  %1152 = vmatpush1.bf16.msra.mxu0 %v920
  %1153 = vmatprep.subr.bf16.mxu0 0
  %1154 = vmatpush1.bf16.msra.mxu0 %v921
  %1155 = vmatprep.subr.bf16.mxu0 0
  %1156 = vmatpush1.bf16.msra.mxu0 %v922
  %1157 = vmatprep.subr.bf16.mxu0 0
  %1158 = vmatpush1.bf16.msra.mxu0 %v923
  %1159 = vmatprep.subr.bf16.mxu0 0
  %1160 = vmatpush1.bf16.msra.mxu0 %v924
  %1161 = vmatprep.subr.bf16.mxu0 0
  %1162 = vmatpush1.bf16.msra.mxu0 %v925
  %1163 = vmatprep.subr.bf16.mxu0 0
  %1164 = vmatpush1.bf16.msra.mxu0 %v926
  %1165 = vmatprep.subr.bf16.mxu0 0
  %1166 = vmatpush1.bf16.msra.mxu0 %v927
  %1167 = vmatprep.subr.bf16.mxu0 0
  %1168 = vmatpush1.bf16.msra.mxu0 %v928
  %1169 = vmatprep.subr.bf16.mxu0 0
  %1170 = vmatpush1.bf16.msra.mxu0 %v929
  %1171 = vmatprep.mubr.bf16.mxu0 %v469
  %1172 = vmatmul.mubr.bf16.gmra.mrb[0].mxu0 %v468
  %v1173 = vpop.f32.mrb[0].mxu0
  %v1174 = vadd.f32 %v1077, %v1173
  %v1175 = vpop.f32.mrb[0].mxu0
  %v1176 = vpop.f32.mrb[0].mxu0
  %v1177 = vadd.f32 %v1080, %v1176
  %v1178 = vpop.f32.mrb[0].mxu0
  %1179 = vmatprep.mubr.bf16.mxu0 %v478
  %1180 = vmatmul.mubr.bf16.gmra.mrb[0].mxu0 %v477
  %v1181 = vpop.f32.mrb[0].mxu0
  %v1182 = vadd.f32 %v1085, %v1181
  %v1183 = vpop.f32.mrb[0].mxu0
  %v1184 = vpop.f32.mrb[0].mxu0
  %v1185 = vadd.f32 %v1088, %v1184
  %v1186 = vpop.f32.mrb[0].mxu0
  %1187 = vmatprep.mubr.bf16.mxu0 %v487
  %1188 = vmatmul.mubr.bf16.gmra.mrb[0].mxu0 %v486
  %v1189 = vpop.f32.mrb[0].mxu0
  %v1190 = vadd.f32 %v1093, %v1189
  %v1191 = vpop.f32.mrb[0].mxu0
  %v1192 = vpop.f32.mrb[0].mxu0
  %v1193 = vadd.f32 %v1096, %v1192
  %v1194 = vpop.f32.mrb[0].mxu0
  %1195 = vmatprep.mubr.bf16.mxu0 %v496
  %1196 = vmatmul.mubr.bf16.gmra.mrb[0].mxu0 %v495
  %v1197 = vpop.f32.mrb[0].mxu0
  %v1198 = vadd.f32 %v1101, %v1197
  %v1199 = vpop.f32.mrb[0].mxu0
  %v1200 = vpop.f32.mrb[0].mxu0
  %v1201 = vadd.f32 %v1104, %v1200
  %v1202 = vpop.f32.mrb[0].mxu0
  %1203 = vmatprep.mubr.bf16.mxu0 %v505
  %1204 = vmatmul.mubr.bf16.gmra.mrb[0].mxu0 %v504
  %v1205 = vpop.f32.mrb[0].mxu0
  %v1206 = vadd.f32 %v1109, %v1205
  %v1207 = vpop.f32.mrb[0].mxu0
  %v1208 = vpop.f32.mrb[0].mxu0
  %v1209 = vadd.f32 %v1112, %v1208
  %v1210 = vpop.f32.mrb[0].mxu0
  %1211 = vmatprep.mubr.bf16.mxu0 %v514
  %1212 = vmatmul.mubr.bf16.gmra.mrb[0].mxu0 %v513
  %v1213 = vpop.f32.mrb[0].mxu0
  %v1214 = vadd.f32 %v1117, %v1213
  %v1215 = vpop.f32.mrb[0].mxu0
  %v1216 = vpop.f32.mrb[0].mxu0
  %v1217 = vadd.f32 %v1120, %v1216
  %v1218 = vpop.f32.mrb[0].mxu0
  %1219 = vmatprep.mubr.bf16.mxu0 %v523
  %1220 = vmatmul.mubr.bf16.gmra.mrb[0].mxu0 %v522
  %v1221 = vpop.f32.mrb[0].mxu0
  %v1222 = vadd.f32 %v1125, %v1221
  %v1223 = vpop.f32.mrb[0].mxu0
  %v1224 = vpop.f32.mrb[0].mxu0
  %v1225 = vadd.f32 %v1128, %v1224
  %v1226 = vpop.f32.mrb[0].mxu0
  %1227 = vmatprep.mubr.bf16.mxu0 %v532
  %1228 = vmatmul.mubr.bf16.gmra.mrb[0].mxu0 %v531
  %v1229 = vpop.f32.mrb[0].mxu0
  %v1230 = vadd.f32 %v1133, %v1229
  %v1231 = vpop.f32.mrb[0].mxu0
  %v1232 = vpop.f32.mrb[0].mxu0
  %v1233 = vadd.f32 %v1136, %v1232
  %v1234 = vpop.f32.mrb[0].mxu0
  %1235 = vdwg.mxu0
  %1236 = vmatprep.subr.bf16.mxu0 0
  %1237 = vmatpush1.bf16.msra.mxu0 %v930
  %1238 = vmatprep.subr.bf16.mxu0 0
  %1239 = vmatpush1.bf16.msra.mxu0 %v931
  %1240 = vmatprep.subr.bf16.mxu0 0
  %1241 = vmatpush1.bf16.msra.mxu0 %v932
  %1242 = vmatprep.subr.bf16.mxu0 0
  %1243 = vmatpush1.bf16.msra.mxu0 %v933
  %1244 = vmatprep.subr.bf16.mxu0 0
  %1245 = vmatpush1.bf16.msra.mxu0 %v934
  %1246 = vmatprep.subr.bf16.mxu0 0
  %1247 = vmatpush1.bf16.msra.mxu0 %v935
  %1248 = vmatprep.subr.bf16.mxu0 0
  %1249 = vmatpush1.bf16.msra.mxu0 %v936
  %1250 = vmatprep.subr.bf16.mxu0 0
  %1251 = vmatpush1.bf16.msra.mxu0 %v937
  %1252 = vmatprep.subr.bf16.mxu0 0
  %1253 = vmatpush1.bf16.msra.mxu0 %v938
  %1254 = vmatprep.subr.bf16.mxu0 0
  %1255 = vmatpush1.bf16.msra.mxu0 %v939
  %1256 = vmatprep.subr.bf16.mxu0 0
  %1257 = vmatpush1.bf16.msra.mxu0 %v940
  %1258 = vmatprep.subr.bf16.mxu0 0
  %1259 = vmatpush1.bf16.msra.mxu0 %v941
  %1260 = vmatprep.subr.bf16.mxu0 0
  %1261 = vmatpush1.bf16.msra.mxu0 %v942
  %1262 = vmatprep.subr.bf16.mxu0 0
  %1263 = vmatpush1.bf16.msra.mxu0 %v943
  %1264 = vmatprep.subr.bf16.mxu0 0
  %1265 = vmatpush1.bf16.msra.mxu0 %v944
  %1266 = vmatprep.subr.bf16.mxu0 0
  %1267 = vmatpush1.bf16.msra.mxu0 %v945
  %1268 = vmatprep.mubr.bf16.mxu0 %v471
  %1269 = vmatmul.mubr.bf16.gmra.mrb[0].mxu0 %v470
  %v1270 = vpop.f32.mrb[0].mxu0
  %v1271 = vadd.f32 %v1174, %v1270
  %v1272 = vpop.f32.mrb[0].mxu0
  %v1273 = vpop.f32.mrb[0].mxu0
  %v1274 = vadd.f32 %v1177, %v1273
  %v1275 = vpop.f32.mrb[0].mxu0
  %1276 = vmatprep.mubr.bf16.mxu0 %v480
  %1277 = vmatmul.mubr.bf16.gmra.mrb[0].mxu0 %v479
  %v1278 = vpop.f32.mrb[0].mxu0
  %v1279 = vadd.f32 %v1182, %v1278
  %v1280 = vpop.f32.mrb[0].mxu0
  %v1281 = vpop.f32.mrb[0].mxu0
  %v1282 = vadd.f32 %v1185, %v1281
  %v1283 = vpop.f32.mrb[0].mxu0
  %1284 = vmatprep.mubr.bf16.mxu0 %v489
  %1285 = vmatmul.mubr.bf16.gmra.mrb[0].mxu0 %v488
  %v1286 = vpop.f32.mrb[0].mxu0
  %v1287 = vadd.f32 %v1190, %v1286
  %v1288 = vpop.f32.mrb[0].mxu0
  %v1289 = vpop.f32.mrb[0].mxu0
  %v1290 = vadd.f32 %v1193, %v1289
  %v1291 = vpop.f32.mrb[0].mxu0
  %1292 = vmatprep.mubr.bf16.mxu0 %v498
  %1293 = vmatmul.mubr.bf16.gmra.mrb[0].mxu0 %v497
  %v1294 = vpop.f32.mrb[0].mxu0
  %v1295 = vadd.f32 %v1198, %v1294
  %v1296 = vpop.f32.mrb[0].mxu0
  %v1297 = vpop.f32.mrb[0].mxu0
  %v1298 = vadd.f32 %v1201, %v1297
  %v1299 = vpop.f32.mrb[0].mxu0
  %1300 = vmatprep.mubr.bf16.mxu0 %v507
  %1301 = vmatmul.mubr.bf16.gmra.mrb[0].mxu0 %v506
  %v1302 = vpop.f32.mrb[0].mxu0
  %v1303 = vadd.f32 %v1206, %v1302
  %v1304 = vpop.f32.mrb[0].mxu0
  %v1305 = vpop.f32.mrb[0].mxu0
  %v1306 = vadd.f32 %v1209, %v1305
  %v1307 = vpop.f32.mrb[0].mxu0
  %1308 = vmatprep.mubr.bf16.mxu0 %v516
  %1309 = vmatmul.mubr.bf16.gmra.mrb[0].mxu0 %v515
  %v1310 = vpop.f32.mrb[0].mxu0
  %v1311 = vadd.f32 %v1214, %v1310
  %v1312 = vpop.f32.mrb[0].mxu0
  %v1313 = vpop.f32.mrb[0].mxu0
  %v1314 = vadd.f32 %v1217, %v1313
  %v1315 = vpop.f32.mrb[0].mxu0
  %1316 = vmatprep.mubr.bf16.mxu0 %v525
  %1317 = vmatmul.mubr.bf16.gmra.mrb[0].mxu0 %v524
  %v1318 = vpop.f32.mrb[0].mxu0
  %v1319 = vadd.f32 %v1222, %v1318
  %v1320 = vpop.f32.mrb[0].mxu0
  %v1321 = vpop.f32.mrb[0].mxu0
  %v1322 = vadd.f32 %v1225, %v1321
  %v1323 = vpop.f32.mrb[0].mxu0
  %1324 = vmatprep.mubr.bf16.mxu0 %v534
  %1325 = vmatmul.mubr.bf16.gmra.mrb[0].mxu0 %v533
  %v1326 = vpop.f32.mrb[0].mxu0
  %v1327 = vadd.f32 %v1230, %v1326
  %v1328 = vpop.f32.mrb[0].mxu0
  %v1329 = vpop.f32.mrb[0].mxu0
  %v1330 = vadd.f32 %v1233, %v1329
  %v1331 = vpop.f32.mrb[0].mxu0
  %1332 = vdwg.mxu0
  %1333 = vmatprep.subr.bf16.mxu0 0
  %1334 = vmatpush1.bf16.msra.mxu0 %v946
  %1335 = vmatprep.subr.bf16.mxu0 0
  %1336 = vmatpush1.bf16.msra.mxu0 %v947
  %1337 = vmatprep.subr.bf16.mxu0 0
  %1338 = vmatpush1.bf16.msra.mxu0 %v948
  %1339 = vmatprep.subr.bf16.mxu0 0
  %1340 = vmatpush1.bf16.msra.mxu0 %v949
  %1341 = vmatprep.subr.bf16.mxu0 0
  %1342 = vmatpush1.bf16.msra.mxu0 %v950
  %1343 = vmatprep.subr.bf16.mxu0 0
  %1344 = vmatpush1.bf16.msra.mxu0 %v951
  %1345 = vmatprep.subr.bf16.mxu0 0
  %1346 = vmatpush1.bf16.msra.mxu0 %v952
  %1347 = vmatprep.subr.bf16.mxu0 0
  %1348 = vmatpush1.bf16.msra.mxu0 %v953
  %1349 = vmatprep.subr.bf16.mxu0 0
  %1350 = vmatpush1.bf16.msra.mxu0 %v954
  %1351 = vmatprep.subr.bf16.mxu0 0
  %1352 = vmatpush1.bf16.msra.mxu0 %v955
  %1353 = vmatprep.subr.bf16.mxu0 0
  %1354 = vmatpush1.bf16.msra.mxu0 %v956
  %1355 = vmatprep.subr.bf16.mxu0 0
  %1356 = vmatpush1.bf16.msra.mxu0 %v957
  %1357 = vmatprep.subr.bf16.mxu0 0
  %1358 = vmatpush1.bf16.msra.mxu0 %v958
  %1359 = vmatprep.subr.bf16.mxu0 0
  %1360 = vmatpush1.bf16.msra.mxu0 %v959
  %1361 = vmatprep.subr.bf16.mxu0 0
  %1362 = vmatpush1.bf16.msra.mxu0 %v960
  %1363 = vmatprep.subr.bf16.mxu0 0
  %1364 = vmatpush1.bf16.msra.mxu0 %v961
  %1365 = vmatprep.mubr.bf16.mxu0 %v473
  %1366 = vmatmul.mubr.bf16.gmra.mrb[0].mxu0 %v472
  %v1367 = vpop.f32.mrb[0].mxu0
  %v1368 = vadd.f32 %v1271, %v1367
  %v1369 = vpop.f32.mrb[0].mxu0
  %v1370 = vpop.f32.mrb[0].mxu0
  %v1371 = vadd.f32 %v1274, %v1370
  %v1372 = vpop.f32.mrb[0].mxu0
  %1373 = vmatprep.mubr.bf16.mxu0 %v482
  %1374 = vmatmul.mubr.bf16.gmra.mrb[0].mxu0 %v481
  %v1375 = vpop.f32.mrb[0].mxu0
  %v1376 = vadd.f32 %v1279, %v1375
  %v1377 = vpop.f32.mrb[0].mxu0
  %v1378 = vpop.f32.mrb[0].mxu0
  %v1379 = vadd.f32 %v1282, %v1378
  %v1380 = vpop.f32.mrb[0].mxu0
  %1381 = vmatprep.mubr.bf16.mxu0 %v491
  %1382 = vmatmul.mubr.bf16.gmra.mrb[0].mxu0 %v490
  %v1383 = vpop.f32.mrb[0].mxu0
  %v1384 = vadd.f32 %v1287, %v1383
  %v1385 = vpop.f32.mrb[0].mxu0
  %v1386 = vpop.f32.mrb[0].mxu0
  %v1387 = vadd.f32 %v1290, %v1386
  %v1388 = vpop.f32.mrb[0].mxu0
  %1389 = vmatprep.mubr.bf16.mxu0 %v500
  %1390 = vmatmul.mubr.bf16.gmra.mrb[0].mxu0 %v499
  %v1391 = vpop.f32.mrb[0].mxu0
  %v1392 = vadd.f32 %v1295, %v1391
  %v1393 = vpop.f32.mrb[0].mxu0
  %v1394 = vpop.f32.mrb[0].mxu0
  %v1395 = vadd.f32 %v1298, %v1394
  %v1396 = vpop.f32.mrb[0].mxu0
  %1397 = vmatprep.mubr.bf16.mxu0 %v509
  %1398 = vmatmul.mubr.bf16.gmra.mrb[0].mxu0 %v508
  %v1399 = vpop.f32.mrb[0].mxu0
  %v1400 = vadd.f32 %v1303, %v1399
  %v1401 = vpop.f32.mrb[0].mxu0
  %v1402 = vpop.f32.mrb[0].mxu0
  %v1403 = vadd.f32 %v1306, %v1402
  %v1404 = vpop.f32.mrb[0].mxu0
  %1405 = vmatprep.mubr.bf16.mxu0 %v518
  %1406 = vmatmul.mubr.bf16.gmra.mrb[0].mxu0 %v517
  %v1407 = vpop.f32.mrb[0].mxu0
  %v1408 = vadd.f32 %v1311, %v1407
  %v1409 = vpop.f32.mrb[0].mxu0
  %v1410 = vpop.f32.mrb[0].mxu0
  %v1411 = vadd.f32 %v1314, %v1410
  %v1412 = vpop.f32.mrb[0].mxu0
  %1413 = vmatprep.mubr.bf16.mxu0 %v527
  %1414 = vmatmul.mubr.bf16.gmra.mrb[0].mxu0 %v526
  %v1415 = vpop.f32.mrb[0].mxu0
  %v1416 = vadd.f32 %v1319, %v1415
  %v1417 = vpop.f32.mrb[0].mxu0
  %v1418 = vpop.f32.mrb[0].mxu0
  %v1419 = vadd.f32 %v1322, %v1418
  %v1420 = vpop.f32.mrb[0].mxu0
  %1421 = vmatprep.mubr.bf16.mxu0 %v536
  %1422 = vmatmul.mubr.bf16.gmra.mrb[0].mxu0 %v535
  %v1423 = vpop.f32.mrb[0].mxu0
  %v1424 = vadd.f32 %v1327, %v1423
  %v1425 = vpop.f32.mrb[0].mxu0
  %v1426 = vpop.f32.mrb[0].mxu0
  %v1427 = vadd.f32 %v1330, %v1426
  %v1428 = vpop.f32.mrb[0].mxu0
  %1429 = vdwg.mxu0
  %1430 = vmatprep.subr.bf16.mxu0 0
  %1431 = vmatpush1.bf16.msra.mxu0 %v962
  %1432 = vmatprep.subr.bf16.mxu0 0
  %1433 = vmatpush1.bf16.msra.mxu0 %v963
  %1434 = vmatprep.subr.bf16.mxu0 0
  %1435 = vmatpush1.bf16.msra.mxu0 %v964
  %1436 = vmatprep.subr.bf16.mxu0 0
  %1437 = vmatpush1.bf16.msra.mxu0 %v965
  %1438 = vmatprep.subr.bf16.mxu0 0
  %1439 = vmatpush1.bf16.msra.mxu0 %v966
  %1440 = vmatprep.subr.bf16.mxu0 0
  %1441 = vmatpush1.bf16.msra.mxu0 %v967
  %1442 = vmatprep.subr.bf16.mxu0 0
  %1443 = vmatpush1.bf16.msra.mxu0 %v968
  %1444 = vmatprep.subr.bf16.mxu0 0
  %1445 = vmatpush1.bf16.msra.mxu0 %v969
  %1446 = vmatprep.subr.bf16.mxu0 0
  %1447 = vmatpush1.bf16.msra.mxu0 0
  %1448 = vmatprep.subr.bf16.mxu0 0
  %1449 = vmatpush1.bf16.msra.mxu0 0
  %1450 = vmatprep.subr.bf16.mxu0 0
  %1451 = vmatpush1.bf16.msra.mxu0 0
  %1452 = vmatprep.subr.bf16.mxu0 0
  %1453 = vmatpush1.bf16.msra.mxu0 0
  %1454 = vmatprep.subr.bf16.mxu0 0
  %1455 = vmatpush1.bf16.msra.mxu0 0
  %1456 = vmatprep.subr.bf16.mxu0 0
  %1457 = vmatpush1.bf16.msra.mxu0 0
  %1458 = vmatprep.subr.bf16.mxu0 0
  %1459 = vmatpush1.bf16.msra.mxu0 0
  %1460 = vmatprep.subr.bf16.mxu0 0
  %1461 = vmatpush1.bf16.msra.mxu0 0
  %1462 = vmatprep.mubr.bf16.mxu0 0
  %1463 = vmatmul.mubr.bf16.gmra.mrb[0].mxu0 %v474
  %v1464 = vpop.f32.mrb[0].mxu0
  %v1465 = vadd.f32 %v1368, %v1464
  %v1466 = vpop.f32.mrb[0].mxu0
  %v1467 = vpop.f32.mrb[0].mxu0
  %v1468 = vadd.f32 %v1371, %v1467
  %v1469 = vpop.f32.mrb[0].mxu0
  %1470 = vmatprep.mubr.bf16.mxu0 0
  %1471 = vmatmul.mubr.bf16.gmra.mrb[0].mxu0 %v483
  %v1472 = vpop.f32.mrb[0].mxu0
  %v1473 = vadd.f32 %v1376, %v1472
  %v1474 = vpop.f32.mrb[0].mxu0
  %v1475 = vpop.f32.mrb[0].mxu0
  %v1476 = vadd.f32 %v1379, %v1475
  %v1477 = vpop.f32.mrb[0].mxu0
  %1478 = vmatprep.mubr.bf16.mxu0 0
  %1479 = vmatmul.mubr.bf16.gmra.mrb[0].mxu0 %v492
  %v1480 = vpop.f32.mrb[0].mxu0
  %v1481 = vadd.f32 %v1384, %v1480
  %v1482 = vpop.f32.mrb[0].mxu0
  %v1483 = vpop.f32.mrb[0].mxu0
  %v1484 = vadd.f32 %v1387, %v1483
  %v1485 = vpop.f32.mrb[0].mxu0
  %1486 = vmatprep.mubr.bf16.mxu0 0
  %1487 = vmatmul.mubr.bf16.gmra.mrb[0].mxu0 %v501
  %v1488 = vpop.f32.mrb[0].mxu0
  %v1489 = vadd.f32 %v1392, %v1488
  %v1490 = vpop.f32.mrb[0].mxu0
  %v1491 = vpop.f32.mrb[0].mxu0
  %v1492 = vadd.f32 %v1395, %v1491
  %v1493 = vpop.f32.mrb[0].mxu0
  %1494 = vmatprep.mubr.bf16.mxu0 0
  %1495 = vmatmul.mubr.bf16.gmra.mrb[0].mxu0 %v510
  %v1496 = vpop.f32.mrb[0].mxu0
  %v1497 = vadd.f32 %v1400, %v1496
  %v1498 = vpop.f32.mrb[0].mxu0
  %v1499 = vpop.f32.mrb[0].mxu0
  %v1500 = vadd.f32 %v1403, %v1499
  %v1501 = vpop.f32.mrb[0].mxu0
  %1502 = vmatprep.mubr.bf16.mxu0 0
  %1503 = vmatmul.mubr.bf16.gmra.mrb[0].mxu0 %v519
  %v1504 = vpop.f32.mrb[0].mxu0
  %v1505 = vadd.f32 %v1408, %v1504
  %v1506 = vpop.f32.mrb[0].mxu0
  %v1507 = vpop.f32.mrb[0].mxu0
  %v1508 = vadd.f32 %v1411, %v1507
  %v1509 = vpop.f32.mrb[0].mxu0
  %1510 = vmatprep.mubr.bf16.mxu0 0
  %1511 = vmatmul.mubr.bf16.gmra.mrb[0].mxu0 %v528
  %v1512 = vpop.f32.mrb[0].mxu0
  %v1513 = vadd.f32 %v1416, %v1512
  %v1514 = vpop.f32.mrb[0].mxu0
  %v1515 = vpop.f32.mrb[0].mxu0
  %v1516 = vadd.f32 %v1419, %v1515
  %v1517 = vpop.f32.mrb[0].mxu0
  %1518 = vmatprep.mubr.bf16.mxu0 0
  %1519 = vmatmul.mubr.bf16.gmra.mrb[0].mxu0 %v537
  %v1520 = vpop.f32.mrb[0].mxu0
  %v1521 = vadd.f32 %v1424, %v1520
  %v1522 = vpop.f32.mrb[0].mxu0
  %v1523 = vpop.f32.mrb[0].mxu0
  %v1524 = vadd.f32 %v1427, %v1523
  %v1525 = vpop.f32.mrb[0].mxu0
  %1526 = vdwg.mxu0
  %v1527 = vld [vmem:[%s2] sm:$0x1]
  %v1529 = vlaneseq
  %v1530 = vshrl.u32 %v1529, 7
  %v1531 = vsub.s32 0, %v1530
  %v1532 = vrot.slane %v1527, %v1531
  %v1534 = vmul.f32 %v1465, %v1532
  %v1535 = vmul.f32 %v1468, %v1532
  %v1536 = vmul.f32 %v1473, %v1532
  %v1537 = vmul.f32 %v1476, %v1532
  %v1538 = vmul.f32 %v1481, %v1532
  %v1539 = vmul.f32 %v1484, %v1532
  %v1540 = vmul.f32 %v1489, %v1532
  %v1541 = vmul.f32 %v1492, %v1532
  %v1542 = vmul.f32 %v1497, %v1532
  %v1543 = vmul.f32 %v1500, %v1532
  %v1544 = vmul.f32 %v1505, %v1532
  %v1545 = vmul.f32 %v1508, %v1532
  %v1546 = vmul.f32 %v1513, %v1532
  %v1547 = vmul.f32 %v1516, %v1532
  %v1548 = vmul.f32 %v1521, %v1532
  %v1549 = vmul.f32 %v1524, %v1532
  %v1550 = vld [vmem:[%s3] sm:$0x1]
  %v1552 = vlaneseq
  %v1553 = vshrl.u32 %v1552, 7
  %v1554 = vsub.s32 0, %v1553
  %v1555 = vrot.slane %v1550, %v1554
  %v1557 = vadd.f32 %v1534, %v1555
  %v1558 = vadd.f32 %v1535, %v1555
  %v1559 = vadd.f32 %v1536, %v1555
  %v1560 = vadd.f32 %v1537, %v1555
  %v1561 = vadd.f32 %v1538, %v1555
  %v1562 = vadd.f32 %v1539, %v1555
  %v1563 = vadd.f32 %v1540, %v1555
  %v1564 = vadd.f32 %v1541, %v1555
  %v1565 = vadd.f32 %v1542, %v1555
  %v1566 = vadd.f32 %v1543, %v1555
  %v1567 = vadd.f32 %v1544, %v1555
  %v1568 = vadd.f32 %v1545, %v1555
  %v1569 = vadd.f32 %v1546, %v1555
  %v1570 = vadd.f32 %v1547, %v1555
  %v1571 = vadd.f32 %v1548, %v1555
  %v1572 = vadd.f32 %v1549, %v1555
  %v1573 = vmax.f32 %v1557, 0.0
  %v1574 = vmax.f32 %v1558, 0.0
  %v1575 = vmax.f32 %v1559, 0.0
  %v1576 = vmax.f32 %v1560, 0.0
  %v1577 = vmax.f32 %v1561, 0.0
  %v1578 = vmax.f32 %v1562, 0.0
  %v1579 = vmax.f32 %v1563, 0.0
  %v1580 = vmax.f32 %v1564, 0.0
  %v1581 = vmax.f32 %v1565, 0.0
  %v1582 = vmax.f32 %v1566, 0.0
  %v1583 = vmax.f32 %v1567, 0.0
  %v1584 = vmax.f32 %v1568, 0.0
  %v1585 = vmax.f32 %v1569, 0.0
  %v1586 = vmax.f32 %v1570, 0.0
  %v1587 = vmax.f32 %v1571, 0.0
  %v1588 = vmax.f32 %v1572, 0.0
  %v1589 = vpack.c.bf16 %v1574, %v1573
  %v1590 = vpack.c.bf16 %v1576, %v1575
  %v1591 = vpack.c.bf16 %v1578, %v1577
  %v1592 = vpack.c.bf16 %v1580, %v1579
  %v1593 = vpack.c.bf16 %v1582, %v1581
  %v1594 = vpack.c.bf16 %v1584, %v1583
  %v1595 = vpack.c.bf16 %v1586, %v1585
  %v1596 = vpack.c.bf16 %v1588, %v1587
  %v1605 = vunpack.c.l.b16 %v1589
  %v1606 = vunpack.c.h.b16 %v1589
  %v1607 = vunpack.c.l.b16 %v1590
  %v1608 = vunpack.c.h.b16 %v1590
  %v1609 = vunpack.c.l.b16 %v1591
  %v1610 = vunpack.c.h.b16 %v1591
  %v1611 = vunpack.c.l.b16 %v1592
  %v1612 = vunpack.c.h.b16 %v1592
  %v1613 = vunpack.c.l.b16 %v1593
  %v1614 = vunpack.c.h.b16 %v1593
  %v1615 = vunpack.c.l.b16 %v1594
  %v1616 = vunpack.c.h.b16 %v1594
  %v1617 = vunpack.c.l.b16 %v1595
  %v1618 = vunpack.c.h.b16 %v1595
  %v1619 = vunpack.c.l.b16 %v1596
  %v1620 = vunpack.c.h.b16 %v1596
  %v1621 = vpack.c.b16 %v1605, %v1605
  %v1622 = vpack.c.b16 %v1606, %v1606
  %v1623 = vpack.c.b16 %v1607, %v1607
  %v1624 = vpack.c.b16 %v1608, %v1608
  %v1625 = vpack.c.b16 %v1609, %v1609
  %v1626 = vpack.c.b16 %v1610, %v1610
  %v1627 = vpack.c.b16 %v1611, %v1611
  %v1628 = vpack.c.b16 %v1612, %v1612
  %v1629 = vpack.c.b16 %v1613, %v1613
  %v1630 = vpack.c.b16 %v1614, %v1614
  %v1631 = vpack.c.b16 %v1615, %v1615
  %v1632 = vpack.c.b16 %v1616, %v1616
  %v1633 = vpack.c.b16 %v1617, %v1617
  %v1634 = vpack.c.b16 %v1618, %v1618
  %v1635 = vpack.c.b16 %v1619, %v1619
  %v1636 = vpack.c.b16 %v1620, %v1620
  %1653 = vst [vmem:[%s4] sm:$0xf] %v1621
  %1654 = vst [vmem:[%s4 + $0x4] sm:$0xf] %v1622
  %1655 = vst [vmem:[%s4 + $0x8] sm:$0xf] %v1623
  %1656 = vst [vmem:[%s4 + $0xc] sm:$0xf] %v1624
  %1657 = vst [vmem:[%s4 + $0x10] sm:$0xf] %v1625
  %1658 = vst [vmem:[%s4 + $0x14] sm:$0xf] %v1626
  %1659 = vst [vmem:[%s4 + $0x18] sm:$0xf] %v1627
  %1660 = vst [vmem:[%s4 + $0x1c] sm:$0xf] %v1628
  %1661 = vst [vmem:[%s4 + $0x20] sm:$0xf] %v1629
  %1662 = vst [vmem:[%s4 + $0x24] sm:$0xf] %v1630
  %1663 = vst [vmem:[%s4 + $0x28] sm:$0xf] %v1631
  %1664 = vst [vmem:[%s4 + $0x2c] sm:$0xf] %v1632
  %1665 = vst [vmem:[%s4 + $0x30] sm:$0xf] %v1633
  %1666 = vst [vmem:[%s4 + $0x34] sm:$0xf] %v1634
  %1667 = vst [vmem:[%s4 + $0x38] sm:$0xf] %v1635
  %1668 = vst [vmem:[%s4 + $0x3c] sm:$0xf] %v1636
  // Predicated region
  $region18: #{model_forward.6} parent=0 // pred_check
    _
  $region19: #{model_forward.6} parent=0 // pred_check_branch
    %1670 = sbr.rel (0) target = $region21
  $region20: #{model_forward.6} parent=0 // pred_region
    _
  $region21: #{model_forward.6} parent=0 // pred_fallthru
    _
  // Predicated region
  $region22: #{model_forward.6} parent=0 // pred_check
    _
  $region23: #{model_forward.6} parent=0 // pred_check_branch
    %1672 = sbr.rel (0) target = $region25
  $region24: #{model_forward.6} parent=0 // pred_region
    _
  $region25: #{model_forward.6} parent=0 // pred_fallthru
    _

// kernel: model_forward.7
$region0: #{model_forward.7}
  #allocation0 [shape = 'u32[]', space=smem, size = 0x4, offset = 0x4, fixed_abs, tag = 'smem constant byte address 0x4 - core index']
  #allocation1 [shape = 'u32[144,128]{1,0:T(1,128)}', space=vmem, size = 0x12000, scoped, tag = 'internal scratch']
  %s0 = inlined_call_operand.vmem [shape: bf16[128,1152], index: 0, kind: input, shape index: {}]
  %s1 = inlined_call_operand.vmem [shape: bf16[1152,128], index: 1, kind: input, shape index: {}]
  %s2 = inlined_call_operand.vmem [shape: f32[1,128], index: 2, kind: input, shape index: {}]
  %s3 = inlined_call_operand.vmem [shape: f32[1,128], index: 3, kind: input, shape index: {}]
  %s4 = inlined_call_operand.vmem [shape: bf16[128,128], index: 4, kind: input, shape index: {}]
  %s5 = inlined_call_operand.vmem [shape: bf16[128,128], index: 5, kind: input, shape index: {}]
  %s6 = inlined_call_operand.vmem [shape: f32[1,128], index: 6, kind: input, shape index: {}]
  %s7 = inlined_call_operand.vmem [shape: f32[1,128], index: 7, kind: input, shape index: {}]
  %s8 = inlined_call_operand.vmem [shape: bf16[128,128], index: 8, kind: output, shape index: {}]
  %s9 = sld [smem:[#allocation0]]
  $region42: #{model_forward.7} parent=0
    _
  %s11 = ssub.s32 1, %s9
  %s12 = scalar_select 0, %s11, %s9
  // Predicated region
  $region2: #{model_forward.7} parent=0 // pred_check
    _
  $region3: #{model_forward.7} parent=0 // pred_check_branch
    %14 = sbr.rel (0) target = $region5
  $region4: #{model_forward.7} parent=0 // pred_region
    _
  $region5: #{model_forward.7} parent=0 // pred_fallthru
    _
  // Predicated region
  $region6: #{model_forward.7} parent=0 // pred_check
    _
  $region7: #{model_forward.7} parent=0 // pred_check_branch
    %16 = sbr.rel (0) target = $region9
  $region8: #{model_forward.7} parent=0 // pred_region
    _
  $region9: #{model_forward.7} parent=0 // pred_fallthru
    _
  // Predicated region
  $region10: #{model_forward.7} parent=0 // pred_check
    _
  $region11: #{model_forward.7} parent=0 // pred_check_branch
    %18 = sbr.rel (0) target = $region13
  $region12: #{model_forward.7} parent=0 // pred_region
    _
  $region13: #{model_forward.7} parent=0 // pred_fallthru
    _
  // Predicated region
  $region14: #{model_forward.7} parent=0 // pred_check
    _
  $region15: #{model_forward.7} parent=0 // pred_check_branch
    %20 = sbr.rel (0) target = $region17
  $region16: #{model_forward.7} parent=0 // pred_region
    _
  $region17: #{model_forward.7} parent=0 // pred_fallthru
    _
  // Predicated region
  $region18: #{model_forward.7} parent=0 // pred_check
    _
  $region19: #{model_forward.7} parent=0 // pred_check_branch
    %22 = sbr.rel (0) target = $region21
  $region20: #{model_forward.7} parent=0 // pred_region
    _
  $region21: #{model_forward.7} parent=0 // pred_fallthru
    _
  // Predicated region
  $region22: #{model_forward.7} parent=0 // pred_check
    _
  $region23: #{model_forward.7} parent=0 // pred_check_branch
    %24 = sbr.rel (0) target = $region25
  $region24: #{model_forward.7} parent=0 // pred_region
    _
  $region25: #{model_forward.7} parent=0 // pred_fallthru
    _
  // Predicated region
  $region26: #{model_forward.7} parent=0 // pred_check
    _
  $region27: #{model_forward.7} parent=0 // pred_check_branch
    %26 = sbr.rel (0) target = $region29
  $region28: #{model_forward.7} parent=0 // pred_region
    _
  $region29: #{model_forward.7} parent=0 // pred_fallthru
    _
  // Predicated region
  $region30: #{model_forward.7} parent=0 // pred_check
    _
  $region31: #{model_forward.7} parent=0 // pred_check_branch
    %28 = sbr.rel (0) target = $region33
  $region32: #{model_forward.7} parent=0 // pred_region
    _
  $region33: #{model_forward.7} parent=0 // pred_fallthru
    _
  %v30 = vld [vmem:[%s0] sm:$0xff]
  %v31 = vld [vmem:[%s0 + $0x8] sm:$0xff]
  %v32 = vld [vmem:[%s0 + $0x10] sm:$0xff]
  %v33 = vld [vmem:[%s0 + $0x18] sm:$0xff]
  %v34 = vld [vmem:[%s0 + $0x20] sm:$0xf]
  %v35 = vld [vmem:[%s0 + $0x24] sm:$0xff]
  %v36 = vld [vmem:[%s0 + $0x2c] sm:$0xff]
  %v37 = vld [vmem:[%s0 + $0x34] sm:$0xff]
  %v38 = vld [vmem:[%s0 + $0x3c] sm:$0xff]
  %v39 = vld [vmem:[%s0 + $0x44] sm:$0xf]
  %v40 = vld [vmem:[%s0 + $0x48] sm:$0xff]
  %v41 = vld [vmem:[%s0 + $0x50] sm:$0xff]
  %v42 = vld [vmem:[%s0 + $0x58] sm:$0xff]
  %v43 = vld [vmem:[%s0 + $0x60] sm:$0xff]
  %v44 = vld [vmem:[%s0 + $0x68] sm:$0xf]
  %v45 = vld [vmem:[%s0 + $0x6c] sm:$0xff]
  %v46 = vld [vmem:[%s0 + $0x74] sm:$0xff]
  %v47 = vld [vmem:[%s0 + $0x7c] sm:$0xff]
  %v48 = vld [vmem:[%s0 + $0x84] sm:$0xff]
  %v49 = vld [vmem:[%s0 + $0x8c] sm:$0xf]
  %v50 = vld [vmem:[%s0 + $0x90] sm:$0xff]
  %v51 = vld [vmem:[%s0 + $0x98] sm:$0xff]
  %v52 = vld [vmem:[%s0 + $0xa0] sm:$0xff]
  %v53 = vld [vmem:[%s0 + $0xa8] sm:$0xff]
  %v54 = vld [vmem:[%s0 + $0xb0] sm:$0xf]
  %v55 = vld [vmem:[%s0 + $0xb4] sm:$0xff]
  %v56 = vld [vmem:[%s0 + $0xbc] sm:$0xff]
  %v57 = vld [vmem:[%s0 + $0xc4] sm:$0xff]
  %v58 = vld [vmem:[%s0 + $0xcc] sm:$0xff]
  %v59 = vld [vmem:[%s0 + $0xd4] sm:$0xf]
  %v60 = vld [vmem:[%s0 + $0xd8] sm:$0xff]
  %v61 = vld [vmem:[%s0 + $0xe0] sm:$0xff]
  %v62 = vld [vmem:[%s0 + $0xe8] sm:$0xff]
  %v63 = vld [vmem:[%s0 + $0xf0] sm:$0xff]
  %v64 = vld [vmem:[%s0 + $0xf8] sm:$0xf]
  %v65 = vld [vmem:[%s0 + $0xfc] sm:$0xff]
  %v66 = vld [vmem:[%s0 + $0x104] sm:$0xff]
  %v67 = vld [vmem:[%s0 + $0x10c] sm:$0xff]
  %v68 = vld [vmem:[%s0 + $0x114] sm:$0xff]
  %v69 = vld [vmem:[%s0 + $0x11c] sm:$0xf]
  %v70 = vld [vmem:[%s0 + $0x120] sm:$0xff]
  %v71 = vld [vmem:[%s0 + $0x128] sm:$0xff]
  %v72 = vld [vmem:[%s0 + $0x130] sm:$0xff]
  %v73 = vld [vmem:[%s0 + $0x138] sm:$0xff]
  %v74 = vld [vmem:[%s0 + $0x140] sm:$0xf]
  %v75 = vld [vmem:[%s0 + $0x144] sm:$0xff]
  %v76 = vld [vmem:[%s0 + $0x14c] sm:$0xff]
  %v77 = vld [vmem:[%s0 + $0x154] sm:$0xff]
  %v78 = vld [vmem:[%s0 + $0x15c] sm:$0xff]
  %v79 = vld [vmem:[%s0 + $0x164] sm:$0xf]
  %v80 = vld [vmem:[%s0 + $0x168] sm:$0xff]
  %v81 = vld [vmem:[%s0 + $0x170] sm:$0xff]
  %v82 = vld [vmem:[%s0 + $0x178] sm:$0xff]
  %v83 = vld [vmem:[%s0 + $0x180] sm:$0xff]
  %v84 = vld [vmem:[%s0 + $0x188] sm:$0xf]
  %v85 = vld [vmem:[%s0 + $0x18c] sm:$0xff]
  %v86 = vld [vmem:[%s0 + $0x194] sm:$0xff]
  %v87 = vld [vmem:[%s0 + $0x19c] sm:$0xff]
  %v88 = vld [vmem:[%s0 + $0x1a4] sm:$0xff]
  %v89 = vld [vmem:[%s0 + $0x1ac] sm:$0xf]
  %v90 = vld [vmem:[%s0 + $0x1b0] sm:$0xff]
  %v91 = vld [vmem:[%s0 + $0x1b8] sm:$0xff]
  %v92 = vld [vmem:[%s0 + $0x1c0] sm:$0xff]
  %v93 = vld [vmem:[%s0 + $0x1c8] sm:$0xff]
  %v94 = vld [vmem:[%s0 + $0x1d0] sm:$0xf]
  %v95 = vld [vmem:[%s0 + $0x1d4] sm:$0xff]
  %v96 = vld [vmem:[%s0 + $0x1dc] sm:$0xff]
  %v97 = vld [vmem:[%s0 + $0x1e4] sm:$0xff]
  %v98 = vld [vmem:[%s0 + $0x1ec] sm:$0xff]
  %v99 = vld [vmem:[%s0 + $0x1f4] sm:$0xf]
  %v100 = vld [vmem:[%s0 + $0x1f8] sm:$0xff]
  %v101 = vld [vmem:[%s0 + $0x200] sm:$0xff]
  %v102 = vld [vmem:[%s0 + $0x208] sm:$0xff]
  %v103 = vld [vmem:[%s0 + $0x210] sm:$0xff]
  %v104 = vld [vmem:[%s0 + $0x218] sm:$0xf]
  %v105 = vld [vmem:[%s0 + $0x21c] sm:$0xff]
  %v106 = vld [vmem:[%s0 + $0x224] sm:$0xff]
  %v107 = vld [vmem:[%s0 + $0x22c] sm:$0xff]
  %v108 = vld [vmem:[%s0 + $0x234] sm:$0xff]
  %v109 = vld [vmem:[%s0 + $0x23c] sm:$0xf]
  %v110 = vld [vmem:[%s1] sm:$0xf]
  %v111 = vld [vmem:[%s1 + $0x4] sm:$0xf]
  %v112 = vld [vmem:[%s1 + $0x8] sm:$0xf]
  %v113 = vld [vmem:[%s1 + $0xc] sm:$0xf]
  %v114 = vld [vmem:[%s1 + $0x10] sm:$0xf]
  %v115 = vld [vmem:[%s1 + $0x14] sm:$0xf]
  %v116 = vld [vmem:[%s1 + $0x18] sm:$0xf]
  %v117 = vld [vmem:[%s1 + $0x1c] sm:$0xf]
  %v118 = vld [vmem:[%s1 + $0x20] sm:$0xf]
  %v119 = vld [vmem:[%s1 + $0x24] sm:$0xf]
  %v120 = vld [vmem:[%s1 + $0x28] sm:$0xf]
  %v121 = vld [vmem:[%s1 + $0x2c] sm:$0xf]
  %v122 = vld [vmem:[%s1 + $0x30] sm:$0xf]
  %v123 = vld [vmem:[%s1 + $0x34] sm:$0xf]
  %v124 = vld [vmem:[%s1 + $0x38] sm:$0xf]
  %v125 = vld [vmem:[%s1 + $0x3c] sm:$0xf]
  %v126 = vld [vmem:[%s1 + $0x40] sm:$0xf]
  %v127 = vld [vmem:[%s1 + $0x44] sm:$0xf]
  %v128 = vld [vmem:[%s1 + $0x48] sm:$0xf]
  %v129 = vld [vmem:[%s1 + $0x4c] sm:$0xf]
  %v130 = vld [vmem:[%s1 + $0x50] sm:$0xf]
  %v131 = vld [vmem:[%s1 + $0x54] sm:$0xf]
  %v132 = vld [vmem:[%s1 + $0x58] sm:$0xf]
  %v133 = vld [vmem:[%s1 + $0x5c] sm:$0xf]
  %v134 = vld [vmem:[%s1 + $0x60] sm:$0xf]
  %v135 = vld [vmem:[%s1 + $0x64] sm:$0xf]
  %v136 = vld [vmem:[%s1 + $0x68] sm:$0xf]
  %v137 = vld [vmem:[%s1 + $0x6c] sm:$0xf]
  %v138 = vld [vmem:[%s1 + $0x70] sm:$0xf]
  %v139 = vld [vmem:[%s1 + $0x74] sm:$0xf]
  %v140 = vld [vmem:[%s1 + $0x78] sm:$0xf]
  %v141 = vld [vmem:[%s1 + $0x7c] sm:$0xf]
  %v142 = vld [vmem:[%s1 + $0x80] sm:$0xf]
  %v143 = vld [vmem:[%s1 + $0x84] sm:$0xf]
  %v144 = vld [vmem:[%s1 + $0x88] sm:$0xf]
  %v145 = vld [vmem:[%s1 + $0x8c] sm:$0xf]
  %v146 = vld [vmem:[%s1 + $0x90] sm:$0xf]
  %v147 = vld [vmem:[%s1 + $0x94] sm:$0xf]
  %v148 = vld [vmem:[%s1 + $0x98] sm:$0xf]
  %v149 = vld [vmem:[%s1 + $0x9c] sm:$0xf]
  %v150 = vld [vmem:[%s1 + $0xa0] sm:$0xf]
  %v151 = vld [vmem:[%s1 + $0xa4] sm:$0xf]
  %v152 = vld [vmem:[%s1 + $0xa8] sm:$0xf]
  %v153 = vld [vmem:[%s1 + $0xac] sm:$0xf]
  %v154 = vld [vmem:[%s1 + $0xb0] sm:$0xf]
  %v155 = vld [vmem:[%s1 + $0xb4] sm:$0xf]
  %v156 = vld [vmem:[%s1 + $0xb8] sm:$0xf]
  %v157 = vld [vmem:[%s1 + $0xbc] sm:$0xf]
  %v158 = vld [vmem:[%s1 + $0xc0] sm:$0xf]
  %v159 = vld [vmem:[%s1 + $0xc4] sm:$0xf]
  %v160 = vld [vmem:[%s1 + $0xc8] sm:$0xf]
  %v161 = vld [vmem:[%s1 + $0xcc] sm:$0xf]
  %v162 = vld [vmem:[%s1 + $0xd0] sm:$0xf]
  %v163 = vld [vmem:[%s1 + $0xd4] sm:$0xf]
  %v164 = vld [vmem:[%s1 + $0xd8] sm:$0xf]
  %v165 = vld [vmem:[%s1 + $0xdc] sm:$0xf]
  %v166 = vld [vmem:[%s1 + $0xe0] sm:$0xf]
  %v167 = vld [vmem:[%s1 + $0xe4] sm:$0xf]
  %v168 = vld [vmem:[%s1 + $0xe8] sm:$0xf]
  %v169 = vld [vmem:[%s1 + $0xec] sm:$0xf]
  %v170 = vld [vmem:[%s1 + $0xf0] sm:$0xf]
  %v171 = vld [vmem:[%s1 + $0xf4] sm:$0xf]
  %v172 = vld [vmem:[%s1 + $0xf8] sm:$0xf]
  %v173 = vld [vmem:[%s1 + $0xfc] sm:$0xf]
  %v174 = vld [vmem:[%s1 + $0x100] sm:$0xf]
  %v175 = vld [vmem:[%s1 + $0x104] sm:$0xf]
  %v176 = vld [vmem:[%s1 + $0x108] sm:$0xf]
  %v177 = vld [vmem:[%s1 + $0x10c] sm:$0xf]
  %v178 = vld [vmem:[%s1 + $0x110] sm:$0xf]
  %v179 = vld [vmem:[%s1 + $0x114] sm:$0xf]
  %v180 = vld [vmem:[%s1 + $0x118] sm:$0xf]
  %v181 = vld [vmem:[%s1 + $0x11c] sm:$0xf]
  %v182 = vld [vmem:[%s1 + $0x120] sm:$0xf]
  %v183 = vld [vmem:[%s1 + $0x124] sm:$0xf]
  %v184 = vld [vmem:[%s1 + $0x128] sm:$0xf]
  %v185 = vld [vmem:[%s1 + $0x12c] sm:$0xf]
  %v186 = vld [vmem:[%s1 + $0x130] sm:$0xf]
  %v187 = vld [vmem:[%s1 + $0x134] sm:$0xf]
  %v188 = vld [vmem:[%s1 + $0x138] sm:$0xf]
  %v189 = vld [vmem:[%s1 + $0x13c] sm:$0xf]
  %v190 = vld [vmem:[%s1 + $0x140] sm:$0xf]
  %v191 = vld [vmem:[%s1 + $0x144] sm:$0xf]
  %v192 = vld [vmem:[%s1 + $0x148] sm:$0xf]
  %v193 = vld [vmem:[%s1 + $0x14c] sm:$0xf]
  %v194 = vld [vmem:[%s1 + $0x150] sm:$0xf]
  %v195 = vld [vmem:[%s1 + $0x154] sm:$0xf]
  %v196 = vld [vmem:[%s1 + $0x158] sm:$0xf]
  %v197 = vld [vmem:[%s1 + $0x15c] sm:$0xf]
  %v198 = vld [vmem:[%s1 + $0x160] sm:$0xf]
  %v199 = vld [vmem:[%s1 + $0x164] sm:$0xf]
  %v200 = vld [vmem:[%s1 + $0x168] sm:$0xf]
  %v201 = vld [vmem:[%s1 + $0x16c] sm:$0xf]
  %v202 = vld [vmem:[%s1 + $0x170] sm:$0xf]
  %v203 = vld [vmem:[%s1 + $0x174] sm:$0xf]
  %v204 = vld [vmem:[%s1 + $0x178] sm:$0xf]
  %v205 = vld [vmem:[%s1 + $0x17c] sm:$0xf]
  %v206 = vld [vmem:[%s1 + $0x180] sm:$0xf]
  %v207 = vld [vmem:[%s1 + $0x184] sm:$0xf]
  %v208 = vld [vmem:[%s1 + $0x188] sm:$0xf]
  %v209 = vld [vmem:[%s1 + $0x18c] sm:$0xf]
  %v210 = vld [vmem:[%s1 + $0x190] sm:$0xf]
  %v211 = vld [vmem:[%s1 + $0x194] sm:$0xf]
  %v212 = vld [vmem:[%s1 + $0x198] sm:$0xf]
  %v213 = vld [vmem:[%s1 + $0x19c] sm:$0xf]
  %v214 = vld [vmem:[%s1 + $0x1a0] sm:$0xf]
  %v215 = vld [vmem:[%s1 + $0x1a4] sm:$0xf]
  %v216 = vld [vmem:[%s1 + $0x1a8] sm:$0xf]
  %v217 = vld [vmem:[%s1 + $0x1ac] sm:$0xf]
  %v218 = vld [vmem:[%s1 + $0x1b0] sm:$0xf]
  %v219 = vld [vmem:[%s1 + $0x1b4] sm:$0xf]
  %v220 = vld [vmem:[%s1 + $0x1b8] sm:$0xf]
  %v221 = vld [vmem:[%s1 + $0x1bc] sm:$0xf]
  %v222 = vld [vmem:[%s1 + $0x1c0] sm:$0xf]
  %v223 = vld [vmem:[%s1 + $0x1c4] sm:$0xf]
  %v224 = vld [vmem:[%s1 + $0x1c8] sm:$0xf]
  %v225 = vld [vmem:[%s1 + $0x1cc] sm:$0xf]
  %v226 = vld [vmem:[%s1 + $0x1d0] sm:$0xf]
  %v227 = vld [vmem:[%s1 + $0x1d4] sm:$0xf]
  %v228 = vld [vmem:[%s1 + $0x1d8] sm:$0xf]
  %v229 = vld [vmem:[%s1 + $0x1dc] sm:$0xf]
  %v230 = vld [vmem:[%s1 + $0x1e0] sm:$0xf]
  %v231 = vld [vmem:[%s1 + $0x1e4] sm:$0xf]
  %v232 = vld [vmem:[%s1 + $0x1e8] sm:$0xf]
  %v233 = vld [vmem:[%s1 + $0x1ec] sm:$0xf]
  %v234 = vld [vmem:[%s1 + $0x1f0] sm:$0xf]
  %v235 = vld [vmem:[%s1 + $0x1f4] sm:$0xf]
  %v236 = vld [vmem:[%s1 + $0x1f8] sm:$0xf]
  %v237 = vld [vmem:[%s1 + $0x1fc] sm:$0xf]
  %v238 = vld [vmem:[%s1 + $0x200] sm:$0xf]
  %v239 = vld [vmem:[%s1 + $0x204] sm:$0xf]
  %v240 = vld [vmem:[%s1 + $0x208] sm:$0xf]
  %v241 = vld [vmem:[%s1 + $0x20c] sm:$0xf]
  %v242 = vld [vmem:[%s1 + $0x210] sm:$0xf]
  %v243 = vld [vmem:[%s1 + $0x214] sm:$0xf]
  %v244 = vld [vmem:[%s1 + $0x218] sm:$0xf]
  %v245 = vld [vmem:[%s1 + $0x21c] sm:$0xf]
  %v246 = vld [vmem:[%s1 + $0x220] sm:$0xf]
  %v247 = vld [vmem:[%s1 + $0x224] sm:$0xf]
  %v248 = vld [vmem:[%s1 + $0x228] sm:$0xf]
  %v249 = vld [vmem:[%s1 + $0x22c] sm:$0xf]
  %v250 = vld [vmem:[%s1 + $0x230] sm:$0xf]
  %v251 = vld [vmem:[%s1 + $0x234] sm:$0xf]
  %v252 = vld [vmem:[%s1 + $0x238] sm:$0xf]
  %v253 = vld [vmem:[%s1 + $0x23c] sm:$0xf]
  %v334 = vunpack.c.l.b16 %v30
  %v335 = vunpack.c.h.b16 %v30
  %v336 = vunpack.c.l.b16 %v31
  %v337 = vunpack.c.h.b16 %v31
  %v338 = vunpack.c.l.b16 %v32
  %v339 = vunpack.c.h.b16 %v32
  %v340 = vunpack.c.l.b16 %v33
  %v341 = vunpack.c.h.b16 %v33
  %v342 = vunpack.c.l.b16 %v34
  %v343 = vunpack.c.l.b16 %v35
  %v344 = vunpack.c.h.b16 %v35
  %v345 = vunpack.c.l.b16 %v36
  %v346 = vunpack.c.h.b16 %v36
  %v347 = vunpack.c.l.b16 %v37
  %v348 = vunpack.c.h.b16 %v37
  %v349 = vunpack.c.l.b16 %v38
  %v350 = vunpack.c.h.b16 %v38
  %v351 = vunpack.c.l.b16 %v39
  %v352 = vunpack.c.l.b16 %v40
  %v353 = vunpack.c.h.b16 %v40
  %v354 = vunpack.c.l.b16 %v41
  %v355 = vunpack.c.h.b16 %v41
  %v356 = vunpack.c.l.b16 %v42
  %v357 = vunpack.c.h.b16 %v42
  %v358 = vunpack.c.l.b16 %v43
  %v359 = vunpack.c.h.b16 %v43
  %v360 = vunpack.c.l.b16 %v44
  %v361 = vunpack.c.l.b16 %v45
  %v362 = vunpack.c.h.b16 %v45
  %v363 = vunpack.c.l.b16 %v46
  %v364 = vunpack.c.h.b16 %v46
  %v365 = vunpack.c.l.b16 %v47
  %v366 = vunpack.c.h.b16 %v47
  %v367 = vunpack.c.l.b16 %v48
  %v368 = vunpack.c.h.b16 %v48
  %v369 = vunpack.c.l.b16 %v49
  %v370 = vunpack.c.l.b16 %v50
  %v371 = vunpack.c.h.b16 %v50
  %v372 = vunpack.c.l.b16 %v51
  %v373 = vunpack.c.h.b16 %v51
  %v374 = vunpack.c.l.b16 %v52
  %v375 = vunpack.c.h.b16 %v52
  %v376 = vunpack.c.l.b16 %v53
  %v377 = vunpack.c.h.b16 %v53
  %v378 = vunpack.c.l.b16 %v54
  %v379 = vunpack.c.l.b16 %v55
  %v380 = vunpack.c.h.b16 %v55
  %v381 = vunpack.c.l.b16 %v56
  %v382 = vunpack.c.h.b16 %v56
  %v383 = vunpack.c.l.b16 %v57
  %v384 = vunpack.c.h.b16 %v57
  %v385 = vunpack.c.l.b16 %v58
  %v386 = vunpack.c.h.b16 %v58
  %v387 = vunpack.c.l.b16 %v59
  %v388 = vunpack.c.l.b16 %v60
  %v389 = vunpack.c.h.b16 %v60
  %v390 = vunpack.c.l.b16 %v61
  %v391 = vunpack.c.h.b16 %v61
  %v392 = vunpack.c.l.b16 %v62
  %v393 = vunpack.c.h.b16 %v62
  %v394 = vunpack.c.l.b16 %v63
  %v395 = vunpack.c.h.b16 %v63
  %v396 = vunpack.c.l.b16 %v64
  %v397 = vunpack.c.l.b16 %v65
  %v398 = vunpack.c.h.b16 %v65
  %v399 = vunpack.c.l.b16 %v66
  %v400 = vunpack.c.h.b16 %v66
  %v401 = vunpack.c.l.b16 %v67
  %v402 = vunpack.c.h.b16 %v67
  %v403 = vunpack.c.l.b16 %v68
  %v404 = vunpack.c.h.b16 %v68
  %v405 = vunpack.c.l.b16 %v69
  %v406 = vunpack.c.l.b16 %v70
  %v407 = vunpack.c.h.b16 %v70
  %v408 = vunpack.c.l.b16 %v71
  %v409 = vunpack.c.h.b16 %v71
  %v410 = vunpack.c.l.b16 %v72
  %v411 = vunpack.c.h.b16 %v72
  %v412 = vunpack.c.l.b16 %v73
  %v413 = vunpack.c.h.b16 %v73
  %v414 = vunpack.c.l.b16 %v74
  %v415 = vunpack.c.l.b16 %v75
  %v416 = vunpack.c.h.b16 %v75
  %v417 = vunpack.c.l.b16 %v76
  %v418 = vunpack.c.h.b16 %v76
  %v419 = vunpack.c.l.b16 %v77
  %v420 = vunpack.c.h.b16 %v77
  %v421 = vunpack.c.l.b16 %v78
  %v422 = vunpack.c.h.b16 %v78
  %v423 = vunpack.c.l.b16 %v79
  %v424 = vunpack.c.l.b16 %v80
  %v425 = vunpack.c.h.b16 %v80
  %v426 = vunpack.c.l.b16 %v81
  %v427 = vunpack.c.h.b16 %v81
  %v428 = vunpack.c.l.b16 %v82
  %v429 = vunpack.c.h.b16 %v82
  %v430 = vunpack.c.l.b16 %v83
  %v431 = vunpack.c.h.b16 %v83
  %v432 = vunpack.c.l.b16 %v84
  %v433 = vunpack.c.l.b16 %v85
  %v434 = vunpack.c.h.b16 %v85
  %v435 = vunpack.c.l.b16 %v86
  %v436 = vunpack.c.h.b16 %v86
  %v437 = vunpack.c.l.b16 %v87
  %v438 = vunpack.c.h.b16 %v87
  %v439 = vunpack.c.l.b16 %v88
  %v440 = vunpack.c.h.b16 %v88
  %v441 = vunpack.c.l.b16 %v89
  %v442 = vunpack.c.l.b16 %v90
  %v443 = vunpack.c.h.b16 %v90
  %v444 = vunpack.c.l.b16 %v91
  %v445 = vunpack.c.h.b16 %v91
  %v446 = vunpack.c.l.b16 %v92
  %v447 = vunpack.c.h.b16 %v92
  %v448 = vunpack.c.l.b16 %v93
  %v449 = vunpack.c.h.b16 %v93
  %v450 = vunpack.c.l.b16 %v94
  %v451 = vunpack.c.l.b16 %v95
  %v452 = vunpack.c.h.b16 %v95
  %v453 = vunpack.c.l.b16 %v96
  %v454 = vunpack.c.h.b16 %v96
  %v455 = vunpack.c.l.b16 %v97
  %v456 = vunpack.c.h.b16 %v97
  %v457 = vunpack.c.l.b16 %v98
  %v458 = vunpack.c.h.b16 %v98
  %v459 = vunpack.c.l.b16 %v99
  %v460 = vunpack.c.l.b16 %v100
  %v461 = vunpack.c.h.b16 %v100
  %v462 = vunpack.c.l.b16 %v101
  %v463 = vunpack.c.h.b16 %v101
  %v464 = vunpack.c.l.b16 %v102
  %v465 = vunpack.c.h.b16 %v102
  %v466 = vunpack.c.l.b16 %v103
  %v467 = vunpack.c.h.b16 %v103
  %v468 = vunpack.c.l.b16 %v104
  %v469 = vunpack.c.l.b16 %v105
  %v470 = vunpack.c.h.b16 %v105
  %v471 = vunpack.c.l.b16 %v106
  %v472 = vunpack.c.h.b16 %v106
  %v473 = vunpack.c.l.b16 %v107
  %v474 = vunpack.c.h.b16 %v107
  %v475 = vunpack.c.l.b16 %v108
  %v476 = vunpack.c.h.b16 %v108
  %v477 = vunpack.c.l.b16 %v109
  %v478 = vpack.c.b16 %v343, %v334
  %v479 = vpack.c.b16 %v344, %v335
  %v480 = vpack.c.b16 %v345, %v336
  %v481 = vpack.c.b16 %v346, %v337
  %v482 = vpack.c.b16 %v347, %v338
  %v483 = vpack.c.b16 %v348, %v339
  %v484 = vpack.c.b16 %v349, %v340
  %v485 = vpack.c.b16 %v350, %v341
  %v486 = vpack.c.b16 %v351, %v342
  %v487 = vpack.c.b16 %v361, %v352
  %v488 = vpack.c.b16 %v362, %v353
  %v489 = vpack.c.b16 %v363, %v354
  %v490 = vpack.c.b16 %v364, %v355
  %v491 = vpack.c.b16 %v365, %v356
  %v492 = vpack.c.b16 %v366, %v357
  %v493 = vpack.c.b16 %v367, %v358
  %v494 = vpack.c.b16 %v368, %v359
  %v495 = vpack.c.b16 %v369, %v360
  %v496 = vpack.c.b16 %v379, %v370
  %v497 = vpack.c.b16 %v380, %v371
  %v498 = vpack.c.b16 %v381, %v372
  %v499 = vpack.c.b16 %v382, %v373
  %v500 = vpack.c.b16 %v383, %v374
  %v501 = vpack.c.b16 %v384, %v375
  %v502 = vpack.c.b16 %v385, %v376
  %v503 = vpack.c.b16 %v386, %v377
  %v504 = vpack.c.b16 %v387, %v378
  %v505 = vpack.c.b16 %v397, %v388
  %v506 = vpack.c.b16 %v398, %v389
  %v507 = vpack.c.b16 %v399, %v390
  %v508 = vpack.c.b16 %v400, %v391
  %v509 = vpack.c.b16 %v401, %v392
  %v510 = vpack.c.b16 %v402, %v393
  %v511 = vpack.c.b16 %v403, %v394
  %v512 = vpack.c.b16 %v404, %v395
  %v513 = vpack.c.b16 %v405, %v396
  %v514 = vpack.c.b16 %v415, %v406
  %v515 = vpack.c.b16 %v416, %v407
  %v516 = vpack.c.b16 %v417, %v408
  %v517 = vpack.c.b16 %v418, %v409
  %v518 = vpack.c.b16 %v419, %v410
  %v519 = vpack.c.b16 %v420, %v411
  %v520 = vpack.c.b16 %v421, %v412
  %v521 = vpack.c.b16 %v422, %v413
  %v522 = vpack.c.b16 %v423, %v414
  %v523 = vpack.c.b16 %v433, %v424
  %v524 = vpack.c.b16 %v434, %v425
  %v525 = vpack.c.b16 %v435, %v426
  %v526 = vpack.c.b16 %v436, %v427
  %v527 = vpack.c.b16 %v437, %v428
  %v528 = vpack.c.b16 %v438, %v429
  %v529 = vpack.c.b16 %v439, %v430
  %v530 = vpack.c.b16 %v440, %v431
  %v531 = vpack.c.b16 %v441, %v432
  %v532 = vpack.c.b16 %v451, %v442
  %v533 = vpack.c.b16 %v452, %v443
  %v534 = vpack.c.b16 %v453, %v444
  %v535 = vpack.c.b16 %v454, %v445
  %v536 = vpack.c.b16 %v455, %v446
  %v537 = vpack.c.b16 %v456, %v447
  %v538 = vpack.c.b16 %v457, %v448
  %v539 = vpack.c.b16 %v458, %v449
  %v540 = vpack.c.b16 %v459, %v450
  %v541 = vpack.c.b16 %v469, %v460
  %v542 = vpack.c.b16 %v470, %v461
  %v543 = vpack.c.b16 %v471, %v462
  %v544 = vpack.c.b16 %v472, %v463
  %v545 = vpack.c.b16 %v473, %v464
  %v546 = vpack.c.b16 %v474, %v465
  %v547 = vpack.c.b16 %v475, %v466
  %v548 = vpack.c.b16 %v476, %v467
  %v549 = vpack.c.b16 %v477, %v468
  %v766 = vunpack.c.l.b16 %v110
  %v767 = vunpack.c.l.b16 %v111
  %v768 = vunpack.c.l.b16 %v112
  %v769 = vunpack.c.l.b16 %v113
  %v770 = vunpack.c.l.b16 %v114
  %v771 = vunpack.c.l.b16 %v115
  %v772 = vunpack.c.l.b16 %v116
  %v773 = vunpack.c.l.b16 %v117
  %v774 = vunpack.c.l.b16 %v118
  %v775 = vunpack.c.l.b16 %v119
  %v776 = vunpack.c.l.b16 %v120
  %v777 = vunpack.c.l.b16 %v121
  %v778 = vunpack.c.l.b16 %v122
  %v779 = vunpack.c.l.b16 %v123
  %v780 = vunpack.c.l.b16 %v124
  %v781 = vunpack.c.l.b16 %v125
  %v782 = vunpack.c.l.b16 %v126
  %v783 = vunpack.c.l.b16 %v127
  %v784 = vunpack.c.l.b16 %v128
  %v785 = vunpack.c.l.b16 %v129
  %v786 = vunpack.c.l.b16 %v130
  %v787 = vunpack.c.l.b16 %v131
  %v788 = vunpack.c.l.b16 %v132
  %v789 = vunpack.c.l.b16 %v133
  %v790 = vunpack.c.l.b16 %v134
  %v791 = vunpack.c.l.b16 %v135
  %v792 = vunpack.c.l.b16 %v136
  %v793 = vunpack.c.l.b16 %v137
  %v794 = vunpack.c.l.b16 %v138
  %v795 = vunpack.c.l.b16 %v139
  %v796 = vunpack.c.l.b16 %v140
  %v797 = vunpack.c.l.b16 %v141
  %v798 = vunpack.c.l.b16 %v142
  %v799 = vunpack.c.l.b16 %v143
  %v800 = vunpack.c.l.b16 %v144
  %v801 = vunpack.c.l.b16 %v145
  %v802 = vunpack.c.l.b16 %v146
  %v803 = vunpack.c.l.b16 %v147
  %v804 = vunpack.c.l.b16 %v148
  %v805 = vunpack.c.l.b16 %v149
  %v806 = vunpack.c.l.b16 %v150
  %v807 = vunpack.c.l.b16 %v151
  %v808 = vunpack.c.l.b16 %v152
  %v809 = vunpack.c.l.b16 %v153
  %v810 = vunpack.c.l.b16 %v154
  %v811 = vunpack.c.l.b16 %v155
  %v812 = vunpack.c.l.b16 %v156
  %v813 = vunpack.c.l.b16 %v157
  %v814 = vunpack.c.l.b16 %v158
  %v815 = vunpack.c.l.b16 %v159
  %v816 = vunpack.c.l.b16 %v160
  %v817 = vunpack.c.l.b16 %v161
  %v818 = vunpack.c.l.b16 %v162
  %v819 = vunpack.c.l.b16 %v163
  %v820 = vunpack.c.l.b16 %v164
  %v821 = vunpack.c.l.b16 %v165
  %v822 = vunpack.c.l.b16 %v166
  %v823 = vunpack.c.l.b16 %v167
  %v824 = vunpack.c.l.b16 %v168
  %v825 = vunpack.c.l.b16 %v169
  %v826 = vunpack.c.l.b16 %v170
  %v827 = vunpack.c.l.b16 %v171
  %v828 = vunpack.c.l.b16 %v172
  %v829 = vunpack.c.l.b16 %v173
  %v830 = vunpack.c.l.b16 %v174
  %v831 = vunpack.c.l.b16 %v175
  %v832 = vunpack.c.l.b16 %v176
  %v833 = vunpack.c.l.b16 %v177
  %v834 = vunpack.c.l.b16 %v178
  %v835 = vunpack.c.l.b16 %v179
  %v836 = vunpack.c.l.b16 %v180
  %v837 = vunpack.c.l.b16 %v181
  %v838 = vunpack.c.l.b16 %v182
  %v839 = vunpack.c.l.b16 %v183
  %v840 = vunpack.c.l.b16 %v184
  %v841 = vunpack.c.l.b16 %v185
  %v842 = vunpack.c.l.b16 %v186
  %v843 = vunpack.c.l.b16 %v187
  %v844 = vunpack.c.l.b16 %v188
  %v845 = vunpack.c.l.b16 %v189
  %v846 = vunpack.c.l.b16 %v190
  %v847 = vunpack.c.l.b16 %v191
  %v848 = vunpack.c.l.b16 %v192
  %v849 = vunpack.c.l.b16 %v193
  %v850 = vunpack.c.l.b16 %v194
  %v851 = vunpack.c.l.b16 %v195
  %v852 = vunpack.c.l.b16 %v196
  %v853 = vunpack.c.l.b16 %v197
  %v854 = vunpack.c.l.b16 %v198
  %v855 = vunpack.c.l.b16 %v199
  %v856 = vunpack.c.l.b16 %v200
  %v857 = vunpack.c.l.b16 %v201
  %v858 = vunpack.c.l.b16 %v202
  %v859 = vunpack.c.l.b16 %v203
  %v860 = vunpack.c.l.b16 %v204
  %v861 = vunpack.c.l.b16 %v205
  %v862 = vunpack.c.l.b16 %v206
  %v863 = vunpack.c.l.b16 %v207
  %v864 = vunpack.c.l.b16 %v208
  %v865 = vunpack.c.l.b16 %v209
  %v866 = vunpack.c.l.b16 %v210
  %v867 = vunpack.c.l.b16 %v211
  %v868 = vunpack.c.l.b16 %v212
  %v869 = vunpack.c.l.b16 %v213
  %v870 = vunpack.c.l.b16 %v214
  %v871 = vunpack.c.l.b16 %v215
  %v872 = vunpack.c.l.b16 %v216
  %v873 = vunpack.c.l.b16 %v217
  %v874 = vunpack.c.l.b16 %v218
  %v875 = vunpack.c.l.b16 %v219
  %v876 = vunpack.c.l.b16 %v220
  %v877 = vunpack.c.l.b16 %v221
  %v878 = vunpack.c.l.b16 %v222
  %v879 = vunpack.c.l.b16 %v223
  %v880 = vunpack.c.l.b16 %v224
  %v881 = vunpack.c.l.b16 %v225
  %v882 = vunpack.c.l.b16 %v226
  %v883 = vunpack.c.l.b16 %v227
  %v884 = vunpack.c.l.b16 %v228
  %v885 = vunpack.c.l.b16 %v229
  %v886 = vunpack.c.l.b16 %v230
  %v887 = vunpack.c.l.b16 %v231
  %v888 = vunpack.c.l.b16 %v232
  %v889 = vunpack.c.l.b16 %v233
  %v890 = vunpack.c.l.b16 %v234
  %v891 = vunpack.c.l.b16 %v235
  %v892 = vunpack.c.l.b16 %v236
  %v893 = vunpack.c.l.b16 %v237
  %v894 = vunpack.c.l.b16 %v238
  %v895 = vunpack.c.l.b16 %v239
  %v896 = vunpack.c.l.b16 %v240
  %v897 = vunpack.c.l.b16 %v241
  %v898 = vunpack.c.l.b16 %v242
  %v899 = vunpack.c.l.b16 %v243
  %v900 = vunpack.c.l.b16 %v244
  %v901 = vunpack.c.l.b16 %v245
  %v902 = vunpack.c.l.b16 %v246
  %v903 = vunpack.c.l.b16 %v247
  %v904 = vunpack.c.l.b16 %v248
  %v905 = vunpack.c.l.b16 %v249
  %v906 = vunpack.c.l.b16 %v250
  %v907 = vunpack.c.l.b16 %v251
  %v908 = vunpack.c.l.b16 %v252
  %v909 = vunpack.c.l.b16 %v253
  %v910 = vpack.c.b16 %v767, %v766
  %v911 = vpack.c.b16 %v769, %v768
  %v912 = vpack.c.b16 %v771, %v770
  %v913 = vpack.c.b16 %v773, %v772
  %v914 = vpack.c.b16 %v775, %v774
  %v915 = vpack.c.b16 %v777, %v776
  %v916 = vpack.c.b16 %v779, %v778
  %v917 = vpack.c.b16 %v781, %v780
  %v918 = vpack.c.b16 %v783, %v782
  %v919 = vpack.c.b16 %v785, %v784
  %v920 = vpack.c.b16 %v787, %v786
  %v921 = vpack.c.b16 %v789, %v788
  %v922 = vpack.c.b16 %v791, %v790
  %v923 = vpack.c.b16 %v793, %v792
  %v924 = vpack.c.b16 %v795, %v794
  %v925 = vpack.c.b16 %v797, %v796
  %v926 = vpack.c.b16 %v799, %v798
  %v927 = vpack.c.b16 %v801, %v800
  %v928 = vpack.c.b16 %v803, %v802
  %v929 = vpack.c.b16 %v805, %v804
  %v930 = vpack.c.b16 %v807, %v806
  %v931 = vpack.c.b16 %v809, %v808
  %v932 = vpack.c.b16 %v811, %v810
  %v933 = vpack.c.b16 %v813, %v812
  %v934 = vpack.c.b16 %v815, %v814
  %v935 = vpack.c.b16 %v817, %v816
  %v936 = vpack.c.b16 %v819, %v818
  %v937 = vpack.c.b16 %v821, %v820
  %v938 = vpack.c.b16 %v823, %v822
  %v939 = vpack.c.b16 %v825, %v824
  %v940 = vpack.c.b16 %v827, %v826
  %v941 = vpack.c.b16 %v829, %v828
  %v942 = vpack.c.b16 %v831, %v830
  %v943 = vpack.c.b16 %v833, %v832
  %v944 = vpack.c.b16 %v835, %v834
  %v945 = vpack.c.b16 %v837, %v836
  %v946 = vpack.c.b16 %v839, %v838
  %v947 = vpack.c.b16 %v841, %v840
  %v948 = vpack.c.b16 %v843, %v842
  %v949 = vpack.c.b16 %v845, %v844
  %v950 = vpack.c.b16 %v847, %v846
  %v951 = vpack.c.b16 %v849, %v848
  %v952 = vpack.c.b16 %v851, %v850
  %v953 = vpack.c.b16 %v853, %v852
  %v954 = vpack.c.b16 %v855, %v854
  %v955 = vpack.c.b16 %v857, %v856
  %v956 = vpack.c.b16 %v859, %v858
  %v957 = vpack.c.b16 %v861, %v860
  %v958 = vpack.c.b16 %v863, %v862
  %v959 = vpack.c.b16 %v865, %v864
  %v960 = vpack.c.b16 %v867, %v866
  %v961 = vpack.c.b16 %v869, %v868
  %v962 = vpack.c.b16 %v871, %v870
  %v963 = vpack.c.b16 %v873, %v872
  %v964 = vpack.c.b16 %v875, %v874
  %v965 = vpack.c.b16 %v877, %v876
  %v966 = vpack.c.b16 %v879, %v878
  %v967 = vpack.c.b16 %v881, %v880
  %v968 = vpack.c.b16 %v883, %v882
  %v969 = vpack.c.b16 %v885, %v884
  %v970 = vpack.c.b16 %v887, %v886
  %v971 = vpack.c.b16 %v889, %v888
  %v972 = vpack.c.b16 %v891, %v890
  %v973 = vpack.c.b16 %v893, %v892
  %v974 = vpack.c.b16 %v895, %v894
  %v975 = vpack.c.b16 %v897, %v896
  %v976 = vpack.c.b16 %v899, %v898
  %v977 = vpack.c.b16 %v901, %v900
  %v978 = vpack.c.b16 %v903, %v902
  %v979 = vpack.c.b16 %v905, %v904
  %v980 = vpack.c.b16 %v907, %v906
  %v981 = vpack.c.b16 %v909, %v908
  %1054 = vmatprep.subr.bf16.mxu0 0
  %1055 = vmatpush1.bf16.msra.mxu0 %v910
  %1056 = vmatprep.subr.bf16.mxu0 0
  %1057 = vmatpush1.bf16.msra.mxu0 %v911
  %1058 = vmatprep.subr.bf16.mxu0 0
  %1059 = vmatpush1.bf16.msra.mxu0 %v912
  %1060 = vmatprep.subr.bf16.mxu0 0
  %1061 = vmatpush1.bf16.msra.mxu0 %v913
  %1062 = vmatprep.subr.bf16.mxu0 0
  %1063 = vmatpush1.bf16.msra.mxu0 %v914
  %1064 = vmatprep.subr.bf16.mxu0 0
  %1065 = vmatpush1.bf16.msra.mxu0 %v915
  %1066 = vmatprep.subr.bf16.mxu0 0
  %1067 = vmatpush1.bf16.msra.mxu0 %v916
  %1068 = vmatprep.subr.bf16.mxu0 0
  %1069 = vmatpush1.bf16.msra.mxu0 %v917
  %1070 = vmatprep.subr.bf16.mxu0 0
  %1071 = vmatpush1.bf16.msra.mxu0 %v918
  %1072 = vmatprep.subr.bf16.mxu0 0
  %1073 = vmatpush1.bf16.msra.mxu0 %v919
  %1074 = vmatprep.subr.bf16.mxu0 0
  %1075 = vmatpush1.bf16.msra.mxu0 %v920
  %1076 = vmatprep.subr.bf16.mxu0 0
  %1077 = vmatpush1.bf16.msra.mxu0 %v921
  %1078 = vmatprep.subr.bf16.mxu0 0
  %1079 = vmatpush1.bf16.msra.mxu0 %v922
  %1080 = vmatprep.subr.bf16.mxu0 0
  %1081 = vmatpush1.bf16.msra.mxu0 %v923
  %1082 = vmatprep.subr.bf16.mxu0 0
  %1083 = vmatpush1.bf16.msra.mxu0 %v924
  %1084 = vmatprep.subr.bf16.mxu0 0
  %1085 = vmatpush1.bf16.msra.mxu0 %v925
  %1086 = vmatprep.mubr.bf16.mxu0 %v479
  %1087 = vmatmul.mubr.bf16.gmra.mrb[0].mxu0 %v478
  %v1088 = vpop.f32.mrb[0].mxu0
  %v1089 = vadd.f32 0.0, %v1088
  %v1090 = vpop.f32.mrb[0].mxu0
  %v1091 = vpop.f32.mrb[0].mxu0
  %v1092 = vadd.f32 0.0, %v1091
  %v1093 = vpop.f32.mrb[0].mxu0
  %1094 = vmatprep.mubr.bf16.mxu0 %v488
  %1095 = vmatmul.mubr.bf16.gmra.mrb[0].mxu0 %v487
  %v1096 = vpop.f32.mrb[0].mxu0
  %v1097 = vadd.f32 0.0, %v1096
  %v1098 = vpop.f32.mrb[0].mxu0
  %v1099 = vpop.f32.mrb[0].mxu0
  %v1100 = vadd.f32 0.0, %v1099
  %v1101 = vpop.f32.mrb[0].mxu0
  %1102 = vmatprep.mubr.bf16.mxu0 %v497
  %1103 = vmatmul.mubr.bf16.gmra.mrb[0].mxu0 %v496
  %v1104 = vpop.f32.mrb[0].mxu0
  %v1105 = vadd.f32 0.0, %v1104
  %v1106 = vpop.f32.mrb[0].mxu0
  %v1107 = vpop.f32.mrb[0].mxu0
  %v1108 = vadd.f32 0.0, %v1107
  %v1109 = vpop.f32.mrb[0].mxu0
  %1110 = vmatprep.mubr.bf16.mxu0 %v506
  %1111 = vmatmul.mubr.bf16.gmra.mrb[0].mxu0 %v505
  %v1112 = vpop.f32.mrb[0].mxu0
  %v1113 = vadd.f32 0.0, %v1112
  %v1114 = vpop.f32.mrb[0].mxu0
  %v1115 = vpop.f32.mrb[0].mxu0
  %v1116 = vadd.f32 0.0, %v1115
  %v1117 = vpop.f32.mrb[0].mxu0
  %1118 = vmatprep.mubr.bf16.mxu0 %v515
  %1119 = vmatmul.mubr.bf16.gmra.mrb[0].mxu0 %v514
  %v1120 = vpop.f32.mrb[0].mxu0
  %v1121 = vadd.f32 0.0, %v1120
  %v1122 = vpop.f32.mrb[0].mxu0
  %v1123 = vpop.f32.mrb[0].mxu0
  %v1124 = vadd.f32 0.0, %v1123
  %v1125 = vpop.f32.mrb[0].mxu0
  %1126 = vmatprep.mubr.bf16.mxu0 %v524
  %1127 = vmatmul.mubr.bf16.gmra.mrb[0].mxu0 %v523
  %v1128 = vpop.f32.mrb[0].mxu0
  %v1129 = vadd.f32 0.0, %v1128
  %v1130 = vpop.f32.mrb[0].mxu0
  %v1131 = vpop.f32.mrb[0].mxu0
  %v1132 = vadd.f32 0.0, %v1131
  %v1133 = vpop.f32.mrb[0].mxu0
  %1134 = vmatprep.mubr.bf16.mxu0 %v533
  %1135 = vmatmul.mubr.bf16.gmra.mrb[0].mxu0 %v532
  %v1136 = vpop.f32.mrb[0].mxu0
  %v1137 = vadd.f32 0.0, %v1136
  %v1138 = vpop.f32.mrb[0].mxu0
  %v1139 = vpop.f32.mrb[0].mxu0
  %v1140 = vadd.f32 0.0, %v1139
  %v1141 = vpop.f32.mrb[0].mxu0
  %1142 = vmatprep.mubr.bf16.mxu0 %v542
  %1143 = vmatmul.mubr.bf16.gmra.mrb[0].mxu0 %v541
  %v1144 = vpop.f32.mrb[0].mxu0
  %v1145 = vadd.f32 0.0, %v1144
  %v1146 = vpop.f32.mrb[0].mxu0
  %v1147 = vpop.f32.mrb[0].mxu0
  %v1148 = vadd.f32 0.0, %v1147
  %v1149 = vpop.f32.mrb[0].mxu0
  %1150 = vdwg.mxu0
  %1151 = vmatprep.subr.bf16.mxu0 0
  %1152 = vmatpush1.bf16.msra.mxu0 %v926
  %1153 = vmatprep.subr.bf16.mxu0 0
  %1154 = vmatpush1.bf16.msra.mxu0 %v927
  %1155 = vmatprep.subr.bf16.mxu0 0
  %1156 = vmatpush1.bf16.msra.mxu0 %v928
  %1157 = vmatprep.subr.bf16.mxu0 0
  %1158 = vmatpush1.bf16.msra.mxu0 %v929
  %1159 = vmatprep.subr.bf16.mxu0 0
  %1160 = vmatpush1.bf16.msra.mxu0 %v930
  %1161 = vmatprep.subr.bf16.mxu0 0
  %1162 = vmatpush1.bf16.msra.mxu0 %v931
  %1163 = vmatprep.subr.bf16.mxu0 0
  %1164 = vmatpush1.bf16.msra.mxu0 %v932
  %1165 = vmatprep.subr.bf16.mxu0 0
  %1166 = vmatpush1.bf16.msra.mxu0 %v933
  %1167 = vmatprep.subr.bf16.mxu0 0
  %1168 = vmatpush1.bf16.msra.mxu0 %v934
  %1169 = vmatprep.subr.bf16.mxu0 0
  %1170 = vmatpush1.bf16.msra.mxu0 %v935
  %1171 = vmatprep.subr.bf16.mxu0 0
  %1172 = vmatpush1.bf16.msra.mxu0 %v936
  %1173 = vmatprep.subr.bf16.mxu0 0
  %1174 = vmatpush1.bf16.msra.mxu0 %v937
  %1175 = vmatprep.subr.bf16.mxu0 0
  %1176 = vmatpush1.bf16.msra.mxu0 %v938
  %1177 = vmatprep.subr.bf16.mxu0 0
  %1178 = vmatpush1.bf16.msra.mxu0 %v939
  %1179 = vmatprep.subr.bf16.mxu0 0
  %1180 = vmatpush1.bf16.msra.mxu0 %v940
  %1181 = vmatprep.subr.bf16.mxu0 0
  %1182 = vmatpush1.bf16.msra.mxu0 %v941
  %1183 = vmatprep.mubr.bf16.mxu0 %v481
  %1184 = vmatmul.mubr.bf16.gmra.mrb[0].mxu0 %v480
  %v1185 = vpop.f32.mrb[0].mxu0
  %v1186 = vadd.f32 %v1089, %v1185
  %v1187 = vpop.f32.mrb[0].mxu0
  %v1188 = vpop.f32.mrb[0].mxu0
  %v1189 = vadd.f32 %v1092, %v1188
  %v1190 = vpop.f32.mrb[0].mxu0
  %1191 = vmatprep.mubr.bf16.mxu0 %v490
  %1192 = vmatmul.mubr.bf16.gmra.mrb[0].mxu0 %v489
  %v1193 = vpop.f32.mrb[0].mxu0
  %v1194 = vadd.f32 %v1097, %v1193
  %v1195 = vpop.f32.mrb[0].mxu0
  %v1196 = vpop.f32.mrb[0].mxu0
  %v1197 = vadd.f32 %v1100, %v1196
  %v1198 = vpop.f32.mrb[0].mxu0
  %1199 = vmatprep.mubr.bf16.mxu0 %v499
  %1200 = vmatmul.mubr.bf16.gmra.mrb[0].mxu0 %v498
  %v1201 = vpop.f32.mrb[0].mxu0
  %v1202 = vadd.f32 %v1105, %v1201
  %v1203 = vpop.f32.mrb[0].mxu0
  %v1204 = vpop.f32.mrb[0].mxu0
  %v1205 = vadd.f32 %v1108, %v1204
  %v1206 = vpop.f32.mrb[0].mxu0
  %1207 = vmatprep.mubr.bf16.mxu0 %v508
  %1208 = vmatmul.mubr.bf16.gmra.mrb[0].mxu0 %v507
  %v1209 = vpop.f32.mrb[0].mxu0
  %v1210 = vadd.f32 %v1113, %v1209
  %v1211 = vpop.f32.mrb[0].mxu0
  %v1212 = vpop.f32.mrb[0].mxu0
  %v1213 = vadd.f32 %v1116, %v1212
  %v1214 = vpop.f32.mrb[0].mxu0
  %1215 = vmatprep.mubr.bf16.mxu0 %v517
  %1216 = vmatmul.mubr.bf16.gmra.mrb[0].mxu0 %v516
  %v1217 = vpop.f32.mrb[0].mxu0
  %v1218 = vadd.f32 %v1121, %v1217
  %v1219 = vpop.f32.mrb[0].mxu0
  %v1220 = vpop.f32.mrb[0].mxu0
  %v1221 = vadd.f32 %v1124, %v1220
  %v1222 = vpop.f32.mrb[0].mxu0
  %1223 = vmatprep.mubr.bf16.mxu0 %v526
  %1224 = vmatmul.mubr.bf16.gmra.mrb[0].mxu0 %v525
  %v1225 = vpop.f32.mrb[0].mxu0
  %v1226 = vadd.f32 %v1129, %v1225
  %v1227 = vpop.f32.mrb[0].mxu0
  %v1228 = vpop.f32.mrb[0].mxu0
  %v1229 = vadd.f32 %v1132, %v1228
  %v1230 = vpop.f32.mrb[0].mxu0
  %1231 = vmatprep.mubr.bf16.mxu0 %v535
  %1232 = vmatmul.mubr.bf16.gmra.mrb[0].mxu0 %v534
  %v1233 = vpop.f32.mrb[0].mxu0
  %v1234 = vadd.f32 %v1137, %v1233
  %v1235 = vpop.f32.mrb[0].mxu0
  %v1236 = vpop.f32.mrb[0].mxu0
  %v1237 = vadd.f32 %v1140, %v1236
  %v1238 = vpop.f32.mrb[0].mxu0
  %1239 = vmatprep.mubr.bf16.mxu0 %v544
  %1240 = vmatmul.mubr.bf16.gmra.mrb[0].mxu0 %v543
  %v1241 = vpop.f32.mrb[0].mxu0
  %v1242 = vadd.f32 %v1145, %v1241
  %v1243 = vpop.f32.mrb[0].mxu0
  %v1244 = vpop.f32.mrb[0].mxu0
  %v1245 = vadd.f32 %v1148, %v1244
  %v1246 = vpop.f32.mrb[0].mxu0
  %1247 = vdwg.mxu0
  %1248 = vmatprep.subr.bf16.mxu0 0
  %1249 = vmatpush1.bf16.msra.mxu0 %v942
  %1250 = vmatprep.subr.bf16.mxu0 0
  %1251 = vmatpush1.bf16.msra.mxu0 %v943
  %1252 = vmatprep.subr.bf16.mxu0 0
  %1253 = vmatpush1.bf16.msra.mxu0 %v944
  %1254 = vmatprep.subr.bf16.mxu0 0
  %1255 = vmatpush1.bf16.msra.mxu0 %v945
  %1256 = vmatprep.subr.bf16.mxu0 0
  %1257 = vmatpush1.bf16.msra.mxu0 %v946
  %1258 = vmatprep.subr.bf16.mxu0 0
  %1259 = vmatpush1.bf16.msra.mxu0 %v947
  %1260 = vmatprep.subr.bf16.mxu0 0
  %1261 = vmatpush1.bf16.msra.mxu0 %v948
  %1262 = vmatprep.subr.bf16.mxu0 0
  %1263 = vmatpush1.bf16.msra.mxu0 %v949
  %1264 = vmatprep.subr.bf16.mxu0 0
  %1265 = vmatpush1.bf16.msra.mxu0 %v950
  %1266 = vmatprep.subr.bf16.mxu0 0
  %1267 = vmatpush1.bf16.msra.mxu0 %v951
  %1268 = vmatprep.subr.bf16.mxu0 0
  %1269 = vmatpush1.bf16.msra.mxu0 %v952
  %1270 = vmatprep.subr.bf16.mxu0 0
  %1271 = vmatpush1.bf16.msra.mxu0 %v953
  %1272 = vmatprep.subr.bf16.mxu0 0
  %1273 = vmatpush1.bf16.msra.mxu0 %v954
  %1274 = vmatprep.subr.bf16.mxu0 0
  %1275 = vmatpush1.bf16.msra.mxu0 %v955
  %1276 = vmatprep.subr.bf16.mxu0 0
  %1277 = vmatpush1.bf16.msra.mxu0 %v956
  %1278 = vmatprep.subr.bf16.mxu0 0
  %1279 = vmatpush1.bf16.msra.mxu0 %v957
  %1280 = vmatprep.mubr.bf16.mxu0 %v483
  %1281 = vmatmul.mubr.bf16.gmra.mrb[0].mxu0 %v482
  %v1282 = vpop.f32.mrb[0].mxu0
  %v1283 = vadd.f32 %v1186, %v1282
  %v1284 = vpop.f32.mrb[0].mxu0
  %v1285 = vpop.f32.mrb[0].mxu0
  %v1286 = vadd.f32 %v1189, %v1285
  %v1287 = vpop.f32.mrb[0].mxu0
  %1288 = vmatprep.mubr.bf16.mxu0 %v492
  %1289 = vmatmul.mubr.bf16.gmra.mrb[0].mxu0 %v491
  %v1290 = vpop.f32.mrb[0].mxu0
  %v1291 = vadd.f32 %v1194, %v1290
  %v1292 = vpop.f32.mrb[0].mxu0
  %v1293 = vpop.f32.mrb[0].mxu0
  %v1294 = vadd.f32 %v1197, %v1293
  %v1295 = vpop.f32.mrb[0].mxu0
  %1296 = vmatprep.mubr.bf16.mxu0 %v501
  %1297 = vmatmul.mubr.bf16.gmra.mrb[0].mxu0 %v500
  %v1298 = vpop.f32.mrb[0].mxu0
  %v1299 = vadd.f32 %v1202, %v1298
  %v1300 = vpop.f32.mrb[0].mxu0
  %v1301 = vpop.f32.mrb[0].mxu0
  %v1302 = vadd.f32 %v1205, %v1301
  %v1303 = vpop.f32.mrb[0].mxu0
  %1304 = vmatprep.mubr.bf16.mxu0 %v510
  %1305 = vmatmul.mubr.bf16.gmra.mrb[0].mxu0 %v509
  %v1306 = vpop.f32.mrb[0].mxu0
  %v1307 = vadd.f32 %v1210, %v1306
  %v1308 = vpop.f32.mrb[0].mxu0
  %v1309 = vpop.f32.mrb[0].mxu0
  %v1310 = vadd.f32 %v1213, %v1309
  %v1311 = vpop.f32.mrb[0].mxu0
  %1312 = vmatprep.mubr.bf16.mxu0 %v519
  %1313 = vmatmul.mubr.bf16.gmra.mrb[0].mxu0 %v518
  %v1314 = vpop.f32.mrb[0].mxu0
  %v1315 = vadd.f32 %v1218, %v1314
  %v1316 = vpop.f32.mrb[0].mxu0
  %v1317 = vpop.f32.mrb[0].mxu0
  %v1318 = vadd.f32 %v1221, %v1317
  %v1319 = vpop.f32.mrb[0].mxu0
  %1320 = vmatprep.mubr.bf16.mxu0 %v528
  %1321 = vmatmul.mubr.bf16.gmra.mrb[0].mxu0 %v527
  %v1322 = vpop.f32.mrb[0].mxu0
  %v1323 = vadd.f32 %v1226, %v1322
  %v1324 = vpop.f32.mrb[0].mxu0
  %v1325 = vpop.f32.mrb[0].mxu0
  %v1326 = vadd.f32 %v1229, %v1325
  %v1327 = vpop.f32.mrb[0].mxu0
  %1328 = vmatprep.mubr.bf16.mxu0 %v537
  %1329 = vmatmul.mubr.bf16.gmra.mrb[0].mxu0 %v536
  %v1330 = vpop.f32.mrb[0].mxu0
  %v1331 = vadd.f32 %v1234, %v1330
  %v1332 = vpop.f32.mrb[0].mxu0
  %v1333 = vpop.f32.mrb[0].mxu0
  %v1334 = vadd.f32 %v1237, %v1333
  %v1335 = vpop.f32.mrb[0].mxu0
  %1336 = vmatprep.mubr.bf16.mxu0 %v546
  %1337 = vmatmul.mubr.bf16.gmra.mrb[0].mxu0 %v545
  %v1338 = vpop.f32.mrb[0].mxu0
  %v1339 = vadd.f32 %v1242, %v1338
  %v1340 = vpop.f32.mrb[0].mxu0
  %v1341 = vpop.f32.mrb[0].mxu0
  %v1342 = vadd.f32 %v1245, %v1341
  %v1343 = vpop.f32.mrb[0].mxu0
  %1344 = vdwg.mxu0
  %1345 = vmatprep.subr.bf16.mxu0 0
  %1346 = vmatpush1.bf16.msra.mxu0 %v958
  %1347 = vmatprep.subr.bf16.mxu0 0
  %1348 = vmatpush1.bf16.msra.mxu0 %v959
  %1349 = vmatprep.subr.bf16.mxu0 0
  %1350 = vmatpush1.bf16.msra.mxu0 %v960
  %1351 = vmatprep.subr.bf16.mxu0 0
  %1352 = vmatpush1.bf16.msra.mxu0 %v961
  %1353 = vmatprep.subr.bf16.mxu0 0
  %1354 = vmatpush1.bf16.msra.mxu0 %v962
  %1355 = vmatprep.subr.bf16.mxu0 0
  %1356 = vmatpush1.bf16.msra.mxu0 %v963
  %1357 = vmatprep.subr.bf16.mxu0 0
  %1358 = vmatpush1.bf16.msra.mxu0 %v964
  %1359 = vmatprep.subr.bf16.mxu0 0
  %1360 = vmatpush1.bf16.msra.mxu0 %v965
  %1361 = vmatprep.subr.bf16.mxu0 0
  %1362 = vmatpush1.bf16.msra.mxu0 %v966
  %1363 = vmatprep.subr.bf16.mxu0 0
  %1364 = vmatpush1.bf16.msra.mxu0 %v967
  %1365 = vmatprep.subr.bf16.mxu0 0
  %1366 = vmatpush1.bf16.msra.mxu0 %v968
  %1367 = vmatprep.subr.bf16.mxu0 0
  %1368 = vmatpush1.bf16.msra.mxu0 %v969
  %1369 = vmatprep.subr.bf16.mxu0 0
  %1370 = vmatpush1.bf16.msra.mxu0 %v970
  %1371 = vmatprep.subr.bf16.mxu0 0
  %1372 = vmatpush1.bf16.msra.mxu0 %v971
  %1373 = vmatprep.subr.bf16.mxu0 0
  %1374 = vmatpush1.bf16.msra.mxu0 %v972
  %1375 = vmatprep.subr.bf16.mxu0 0
  %1376 = vmatpush1.bf16.msra.mxu0 %v973
  %1377 = vmatprep.mubr.bf16.mxu0 %v485
  %1378 = vmatmul.mubr.bf16.gmra.mrb[0].mxu0 %v484
  %v1379 = vpop.f32.mrb[0].mxu0
  %v1380 = vadd.f32 %v1283, %v1379
  %v1381 = vpop.f32.mrb[0].mxu0
  %v1382 = vpop.f32.mrb[0].mxu0
  %v1383 = vadd.f32 %v1286, %v1382
  %v1384 = vpop.f32.mrb[0].mxu0
  %1385 = vmatprep.mubr.bf16.mxu0 %v494
  %1386 = vmatmul.mubr.bf16.gmra.mrb[0].mxu0 %v493
  %v1387 = vpop.f32.mrb[0].mxu0
  %v1388 = vadd.f32 %v1291, %v1387
  %v1389 = vpop.f32.mrb[0].mxu0
  %v1390 = vpop.f32.mrb[0].mxu0
  %v1391 = vadd.f32 %v1294, %v1390
  %v1392 = vpop.f32.mrb[0].mxu0
  %1393 = vmatprep.mubr.bf16.mxu0 %v503
  %1394 = vmatmul.mubr.bf16.gmra.mrb[0].mxu0 %v502
  %v1395 = vpop.f32.mrb[0].mxu0
  %v1396 = vadd.f32 %v1299, %v1395
  %v1397 = vpop.f32.mrb[0].mxu0
  %v1398 = vpop.f32.mrb[0].mxu0
  %v1399 = vadd.f32 %v1302, %v1398
  %v1400 = vpop.f32.mrb[0].mxu0
  %1401 = vmatprep.mubr.bf16.mxu0 %v512
  %1402 = vmatmul.mubr.bf16.gmra.mrb[0].mxu0 %v511
  %v1403 = vpop.f32.mrb[0].mxu0
  %v1404 = vadd.f32 %v1307, %v1403
  %v1405 = vpop.f32.mrb[0].mxu0
  %v1406 = vpop.f32.mrb[0].mxu0
  %v1407 = vadd.f32 %v1310, %v1406
  %v1408 = vpop.f32.mrb[0].mxu0
  %1409 = vmatprep.mubr.bf16.mxu0 %v521
  %1410 = vmatmul.mubr.bf16.gmra.mrb[0].mxu0 %v520
  %v1411 = vpop.f32.mrb[0].mxu0
  %v1412 = vadd.f32 %v1315, %v1411
  %v1413 = vpop.f32.mrb[0].mxu0
  %v1414 = vpop.f32.mrb[0].mxu0
  %v1415 = vadd.f32 %v1318, %v1414
  %v1416 = vpop.f32.mrb[0].mxu0
  %1417 = vmatprep.mubr.bf16.mxu0 %v530
  %1418 = vmatmul.mubr.bf16.gmra.mrb[0].mxu0 %v529
  %v1419 = vpop.f32.mrb[0].mxu0
  %v1420 = vadd.f32 %v1323, %v1419
  %v1421 = vpop.f32.mrb[0].mxu0
  %v1422 = vpop.f32.mrb[0].mxu0
  %v1423 = vadd.f32 %v1326, %v1422
  %v1424 = vpop.f32.mrb[0].mxu0
  %1425 = vmatprep.mubr.bf16.mxu0 %v539
  %1426 = vmatmul.mubr.bf16.gmra.mrb[0].mxu0 %v538
  %v1427 = vpop.f32.mrb[0].mxu0
  %v1428 = vadd.f32 %v1331, %v1427
  %v1429 = vpop.f32.mrb[0].mxu0
  %v1430 = vpop.f32.mrb[0].mxu0
  %v1431 = vadd.f32 %v1334, %v1430
  %v1432 = vpop.f32.mrb[0].mxu0
  %1433 = vmatprep.mubr.bf16.mxu0 %v548
  %1434 = vmatmul.mubr.bf16.gmra.mrb[0].mxu0 %v547
  %v1435 = vpop.f32.mrb[0].mxu0
  %v1436 = vadd.f32 %v1339, %v1435
  %v1437 = vpop.f32.mrb[0].mxu0
  %v1438 = vpop.f32.mrb[0].mxu0
  %v1439 = vadd.f32 %v1342, %v1438
  %v1440 = vpop.f32.mrb[0].mxu0
  %1441 = vdwg.mxu0
  %1442 = vmatprep.subr.bf16.mxu0 0
  %1443 = vmatpush1.bf16.msra.mxu0 %v974
  %1444 = vmatprep.subr.bf16.mxu0 0
  %1445 = vmatpush1.bf16.msra.mxu0 %v975
  %1446 = vmatprep.subr.bf16.mxu0 0
  %1447 = vmatpush1.bf16.msra.mxu0 %v976
  %1448 = vmatprep.subr.bf16.mxu0 0
  %1449 = vmatpush1.bf16.msra.mxu0 %v977
  %1450 = vmatprep.subr.bf16.mxu0 0
  %1451 = vmatpush1.bf16.msra.mxu0 %v978
  %1452 = vmatprep.subr.bf16.mxu0 0
  %1453 = vmatpush1.bf16.msra.mxu0 %v979
  %1454 = vmatprep.subr.bf16.mxu0 0
  %1455 = vmatpush1.bf16.msra.mxu0 %v980
  %1456 = vmatprep.subr.bf16.mxu0 0
  %1457 = vmatpush1.bf16.msra.mxu0 %v981
  %1458 = vmatprep.subr.bf16.mxu0 0
  %1459 = vmatpush1.bf16.msra.mxu0 0
  %1460 = vmatprep.subr.bf16.mxu0 0
  %1461 = vmatpush1.bf16.msra.mxu0 0
  %1462 = vmatprep.subr.bf16.mxu0 0
  %1463 = vmatpush1.bf16.msra.mxu0 0
  %1464 = vmatprep.subr.bf16.mxu0 0
  %1465 = vmatpush1.bf16.msra.mxu0 0
  %1466 = vmatprep.subr.bf16.mxu0 0
  %1467 = vmatpush1.bf16.msra.mxu0 0
  %1468 = vmatprep.subr.bf16.mxu0 0
  %1469 = vmatpush1.bf16.msra.mxu0 0
  %1470 = vmatprep.subr.bf16.mxu0 0
  %1471 = vmatpush1.bf16.msra.mxu0 0
  %1472 = vmatprep.subr.bf16.mxu0 0
  %1473 = vmatpush1.bf16.msra.mxu0 0
  %1474 = vmatprep.mubr.bf16.mxu0 0
  %1475 = vmatmul.mubr.bf16.gmra.mrb[0].mxu0 %v486
  %v1476 = vpop.f32.mrb[0].mxu0
  %v1477 = vadd.f32 %v1380, %v1476
  %v1478 = vpop.f32.mrb[0].mxu0
  %v1479 = vpop.f32.mrb[0].mxu0
  %v1480 = vadd.f32 %v1383, %v1479
  %v1481 = vpop.f32.mrb[0].mxu0
  %1482 = vmatprep.mubr.bf16.mxu0 0
  %1483 = vmatmul.mubr.bf16.gmra.mrb[0].mxu0 %v495
  %v1484 = vpop.f32.mrb[0].mxu0
  %v1485 = vadd.f32 %v1388, %v1484
  %v1486 = vpop.f32.mrb[0].mxu0
  %v1487 = vpop.f32.mrb[0].mxu0
  %v1488 = vadd.f32 %v1391, %v1487
  %v1489 = vpop.f32.mrb[0].mxu0
  %1490 = vmatprep.mubr.bf16.mxu0 0
  %1491 = vmatmul.mubr.bf16.gmra.mrb[0].mxu0 %v504
  %v1492 = vpop.f32.mrb[0].mxu0
  %v1493 = vadd.f32 %v1396, %v1492
  %v1494 = vpop.f32.mrb[0].mxu0
  %v1495 = vpop.f32.mrb[0].mxu0
  %v1496 = vadd.f32 %v1399, %v1495
  %v1497 = vpop.f32.mrb[0].mxu0
  %1498 = vmatprep.mubr.bf16.mxu0 0
  %1499 = vmatmul.mubr.bf16.gmra.mrb[0].mxu0 %v513
  %v1500 = vpop.f32.mrb[0].mxu0
  %v1501 = vadd.f32 %v1404, %v1500
  %v1502 = vpop.f32.mrb[0].mxu0
  %v1503 = vpop.f32.mrb[0].mxu0
  %v1504 = vadd.f32 %v1407, %v1503
  %v1505 = vpop.f32.mrb[0].mxu0
  %1506 = vmatprep.mubr.bf16.mxu0 0
  %1507 = vmatmul.mubr.bf16.gmra.mrb[0].mxu0 %v522
  %v1508 = vpop.f32.mrb[0].mxu0
  %v1509 = vadd.f32 %v1412, %v1508
  %v1510 = vpop.f32.mrb[0].mxu0
  %v1511 = vpop.f32.mrb[0].mxu0
  %v1512 = vadd.f32 %v1415, %v1511
  %v1513 = vpop.f32.mrb[0].mxu0
  %1514 = vmatprep.mubr.bf16.mxu0 0
  %1515 = vmatmul.mubr.bf16.gmra.mrb[0].mxu0 %v531
  %v1516 = vpop.f32.mrb[0].mxu0
  %v1517 = vadd.f32 %v1420, %v1516
  %v1518 = vpop.f32.mrb[0].mxu0
  %v1519 = vpop.f32.mrb[0].mxu0
  %v1520 = vadd.f32 %v1423, %v1519
  %v1521 = vpop.f32.mrb[0].mxu0
  %1522 = vmatprep.mubr.bf16.mxu0 0
  %1523 = vmatmul.mubr.bf16.gmra.mrb[0].mxu0 %v540
  %v1524 = vpop.f32.mrb[0].mxu0
  %v1525 = vadd.f32 %v1428, %v1524
  %v1526 = vpop.f32.mrb[0].mxu0
  %v1527 = vpop.f32.mrb[0].mxu0
  %v1528 = vadd.f32 %v1431, %v1527
  %v1529 = vpop.f32.mrb[0].mxu0
  %1530 = vmatprep.mubr.bf16.mxu0 0
  %1531 = vmatmul.mubr.bf16.gmra.mrb[0].mxu0 %v549
  %v1532 = vpop.f32.mrb[0].mxu0
  %v1533 = vadd.f32 %v1436, %v1532
  %v1534 = vpop.f32.mrb[0].mxu0
  %v1535 = vpop.f32.mrb[0].mxu0
  %v1536 = vadd.f32 %v1439, %v1535
  %v1537 = vpop.f32.mrb[0].mxu0
  %1538 = vdwg.mxu0
  %v1539 = vld [vmem:[%s2] sm:$0x1]
  %v1541 = vlaneseq
  %v1542 = vshrl.u32 %v1541, 7
  %v1543 = vsub.s32 0, %v1542
  %v1544 = vrot.slane %v1539, %v1543
  %v1546 = vmul.f32 %v1477, %v1544
  %v1547 = vmul.f32 %v1480, %v1544
  %v1548 = vmul.f32 %v1485, %v1544
  %v1549 = vmul.f32 %v1488, %v1544
  %v1550 = vmul.f32 %v1493, %v1544
  %v1551 = vmul.f32 %v1496, %v1544
  %v1552 = vmul.f32 %v1501, %v1544
  %v1553 = vmul.f32 %v1504, %v1544
  %v1554 = vmul.f32 %v1509, %v1544
  %v1555 = vmul.f32 %v1512, %v1544
  %v1556 = vmul.f32 %v1517, %v1544
  %v1557 = vmul.f32 %v1520, %v1544
  %v1558 = vmul.f32 %v1525, %v1544
  %v1559 = vmul.f32 %v1528, %v1544
  %v1560 = vmul.f32 %v1533, %v1544
  %v1561 = vmul.f32 %v1536, %v1544
  %v1562 = vld [vmem:[%s3] sm:$0x1]
  %v1564 = vlaneseq
  %v1565 = vshrl.u32 %v1564, 7
  %v1566 = vsub.s32 0, %v1565
  %v1567 = vrot.slane %v1562, %v1566
  %v1569 = vadd.f32 %v1546, %v1567
  %v1570 = vadd.f32 %v1547, %v1567
  %v1571 = vadd.f32 %v1548, %v1567
  %v1572 = vadd.f32 %v1549, %v1567
  %v1573 = vadd.f32 %v1550, %v1567
  %v1574 = vadd.f32 %v1551, %v1567
  %v1575 = vadd.f32 %v1552, %v1567
  %v1576 = vadd.f32 %v1553, %v1567
  %v1577 = vadd.f32 %v1554, %v1567
  %v1578 = vadd.f32 %v1555, %v1567
  %v1579 = vadd.f32 %v1556, %v1567
  %v1580 = vadd.f32 %v1557, %v1567
  %v1581 = vadd.f32 %v1558, %v1567
  %v1582 = vadd.f32 %v1559, %v1567
  %v1583 = vadd.f32 %v1560, %v1567
  %v1584 = vadd.f32 %v1561, %v1567
  %v1585 = vld [vmem:[%s4] sm:$0xf]
  %v1586 = vld [vmem:[%s4 + $0x4] sm:$0xf]
  %v1587 = vld [vmem:[%s4 + $0x8] sm:$0xf]
  %v1588 = vld [vmem:[%s4 + $0xc] sm:$0xf]
  %v1589 = vld [vmem:[%s4 + $0x10] sm:$0xf]
  %v1590 = vld [vmem:[%s4 + $0x14] sm:$0xf]
  %v1591 = vld [vmem:[%s4 + $0x18] sm:$0xf]
  %v1592 = vld [vmem:[%s4 + $0x1c] sm:$0xf]
  %v1593 = vld [vmem:[%s4 + $0x20] sm:$0xf]
  %v1594 = vld [vmem:[%s4 + $0x24] sm:$0xf]
  %v1595 = vld [vmem:[%s4 + $0x28] sm:$0xf]
  %v1596 = vld [vmem:[%s4 + $0x2c] sm:$0xf]
  %v1597 = vld [vmem:[%s4 + $0x30] sm:$0xf]
  %v1598 = vld [vmem:[%s4 + $0x34] sm:$0xf]
  %v1599 = vld [vmem:[%s4 + $0x38] sm:$0xf]
  %v1600 = vld [vmem:[%s4 + $0x3c] sm:$0xf]
  %v1601 = vld [vmem:[%s5] sm:$0xf]
  %v1602 = vld [vmem:[%s5 + $0x4] sm:$0xf]
  %v1603 = vld [vmem:[%s5 + $0x8] sm:$0xf]
  %v1604 = vld [vmem:[%s5 + $0xc] sm:$0xf]
  %v1605 = vld [vmem:[%s5 + $0x10] sm:$0xf]
  %v1606 = vld [vmem:[%s5 + $0x14] sm:$0xf]
  %v1607 = vld [vmem:[%s5 + $0x18] sm:$0xf]
  %v1608 = vld [vmem:[%s5 + $0x1c] sm:$0xf]
  %v1609 = vld [vmem:[%s5 + $0x20] sm:$0xf]
  %v1610 = vld [vmem:[%s5 + $0x24] sm:$0xf]
  %v1611 = vld [vmem:[%s5 + $0x28] sm:$0xf]
  %v1612 = vld [vmem:[%s5 + $0x2c] sm:$0xf]
  %v1613 = vld [vmem:[%s5 + $0x30] sm:$0xf]
  %v1614 = vld [vmem:[%s5 + $0x34] sm:$0xf]
  %v1615 = vld [vmem:[%s5 + $0x38] sm:$0xf]
  %v1616 = vld [vmem:[%s5 + $0x3c] sm:$0xf]
  %v1633 = vunpack.c.l.b16 %v1585
  %v1634 = vunpack.c.l.b16 %v1586
  %v1635 = vunpack.c.l.b16 %v1587
  %v1636 = vunpack.c.l.b16 %v1588
  %v1637 = vunpack.c.l.b16 %v1589
  %v1638 = vunpack.c.l.b16 %v1590
  %v1639 = vunpack.c.l.b16 %v1591
  %v1640 = vunpack.c.l.b16 %v1592
  %v1641 = vunpack.c.l.b16 %v1593
  %v1642 = vunpack.c.l.b16 %v1594
  %v1643 = vunpack.c.l.b16 %v1595
  %v1644 = vunpack.c.l.b16 %v1596
  %v1645 = vunpack.c.l.b16 %v1597
  %v1646 = vunpack.c.l.b16 %v1598
  %v1647 = vunpack.c.l.b16 %v1599
  %v1648 = vunpack.c.l.b16 %v1600
  %v1649 = vpack.c.b16 %v1634, %v1633
  %v1650 = vpack.c.b16 %v1636, %v1635
  %v1651 = vpack.c.b16 %v1638, %v1637
  %v1652 = vpack.c.b16 %v1640, %v1639
  %v1653 = vpack.c.b16 %v1642, %v1641
  %v1654 = vpack.c.b16 %v1644, %v1643
  %v1655 = vpack.c.b16 %v1646, %v1645
  %v1656 = vpack.c.b16 %v1648, %v1647
  %v1681 = vunpack.c.l.b16 %v1601
  %v1682 = vunpack.c.l.b16 %v1602
  %v1683 = vunpack.c.l.b16 %v1603
  %v1684 = vunpack.c.l.b16 %v1604
  %v1685 = vunpack.c.l.b16 %v1605
  %v1686 = vunpack.c.l.b16 %v1606
  %v1687 = vunpack.c.l.b16 %v1607
  %v1688 = vunpack.c.l.b16 %v1608
  %v1689 = vunpack.c.l.b16 %v1609
  %v1690 = vunpack.c.l.b16 %v1610
  %v1691 = vunpack.c.l.b16 %v1611
  %v1692 = vunpack.c.l.b16 %v1612
  %v1693 = vunpack.c.l.b16 %v1613
  %v1694 = vunpack.c.l.b16 %v1614
  %v1695 = vunpack.c.l.b16 %v1615
  %v1696 = vunpack.c.l.b16 %v1616
  %v1697 = vpack.c.b16 %v1682, %v1681
  %v1698 = vpack.c.b16 %v1684, %v1683
  %v1699 = vpack.c.b16 %v1686, %v1685
  %v1700 = vpack.c.b16 %v1688, %v1687
  %v1701 = vpack.c.b16 %v1690, %v1689
  %v1702 = vpack.c.b16 %v1692, %v1691
  %v1703 = vpack.c.b16 %v1694, %v1693
  %v1704 = vpack.c.b16 %v1696, %v1695
  %1713 = vmatprep.subr.bf16.mxu0 0
  %1714 = vmatpush1.bf16.msra.mxu0 %v1697
  %1715 = vmatprep.subr.bf16.mxu0 0
  %1716 = vmatpush1.bf16.msra.mxu0 %v1698
  %1717 = vmatprep.subr.bf16.mxu0 0
  %1718 = vmatpush1.bf16.msra.mxu0 %v1699
  %1719 = vmatprep.subr.bf16.mxu0 0
  %1720 = vmatpush1.bf16.msra.mxu0 %v1700
  %1721 = vmatprep.subr.bf16.mxu0 0
  %1722 = vmatpush1.bf16.msra.mxu0 %v1701
  %1723 = vmatprep.subr.bf16.mxu0 0
  %1724 = vmatpush1.bf16.msra.mxu0 %v1702
  %1725 = vmatprep.subr.bf16.mxu0 0
  %1726 = vmatpush1.bf16.msra.mxu0 %v1703
  %1727 = vmatprep.subr.bf16.mxu0 0
  %1728 = vmatpush1.bf16.msra.mxu0 %v1704
  %1729 = vmatprep.subr.bf16.mxu0 0
  %1730 = vmatpush1.bf16.msra.mxu0 0
  %1731 = vmatprep.subr.bf16.mxu0 0
  %1732 = vmatpush1.bf16.msra.mxu0 0
  %1733 = vmatprep.subr.bf16.mxu0 0
  %1734 = vmatpush1.bf16.msra.mxu0 0
  %1735 = vmatprep.subr.bf16.mxu0 0
  %1736 = vmatpush1.bf16.msra.mxu0 0
  %1737 = vmatprep.subr.bf16.mxu0 0
  %1738 = vmatpush1.bf16.msra.mxu0 0
  %1739 = vmatprep.subr.bf16.mxu0 0
  %1740 = vmatpush1.bf16.msra.mxu0 0
  %1741 = vmatprep.subr.bf16.mxu0 0
  %1742 = vmatpush1.bf16.msra.mxu0 0
  %1743 = vmatprep.subr.bf16.mxu0 0
  %1744 = vmatpush1.bf16.msra.mxu0 0
  %1745 = vmatprep.mubr.bf16.mxu0 0
  %1746 = vmatmul.mubr.bf16.gmra.mrb[0].mxu0 %v1649
  %v1747 = vpop.f32.mrb[0].mxu0
  %v1748 = vadd.f32 0.0, %v1747
  %v1749 = vpop.f32.mrb[0].mxu0
  %v1750 = vpop.f32.mrb[0].mxu0
  %v1751 = vadd.f32 0.0, %v1750
  %v1752 = vpop.f32.mrb[0].mxu0
  %1753 = vmatprep.mubr.bf16.mxu0 0
  %1754 = vmatmul.mubr.bf16.gmra.mrb[0].mxu0 %v1650
  %v1755 = vpop.f32.mrb[0].mxu0
  %v1756 = vadd.f32 0.0, %v1755
  %v1757 = vpop.f32.mrb[0].mxu0
  %v1758 = vpop.f32.mrb[0].mxu0
  %v1759 = vadd.f32 0.0, %v1758
  %v1760 = vpop.f32.mrb[0].mxu0
  %1761 = vmatprep.mubr.bf16.mxu0 0
  %1762 = vmatmul.mubr.bf16.gmra.mrb[0].mxu0 %v1651
  %v1763 = vpop.f32.mrb[0].mxu0
  %v1764 = vadd.f32 0.0, %v1763
  %v1765 = vpop.f32.mrb[0].mxu0
  %v1766 = vpop.f32.mrb[0].mxu0
  %v1767 = vadd.f32 0.0, %v1766
  %v1768 = vpop.f32.mrb[0].mxu0
  %1769 = vmatprep.mubr.bf16.mxu0 0
  %1770 = vmatmul.mubr.bf16.gmra.mrb[0].mxu0 %v1652
  %v1771 = vpop.f32.mrb[0].mxu0
  %v1772 = vadd.f32 0.0, %v1771
  %v1773 = vpop.f32.mrb[0].mxu0
  %v1774 = vpop.f32.mrb[0].mxu0
  %v1775 = vadd.f32 0.0, %v1774
  %v1776 = vpop.f32.mrb[0].mxu0
  %1777 = vmatprep.mubr.bf16.mxu0 0
  %1778 = vmatmul.mubr.bf16.gmra.mrb[0].mxu0 %v1653
  %v1779 = vpop.f32.mrb[0].mxu0
  %v1780 = vadd.f32 0.0, %v1779
  %v1781 = vpop.f32.mrb[0].mxu0
  %v1782 = vpop.f32.mrb[0].mxu0
  %v1783 = vadd.f32 0.0, %v1782
  %v1784 = vpop.f32.mrb[0].mxu0
  %1785 = vmatprep.mubr.bf16.mxu0 0
  %1786 = vmatmul.mubr.bf16.gmra.mrb[0].mxu0 %v1654
  %v1787 = vpop.f32.mrb[0].mxu0
  %v1788 = vadd.f32 0.0, %v1787
  %v1789 = vpop.f32.mrb[0].mxu0
  %v1790 = vpop.f32.mrb[0].mxu0
  %v1791 = vadd.f32 0.0, %v1790
  %v1792 = vpop.f32.mrb[0].mxu0
  %1793 = vmatprep.mubr.bf16.mxu0 0
  %1794 = vmatmul.mubr.bf16.gmra.mrb[0].mxu0 %v1655
  %v1795 = vpop.f32.mrb[0].mxu0
  %v1796 = vadd.f32 0.0, %v1795
  %v1797 = vpop.f32.mrb[0].mxu0
  %v1798 = vpop.f32.mrb[0].mxu0
  %v1799 = vadd.f32 0.0, %v1798
  %v1800 = vpop.f32.mrb[0].mxu0
  %1801 = vmatprep.mubr.bf16.mxu0 0
  %1802 = vmatmul.mubr.bf16.gmra.mrb[0].mxu0 %v1656
  %v1803 = vpop.f32.mrb[0].mxu0
  %v1804 = vadd.f32 0.0, %v1803
  %v1805 = vpop.f32.mrb[0].mxu0
  %v1806 = vpop.f32.mrb[0].mxu0
  %v1807 = vadd.f32 0.0, %v1806
  %v1808 = vpop.f32.mrb[0].mxu0
  %1809 = vdwg.mxu0
  %v1810 = vld [vmem:[%s6] sm:$0x1]
  %v1812 = vlaneseq
  %v1813 = vshrl.u32 %v1812, 7
  %v1814 = vsub.s32 0, %v1813
  %v1815 = vrot.slane %v1810, %v1814
  %v1817 = vmul.f32 %v1748, %v1815
  %v1818 = vmul.f32 %v1751, %v1815
  %v1819 = vmul.f32 %v1756, %v1815
  %v1820 = vmul.f32 %v1759, %v1815
  %v1821 = vmul.f32 %v1764, %v1815
  %v1822 = vmul.f32 %v1767, %v1815
  %v1823 = vmul.f32 %v1772, %v1815
  %v1824 = vmul.f32 %v1775, %v1815
  %v1825 = vmul.f32 %v1780, %v1815
  %v1826 = vmul.f32 %v1783, %v1815
  %v1827 = vmul.f32 %v1788, %v1815
  %v1828 = vmul.f32 %v1791, %v1815
  %v1829 = vmul.f32 %v1796, %v1815
  %v1830 = vmul.f32 %v1799, %v1815
  %v1831 = vmul.f32 %v1804, %v1815
  %v1832 = vmul.f32 %v1807, %v1815
  %v1833 = vld [vmem:[%s7] sm:$0x1]
  %v1835 = vlaneseq
  %v1836 = vshrl.u32 %v1835, 7
  %v1837 = vsub.s32 0, %v1836
  %v1838 = vrot.slane %v1833, %v1837
  %v1840 = vadd.f32 %v1817, %v1838
  %v1841 = vadd.f32 %v1818, %v1838
  %v1842 = vadd.f32 %v1819, %v1838
  %v1843 = vadd.f32 %v1820, %v1838
  %v1844 = vadd.f32 %v1821, %v1838
  %v1845 = vadd.f32 %v1822, %v1838
  %v1846 = vadd.f32 %v1823, %v1838
  %v1847 = vadd.f32 %v1824, %v1838
  %v1848 = vadd.f32 %v1825, %v1838
  %v1849 = vadd.f32 %v1826, %v1838
  %v1850 = vadd.f32 %v1827, %v1838
  %v1851 = vadd.f32 %v1828, %v1838
  %v1852 = vadd.f32 %v1829, %v1838
  %v1853 = vadd.f32 %v1830, %v1838
  %v1854 = vadd.f32 %v1831, %v1838
  %v1855 = vadd.f32 %v1832, %v1838
  %v1856 = vadd.f32 %v1569, %v1840
  %v1857 = vadd.f32 %v1570, %v1841
  %v1858 = vadd.f32 %v1571, %v1842
  %v1859 = vadd.f32 %v1572, %v1843
  %v1860 = vadd.f32 %v1573, %v1844
  %v1861 = vadd.f32 %v1574, %v1845
  %v1862 = vadd.f32 %v1575, %v1846
  %v1863 = vadd.f32 %v1576, %v1847
  %v1864 = vadd.f32 %v1577, %v1848
  %v1865 = vadd.f32 %v1578, %v1849
  %v1866 = vadd.f32 %v1579, %v1850
  %v1867 = vadd.f32 %v1580, %v1851
  %v1868 = vadd.f32 %v1581, %v1852
  %v1869 = vadd.f32 %v1582, %v1853
  %v1870 = vadd.f32 %v1583, %v1854
  %v1871 = vadd.f32 %v1584, %v1855
  %v1872 = vmax.f32 %v1856, 0.0
  %v1873 = vmax.f32 %v1857, 0.0
  %v1874 = vmax.f32 %v1858, 0.0
  %v1875 = vmax.f32 %v1859, 0.0
  %v1876 = vmax.f32 %v1860, 0.0
  %v1877 = vmax.f32 %v1861, 0.0
  %v1878 = vmax.f32 %v1862, 0.0
  %v1879 = vmax.f32 %v1863, 0.0
  %v1880 = vmax.f32 %v1864, 0.0
  %v1881 = vmax.f32 %v1865, 0.0
  %v1882 = vmax.f32 %v1866, 0.0
  %v1883 = vmax.f32 %v1867, 0.0
  %v1884 = vmax.f32 %v1868, 0.0
  %v1885 = vmax.f32 %v1869, 0.0
  %v1886 = vmax.f32 %v1870, 0.0
  %v1887 = vmax.f32 %v1871, 0.0
  %v1888 = vpack.c.bf16 %v1873, %v1872
  %v1889 = vpack.c.bf16 %v1875, %v1874
  %v1890 = vpack.c.bf16 %v1877, %v1876
  %v1891 = vpack.c.bf16 %v1879, %v1878
  %v1892 = vpack.c.bf16 %v1881, %v1880
  %v1893 = vpack.c.bf16 %v1883, %v1882
  %v1894 = vpack.c.bf16 %v1885, %v1884
  %v1895 = vpack.c.bf16 %v1887, %v1886
  %v1904 = vunpack.c.l.b16 %v1888
  %v1905 = vunpack.c.h.b16 %v1888
  %v1906 = vunpack.c.l.b16 %v1889
  %v1907 = vunpack.c.h.b16 %v1889
  %v1908 = vunpack.c.l.b16 %v1890
  %v1909 = vunpack.c.h.b16 %v1890
  %v1910 = vunpack.c.l.b16 %v1891
  %v1911 = vunpack.c.h.b16 %v1891
  %v1912 = vunpack.c.l.b16 %v1892
  %v1913 = vunpack.c.h.b16 %v1892
  %v1914 = vunpack.c.l.b16 %v1893
  %v1915 = vunpack.c.h.b16 %v1893
  %v1916 = vunpack.c.l.b16 %v1894
  %v1917 = vunpack.c.h.b16 %v1894
  %v1918 = vunpack.c.l.b16 %v1895
  %v1919 = vunpack.c.h.b16 %v1895
  %v1920 = vpack.c.b16 %v1904, %v1904
  %v1921 = vpack.c.b16 %v1905, %v1905
  %v1922 = vpack.c.b16 %v1906, %v1906
  %v1923 = vpack.c.b16 %v1907, %v1907
  %v1924 = vpack.c.b16 %v1908, %v1908
  %v1925 = vpack.c.b16 %v1909, %v1909
  %v1926 = vpack.c.b16 %v1910, %v1910
  %v1927 = vpack.c.b16 %v1911, %v1911
  %v1928 = vpack.c.b16 %v1912, %v1912
  %v1929 = vpack.c.b16 %v1913, %v1913
  %v1930 = vpack.c.b16 %v1914, %v1914
  %v1931 = vpack.c.b16 %v1915, %v1915
  %v1932 = vpack.c.b16 %v1916, %v1916
  %v1933 = vpack.c.b16 %v1917, %v1917
  %v1934 = vpack.c.b16 %v1918, %v1918
  %v1935 = vpack.c.b16 %v1919, %v1919
  %1952 = vst [vmem:[%s8] sm:$0xf] %v1920
  %1953 = vst [vmem:[%s8 + $0x4] sm:$0xf] %v1921
  %1954 = vst [vmem:[%s8 + $0x8] sm:$0xf] %v1922
  %1955 = vst [vmem:[%s8 + $0xc] sm:$0xf] %v1923
  %1956 = vst [vmem:[%s8 + $0x10] sm:$0xf] %v1924
  %1957 = vst [vmem:[%s8 + $0x14] sm:$0xf] %v1925
  %1958 = vst [vmem:[%s8 + $0x18] sm:$0xf] %v1926
  %1959 = vst [vmem:[%s8 + $0x1c] sm:$0xf] %v1927
  %1960 = vst [vmem:[%s8 + $0x20] sm:$0xf] %v1928
  %1961 = vst [vmem:[%s8 + $0x24] sm:$0xf] %v1929
  %1962 = vst [vmem:[%s8 + $0x28] sm:$0xf] %v1930
  %1963 = vst [vmem:[%s8 + $0x2c] sm:$0xf] %v1931
  %1964 = vst [vmem:[%s8 + $0x30] sm:$0xf] %v1932
  %1965 = vst [vmem:[%s8 + $0x34] sm:$0xf] %v1933
  %1966 = vst [vmem:[%s8 + $0x38] sm:$0xf] %v1934
  %1967 = vst [vmem:[%s8 + $0x3c] sm:$0xf] %v1935
  // Predicated region
  $region34: #{model_forward.7} parent=0 // pred_check
    _
  $region35: #{model_forward.7} parent=0 // pred_check_branch
    %1969 = sbr.rel (0) target = $region37
  $region36: #{model_forward.7} parent=0 // pred_region
    _
  $region37: #{model_forward.7} parent=0 // pred_fallthru
    _
  // Predicated region
  $region38: #{model_forward.7} parent=0 // pred_check
    _
  $region39: #{model_forward.7} parent=0 // pred_check_branch
    %1971 = sbr.rel (0) target = $region41
  $region40: #{model_forward.7} parent=0 // pred_region
    _
  $region41: #{model_forward.7} parent=0 // pred_fallthru
    _

// kernel: model_forward.8
$region0: #{model_forward.8}
  #allocation0 [shape = 'u32[]', space=smem, size = 0x4, offset = 0x4, fixed_abs, tag = 'smem constant byte address 0x4 - core index']
  #allocation1 [shape = 'u32[144,128]{1,0:T(1,128)}', space=vmem, size = 0x12000, scoped, tag = 'internal scratch']
  %s0 = inlined_call_operand.vmem [shape: bf16[32,1152], index: 0, kind: input, shape index: {}]
  %s1 = inlined_call_operand.vmem [shape: bf16[1152,128], index: 1, kind: input, shape index: {}]
  %s2 = inlined_call_operand.vmem [shape: f32[1,128], index: 2, kind: input, shape index: {}]
  %s3 = inlined_call_operand.vmem [shape: f32[1,128], index: 3, kind: input, shape index: {}]
  %s4 = inlined_call_operand.vmem [shape: bf16[32,128], index: 4, kind: output, shape index: {}]
  %s5 = sld [smem:[#allocation0]]
  $region26: #{model_forward.8} parent=0
    _
  %s7 = ssub.s32 1, %s5
  %s8 = scalar_select 0, %s7, %s5
  // Predicated region
  $region2: #{model_forward.8} parent=0 // pred_check
    _
  $region3: #{model_forward.8} parent=0 // pred_check_branch
    %10 = sbr.rel (0) target = $region5
  $region4: #{model_forward.8} parent=0 // pred_region
    _
  $region5: #{model_forward.8} parent=0 // pred_fallthru
    _
  // Predicated region
  $region6: #{model_forward.8} parent=0 // pred_check
    _
  $region7: #{model_forward.8} parent=0 // pred_check_branch
    %12 = sbr.rel (0) target = $region9
  $region8: #{model_forward.8} parent=0 // pred_region
    _
  $region9: #{model_forward.8} parent=0 // pred_fallthru
    _
  // Predicated region
  $region10: #{model_forward.8} parent=0 // pred_check
    _
  $region11: #{model_forward.8} parent=0 // pred_check_branch
    %14 = sbr.rel (0) target = $region13
  $region12: #{model_forward.8} parent=0 // pred_region
    _
  $region13: #{model_forward.8} parent=0 // pred_fallthru
    _
  // Predicated region
  $region14: #{model_forward.8} parent=0 // pred_check
    _
  $region15: #{model_forward.8} parent=0 // pred_check_branch
    %16 = sbr.rel (0) target = $region17
  $region16: #{model_forward.8} parent=0 // pred_region
    _
  $region17: #{model_forward.8} parent=0 // pred_fallthru
    _
  %v18 = vld [vmem:[%s0] sm:$0xff]
  %v19 = vld [vmem:[%s0 + $0x8] sm:$0xff]
  %v20 = vld [vmem:[%s0 + $0x10] sm:$0xff]
  %v21 = vld [vmem:[%s0 + $0x18] sm:$0xff]
  %v22 = vld [vmem:[%s0 + $0x20] sm:$0xf]
  %v23 = vld [vmem:[%s0 + $0x24] sm:$0xff]
  %v24 = vld [vmem:[%s0 + $0x2c] sm:$0xff]
  %v25 = vld [vmem:[%s0 + $0x34] sm:$0xff]
  %v26 = vld [vmem:[%s0 + $0x3c] sm:$0xff]
  %v27 = vld [vmem:[%s0 + $0x44] sm:$0xf]
  %v28 = vld [vmem:[%s0 + $0x48] sm:$0xff]
  %v29 = vld [vmem:[%s0 + $0x50] sm:$0xff]
  %v30 = vld [vmem:[%s0 + $0x58] sm:$0xff]
  %v31 = vld [vmem:[%s0 + $0x60] sm:$0xff]
  %v32 = vld [vmem:[%s0 + $0x68] sm:$0xf]
  %v33 = vld [vmem:[%s0 + $0x6c] sm:$0xff]
  %v34 = vld [vmem:[%s0 + $0x74] sm:$0xff]
  %v35 = vld [vmem:[%s0 + $0x7c] sm:$0xff]
  %v36 = vld [vmem:[%s0 + $0x84] sm:$0xff]
  %v37 = vld [vmem:[%s0 + $0x8c] sm:$0xf]
  %v38 = vld [vmem:[%s1] sm:$0xf]
  %v39 = vld [vmem:[%s1 + $0x4] sm:$0xf]
  %v40 = vld [vmem:[%s1 + $0x8] sm:$0xf]
  %v41 = vld [vmem:[%s1 + $0xc] sm:$0xf]
  %v42 = vld [vmem:[%s1 + $0x10] sm:$0xf]
  %v43 = vld [vmem:[%s1 + $0x14] sm:$0xf]
  %v44 = vld [vmem:[%s1 + $0x18] sm:$0xf]
  %v45 = vld [vmem:[%s1 + $0x1c] sm:$0xf]
  %v46 = vld [vmem:[%s1 + $0x20] sm:$0xf]
  %v47 = vld [vmem:[%s1 + $0x24] sm:$0xf]
  %v48 = vld [vmem:[%s1 + $0x28] sm:$0xf]
  %v49 = vld [vmem:[%s1 + $0x2c] sm:$0xf]
  %v50 = vld [vmem:[%s1 + $0x30] sm:$0xf]
  %v51 = vld [vmem:[%s1 + $0x34] sm:$0xf]
  %v52 = vld [vmem:[%s1 + $0x38] sm:$0xf]
  %v53 = vld [vmem:[%s1 + $0x3c] sm:$0xf]
  %v54 = vld [vmem:[%s1 + $0x40] sm:$0xf]
  %v55 = vld [vmem:[%s1 + $0x44] sm:$0xf]
  %v56 = vld [vmem:[%s1 + $0x48] sm:$0xf]
  %v57 = vld [vmem:[%s1 + $0x4c] sm:$0xf]
  %v58 = vld [vmem:[%s1 + $0x50] sm:$0xf]
  %v59 = vld [vmem:[%s1 + $0x54] sm:$0xf]
  %v60 = vld [vmem:[%s1 + $0x58] sm:$0xf]
  %v61 = vld [vmem:[%s1 + $0x5c] sm:$0xf]
  %v62 = vld [vmem:[%s1 + $0x60] sm:$0xf]
  %v63 = vld [vmem:[%s1 + $0x64] sm:$0xf]
  %v64 = vld [vmem:[%s1 + $0x68] sm:$0xf]
  %v65 = vld [vmem:[%s1 + $0x6c] sm:$0xf]
  %v66 = vld [vmem:[%s1 + $0x70] sm:$0xf]
  %v67 = vld [vmem:[%s1 + $0x74] sm:$0xf]
  %v68 = vld [vmem:[%s1 + $0x78] sm:$0xf]
  %v69 = vld [vmem:[%s1 + $0x7c] sm:$0xf]
  %v70 = vld [vmem:[%s1 + $0x80] sm:$0xf]
  %v71 = vld [vmem:[%s1 + $0x84] sm:$0xf]
  %v72 = vld [vmem:[%s1 + $0x88] sm:$0xf]
  %v73 = vld [vmem:[%s1 + $0x8c] sm:$0xf]
  %v74 = vld [vmem:[%s1 + $0x90] sm:$0xf]
  %v75 = vld [vmem:[%s1 + $0x94] sm:$0xf]
  %v76 = vld [vmem:[%s1 + $0x98] sm:$0xf]
  %v77 = vld [vmem:[%s1 + $0x9c] sm:$0xf]
  %v78 = vld [vmem:[%s1 + $0xa0] sm:$0xf]
  %v79 = vld [vmem:[%s1 + $0xa4] sm:$0xf]
  %v80 = vld [vmem:[%s1 + $0xa8] sm:$0xf]
  %v81 = vld [vmem:[%s1 + $0xac] sm:$0xf]
  %v82 = vld [vmem:[%s1 + $0xb0] sm:$0xf]
  %v83 = vld [vmem:[%s1 + $0xb4] sm:$0xf]
  %v84 = vld [vmem:[%s1 + $0xb8] sm:$0xf]
  %v85 = vld [vmem:[%s1 + $0xbc] sm:$0xf]
  %v86 = vld [vmem:[%s1 + $0xc0] sm:$0xf]
  %v87 = vld [vmem:[%s1 + $0xc4] sm:$0xf]
  %v88 = vld [vmem:[%s1 + $0xc8] sm:$0xf]
  %v89 = vld [vmem:[%s1 + $0xcc] sm:$0xf]
  %v90 = vld [vmem:[%s1 + $0xd0] sm:$0xf]
  %v91 = vld [vmem:[%s1 + $0xd4] sm:$0xf]
  %v92 = vld [vmem:[%s1 + $0xd8] sm:$0xf]
  %v93 = vld [vmem:[%s1 + $0xdc] sm:$0xf]
  %v94 = vld [vmem:[%s1 + $0xe0] sm:$0xf]
  %v95 = vld [vmem:[%s1 + $0xe4] sm:$0xf]
  %v96 = vld [vmem:[%s1 + $0xe8] sm:$0xf]
  %v97 = vld [vmem:[%s1 + $0xec] sm:$0xf]
  %v98 = vld [vmem:[%s1 + $0xf0] sm:$0xf]
  %v99 = vld [vmem:[%s1 + $0xf4] sm:$0xf]
  %v100 = vld [vmem:[%s1 + $0xf8] sm:$0xf]
  %v101 = vld [vmem:[%s1 + $0xfc] sm:$0xf]
  %v102 = vld [vmem:[%s1 + $0x100] sm:$0xf]
  %v103 = vld [vmem:[%s1 + $0x104] sm:$0xf]
  %v104 = vld [vmem:[%s1 + $0x108] sm:$0xf]
  %v105 = vld [vmem:[%s1 + $0x10c] sm:$0xf]
  %v106 = vld [vmem:[%s1 + $0x110] sm:$0xf]
  %v107 = vld [vmem:[%s1 + $0x114] sm:$0xf]
  %v108 = vld [vmem:[%s1 + $0x118] sm:$0xf]
  %v109 = vld [vmem:[%s1 + $0x11c] sm:$0xf]
  %v110 = vld [vmem:[%s1 + $0x120] sm:$0xf]
  %v111 = vld [vmem:[%s1 + $0x124] sm:$0xf]
  %v112 = vld [vmem:[%s1 + $0x128] sm:$0xf]
  %v113 = vld [vmem:[%s1 + $0x12c] sm:$0xf]
  %v114 = vld [vmem:[%s1 + $0x130] sm:$0xf]
  %v115 = vld [vmem:[%s1 + $0x134] sm:$0xf]
  %v116 = vld [vmem:[%s1 + $0x138] sm:$0xf]
  %v117 = vld [vmem:[%s1 + $0x13c] sm:$0xf]
  %v118 = vld [vmem:[%s1 + $0x140] sm:$0xf]
  %v119 = vld [vmem:[%s1 + $0x144] sm:$0xf]
  %v120 = vld [vmem:[%s1 + $0x148] sm:$0xf]
  %v121 = vld [vmem:[%s1 + $0x14c] sm:$0xf]
  %v122 = vld [vmem:[%s1 + $0x150] sm:$0xf]
  %v123 = vld [vmem:[%s1 + $0x154] sm:$0xf]
  %v124 = vld [vmem:[%s1 + $0x158] sm:$0xf]
  %v125 = vld [vmem:[%s1 + $0x15c] sm:$0xf]
  %v126 = vld [vmem:[%s1 + $0x160] sm:$0xf]
  %v127 = vld [vmem:[%s1 + $0x164] sm:$0xf]
  %v128 = vld [vmem:[%s1 + $0x168] sm:$0xf]
  %v129 = vld [vmem:[%s1 + $0x16c] sm:$0xf]
  %v130 = vld [vmem:[%s1 + $0x170] sm:$0xf]
  %v131 = vld [vmem:[%s1 + $0x174] sm:$0xf]
  %v132 = vld [vmem:[%s1 + $0x178] sm:$0xf]
  %v133 = vld [vmem:[%s1 + $0x17c] sm:$0xf]
  %v134 = vld [vmem:[%s1 + $0x180] sm:$0xf]
  %v135 = vld [vmem:[%s1 + $0x184] sm:$0xf]
  %v136 = vld [vmem:[%s1 + $0x188] sm:$0xf]
  %v137 = vld [vmem:[%s1 + $0x18c] sm:$0xf]
  %v138 = vld [vmem:[%s1 + $0x190] sm:$0xf]
  %v139 = vld [vmem:[%s1 + $0x194] sm:$0xf]
  %v140 = vld [vmem:[%s1 + $0x198] sm:$0xf]
  %v141 = vld [vmem:[%s1 + $0x19c] sm:$0xf]
  %v142 = vld [vmem:[%s1 + $0x1a0] sm:$0xf]
  %v143 = vld [vmem:[%s1 + $0x1a4] sm:$0xf]
  %v144 = vld [vmem:[%s1 + $0x1a8] sm:$0xf]
  %v145 = vld [vmem:[%s1 + $0x1ac] sm:$0xf]
  %v146 = vld [vmem:[%s1 + $0x1b0] sm:$0xf]
  %v147 = vld [vmem:[%s1 + $0x1b4] sm:$0xf]
  %v148 = vld [vmem:[%s1 + $0x1b8] sm:$0xf]
  %v149 = vld [vmem:[%s1 + $0x1bc] sm:$0xf]
  %v150 = vld [vmem:[%s1 + $0x1c0] sm:$0xf]
  %v151 = vld [vmem:[%s1 + $0x1c4] sm:$0xf]
  %v152 = vld [vmem:[%s1 + $0x1c8] sm:$0xf]
  %v153 = vld [vmem:[%s1 + $0x1cc] sm:$0xf]
  %v154 = vld [vmem:[%s1 + $0x1d0] sm:$0xf]
  %v155 = vld [vmem:[%s1 + $0x1d4] sm:$0xf]
  %v156 = vld [vmem:[%s1 + $0x1d8] sm:$0xf]
  %v157 = vld [vmem:[%s1 + $0x1dc] sm:$0xf]
  %v158 = vld [vmem:[%s1 + $0x1e0] sm:$0xf]
  %v159 = vld [vmem:[%s1 + $0x1e4] sm:$0xf]
  %v160 = vld [vmem:[%s1 + $0x1e8] sm:$0xf]
  %v161 = vld [vmem:[%s1 + $0x1ec] sm:$0xf]
  %v162 = vld [vmem:[%s1 + $0x1f0] sm:$0xf]
  %v163 = vld [vmem:[%s1 + $0x1f4] sm:$0xf]
  %v164 = vld [vmem:[%s1 + $0x1f8] sm:$0xf]
  %v165 = vld [vmem:[%s1 + $0x1fc] sm:$0xf]
  %v166 = vld [vmem:[%s1 + $0x200] sm:$0xf]
  %v167 = vld [vmem:[%s1 + $0x204] sm:$0xf]
  %v168 = vld [vmem:[%s1 + $0x208] sm:$0xf]
  %v169 = vld [vmem:[%s1 + $0x20c] sm:$0xf]
  %v170 = vld [vmem:[%s1 + $0x210] sm:$0xf]
  %v171 = vld [vmem:[%s1 + $0x214] sm:$0xf]
  %v172 = vld [vmem:[%s1 + $0x218] sm:$0xf]
  %v173 = vld [vmem:[%s1 + $0x21c] sm:$0xf]
  %v174 = vld [vmem:[%s1 + $0x220] sm:$0xf]
  %v175 = vld [vmem:[%s1 + $0x224] sm:$0xf]
  %v176 = vld [vmem:[%s1 + $0x228] sm:$0xf]
  %v177 = vld [vmem:[%s1 + $0x22c] sm:$0xf]
  %v178 = vld [vmem:[%s1 + $0x230] sm:$0xf]
  %v179 = vld [vmem:[%s1 + $0x234] sm:$0xf]
  %v180 = vld [vmem:[%s1 + $0x238] sm:$0xf]
  %v181 = vld [vmem:[%s1 + $0x23c] sm:$0xf]
  %v202 = vunpack.c.l.b16 %v18
  %v203 = vunpack.c.h.b16 %v18
  %v204 = vunpack.c.l.b16 %v19
  %v205 = vunpack.c.h.b16 %v19
  %v206 = vunpack.c.l.b16 %v20
  %v207 = vunpack.c.h.b16 %v20
  %v208 = vunpack.c.l.b16 %v21
  %v209 = vunpack.c.h.b16 %v21
  %v210 = vunpack.c.l.b16 %v22
  %v211 = vunpack.c.l.b16 %v23
  %v212 = vunpack.c.h.b16 %v23
  %v213 = vunpack.c.l.b16 %v24
  %v214 = vunpack.c.h.b16 %v24
  %v215 = vunpack.c.l.b16 %v25
  %v216 = vunpack.c.h.b16 %v25
  %v217 = vunpack.c.l.b16 %v26
  %v218 = vunpack.c.h.b16 %v26
  %v219 = vunpack.c.l.b16 %v27
  %v220 = vunpack.c.l.b16 %v28
  %v221 = vunpack.c.h.b16 %v28
  %v222 = vunpack.c.l.b16 %v29
  %v223 = vunpack.c.h.b16 %v29
  %v224 = vunpack.c.l.b16 %v30
  %v225 = vunpack.c.h.b16 %v30
  %v226 = vunpack.c.l.b16 %v31
  %v227 = vunpack.c.h.b16 %v31
  %v228 = vunpack.c.l.b16 %v32
  %v229 = vunpack.c.l.b16 %v33
  %v230 = vunpack.c.h.b16 %v33
  %v231 = vunpack.c.l.b16 %v34
  %v232 = vunpack.c.h.b16 %v34
  %v233 = vunpack.c.l.b16 %v35
  %v234 = vunpack.c.h.b16 %v35
  %v235 = vunpack.c.l.b16 %v36
  %v236 = vunpack.c.h.b16 %v36
  %v237 = vunpack.c.l.b16 %v37
  %v238 = vpack.c.b16 %v211, %v202
  %v239 = vpack.c.b16 %v212, %v203
  %v240 = vpack.c.b16 %v213, %v204
  %v241 = vpack.c.b16 %v214, %v205
  %v242 = vpack.c.b16 %v215, %v206
  %v243 = vpack.c.b16 %v216, %v207
  %v244 = vpack.c.b16 %v217, %v208
  %v245 = vpack.c.b16 %v218, %v209
  %v246 = vpack.c.b16 %v219, %v210
  %v247 = vpack.c.b16 %v229, %v220
  %v248 = vpack.c.b16 %v230, %v221
  %v249 = vpack.c.b16 %v231, %v222
  %v250 = vpack.c.b16 %v232, %v223
  %v251 = vpack.c.b16 %v233, %v224
  %v252 = vpack.c.b16 %v234, %v225
  %v253 = vpack.c.b16 %v235, %v226
  %v254 = vpack.c.b16 %v236, %v227
  %v255 = vpack.c.b16 %v237, %v228
  %v418 = vunpack.c.l.b16 %v38
  %v419 = vunpack.c.l.b16 %v39
  %v420 = vunpack.c.l.b16 %v40
  %v421 = vunpack.c.l.b16 %v41
  %v422 = vunpack.c.l.b16 %v42
  %v423 = vunpack.c.l.b16 %v43
  %v424 = vunpack.c.l.b16 %v44
  %v425 = vunpack.c.l.b16 %v45
  %v426 = vunpack.c.l.b16 %v46
  %v427 = vunpack.c.l.b16 %v47
  %v428 = vunpack.c.l.b16 %v48
  %v429 = vunpack.c.l.b16 %v49
  %v430 = vunpack.c.l.b16 %v50
  %v431 = vunpack.c.l.b16 %v51
  %v432 = vunpack.c.l.b16 %v52
  %v433 = vunpack.c.l.b16 %v53
  %v434 = vunpack.c.l.b16 %v54
  %v435 = vunpack.c.l.b16 %v55
  %v436 = vunpack.c.l.b16 %v56
  %v437 = vunpack.c.l.b16 %v57
  %v438 = vunpack.c.l.b16 %v58
  %v439 = vunpack.c.l.b16 %v59
  %v440 = vunpack.c.l.b16 %v60
  %v441 = vunpack.c.l.b16 %v61
  %v442 = vunpack.c.l.b16 %v62
  %v443 = vunpack.c.l.b16 %v63
  %v444 = vunpack.c.l.b16 %v64
  %v445 = vunpack.c.l.b16 %v65
  %v446 = vunpack.c.l.b16 %v66
  %v447 = vunpack.c.l.b16 %v67
  %v448 = vunpack.c.l.b16 %v68
  %v449 = vunpack.c.l.b16 %v69
  %v450 = vunpack.c.l.b16 %v70
  %v451 = vunpack.c.l.b16 %v71
  %v452 = vunpack.c.l.b16 %v72
  %v453 = vunpack.c.l.b16 %v73
  %v454 = vunpack.c.l.b16 %v74
  %v455 = vunpack.c.l.b16 %v75
  %v456 = vunpack.c.l.b16 %v76
  %v457 = vunpack.c.l.b16 %v77
  %v458 = vunpack.c.l.b16 %v78
  %v459 = vunpack.c.l.b16 %v79
  %v460 = vunpack.c.l.b16 %v80
  %v461 = vunpack.c.l.b16 %v81
  %v462 = vunpack.c.l.b16 %v82
  %v463 = vunpack.c.l.b16 %v83
  %v464 = vunpack.c.l.b16 %v84
  %v465 = vunpack.c.l.b16 %v85
  %v466 = vunpack.c.l.b16 %v86
  %v467 = vunpack.c.l.b16 %v87
  %v468 = vunpack.c.l.b16 %v88
  %v469 = vunpack.c.l.b16 %v89
  %v470 = vunpack.c.l.b16 %v90
  %v471 = vunpack.c.l.b16 %v91
  %v472 = vunpack.c.l.b16 %v92
  %v473 = vunpack.c.l.b16 %v93
  %v474 = vunpack.c.l.b16 %v94
  %v475 = vunpack.c.l.b16 %v95
  %v476 = vunpack.c.l.b16 %v96
  %v477 = vunpack.c.l.b16 %v97
  %v478 = vunpack.c.l.b16 %v98
  %v479 = vunpack.c.l.b16 %v99
  %v480 = vunpack.c.l.b16 %v100
  %v481 = vunpack.c.l.b16 %v101
  %v482 = vunpack.c.l.b16 %v102
  %v483 = vunpack.c.l.b16 %v103
  %v484 = vunpack.c.l.b16 %v104
  %v485 = vunpack.c.l.b16 %v105
  %v486 = vunpack.c.l.b16 %v106
  %v487 = vunpack.c.l.b16 %v107
  %v488 = vunpack.c.l.b16 %v108
  %v489 = vunpack.c.l.b16 %v109
  %v490 = vunpack.c.l.b16 %v110
  %v491 = vunpack.c.l.b16 %v111
  %v492 = vunpack.c.l.b16 %v112
  %v493 = vunpack.c.l.b16 %v113
  %v494 = vunpack.c.l.b16 %v114
  %v495 = vunpack.c.l.b16 %v115
  %v496 = vunpack.c.l.b16 %v116
  %v497 = vunpack.c.l.b16 %v117
  %v498 = vunpack.c.l.b16 %v118
  %v499 = vunpack.c.l.b16 %v119
  %v500 = vunpack.c.l.b16 %v120
  %v501 = vunpack.c.l.b16 %v121
  %v502 = vunpack.c.l.b16 %v122
  %v503 = vunpack.c.l.b16 %v123
  %v504 = vunpack.c.l.b16 %v124
  %v505 = vunpack.c.l.b16 %v125
  %v506 = vunpack.c.l.b16 %v126
  %v507 = vunpack.c.l.b16 %v127
  %v508 = vunpack.c.l.b16 %v128
  %v509 = vunpack.c.l.b16 %v129
  %v510 = vunpack.c.l.b16 %v130
  %v511 = vunpack.c.l.b16 %v131
  %v512 = vunpack.c.l.b16 %v132
  %v513 = vunpack.c.l.b16 %v133
  %v514 = vunpack.c.l.b16 %v134
  %v515 = vunpack.c.l.b16 %v135
  %v516 = vunpack.c.l.b16 %v136
  %v517 = vunpack.c.l.b16 %v137
  %v518 = vunpack.c.l.b16 %v138
  %v519 = vunpack.c.l.b16 %v139
  %v520 = vunpack.c.l.b16 %v140
  %v521 = vunpack.c.l.b16 %v141
  %v522 = vunpack.c.l.b16 %v142
  %v523 = vunpack.c.l.b16 %v143
  %v524 = vunpack.c.l.b16 %v144
  %v525 = vunpack.c.l.b16 %v145
  %v526 = vunpack.c.l.b16 %v146
  %v527 = vunpack.c.l.b16 %v147
  %v528 = vunpack.c.l.b16 %v148
  %v529 = vunpack.c.l.b16 %v149
  %v530 = vunpack.c.l.b16 %v150
  %v531 = vunpack.c.l.b16 %v151
  %v532 = vunpack.c.l.b16 %v152
  %v533 = vunpack.c.l.b16 %v153
  %v534 = vunpack.c.l.b16 %v154
  %v535 = vunpack.c.l.b16 %v155
  %v536 = vunpack.c.l.b16 %v156
  %v537 = vunpack.c.l.b16 %v157
  %v538 = vunpack.c.l.b16 %v158
  %v539 = vunpack.c.l.b16 %v159
  %v540 = vunpack.c.l.b16 %v160
  %v541 = vunpack.c.l.b16 %v161
  %v542 = vunpack.c.l.b16 %v162
  %v543 = vunpack.c.l.b16 %v163
  %v544 = vunpack.c.l.b16 %v164
  %v545 = vunpack.c.l.b16 %v165
  %v546 = vunpack.c.l.b16 %v166
  %v547 = vunpack.c.l.b16 %v167
  %v548 = vunpack.c.l.b16 %v168
  %v549 = vunpack.c.l.b16 %v169
  %v550 = vunpack.c.l.b16 %v170
  %v551 = vunpack.c.l.b16 %v171
  %v552 = vunpack.c.l.b16 %v172
  %v553 = vunpack.c.l.b16 %v173
  %v554 = vunpack.c.l.b16 %v174
  %v555 = vunpack.c.l.b16 %v175
  %v556 = vunpack.c.l.b16 %v176
  %v557 = vunpack.c.l.b16 %v177
  %v558 = vunpack.c.l.b16 %v178
  %v559 = vunpack.c.l.b16 %v179
  %v560 = vunpack.c.l.b16 %v180
  %v561 = vunpack.c.l.b16 %v181
  %v562 = vpack.c.b16 %v419, %v418
  %v563 = vpack.c.b16 %v421, %v420
  %v564 = vpack.c.b16 %v423, %v422
  %v565 = vpack.c.b16 %v425, %v424
  %v566 = vpack.c.b16 %v427, %v426
  %v567 = vpack.c.b16 %v429, %v428
  %v568 = vpack.c.b16 %v431, %v430
  %v569 = vpack.c.b16 %v433, %v432
  %v570 = vpack.c.b16 %v435, %v434
  %v571 = vpack.c.b16 %v437, %v436
  %v572 = vpack.c.b16 %v439, %v438
  %v573 = vpack.c.b16 %v441, %v440
  %v574 = vpack.c.b16 %v443, %v442
  %v575 = vpack.c.b16 %v445, %v444
  %v576 = vpack.c.b16 %v447, %v446
  %v577 = vpack.c.b16 %v449, %v448
  %v578 = vpack.c.b16 %v451, %v450
  %v579 = vpack.c.b16 %v453, %v452
  %v580 = vpack.c.b16 %v455, %v454
  %v581 = vpack.c.b16 %v457, %v456
  %v582 = vpack.c.b16 %v459, %v458
  %v583 = vpack.c.b16 %v461, %v460
  %v584 = vpack.c.b16 %v463, %v462
  %v585 = vpack.c.b16 %v465, %v464
  %v586 = vpack.c.b16 %v467, %v466
  %v587 = vpack.c.b16 %v469, %v468
  %v588 = vpack.c.b16 %v471, %v470
  %v589 = vpack.c.b16 %v473, %v472
  %v590 = vpack.c.b16 %v475, %v474
  %v591 = vpack.c.b16 %v477, %v476
  %v592 = vpack.c.b16 %v479, %v478
  %v593 = vpack.c.b16 %v481, %v480
  %v594 = vpack.c.b16 %v483, %v482
  %v595 = vpack.c.b16 %v485, %v484
  %v596 = vpack.c.b16 %v487, %v486
  %v597 = vpack.c.b16 %v489, %v488
  %v598 = vpack.c.b16 %v491, %v490
  %v599 = vpack.c.b16 %v493, %v492
  %v600 = vpack.c.b16 %v495, %v494
  %v601 = vpack.c.b16 %v497, %v496
  %v602 = vpack.c.b16 %v499, %v498
  %v603 = vpack.c.b16 %v501, %v500
  %v604 = vpack.c.b16 %v503, %v502
  %v605 = vpack.c.b16 %v505, %v504
  %v606 = vpack.c.b16 %v507, %v506
  %v607 = vpack.c.b16 %v509, %v508
  %v608 = vpack.c.b16 %v511, %v510
  %v609 = vpack.c.b16 %v513, %v512
  %v610 = vpack.c.b16 %v515, %v514
  %v611 = vpack.c.b16 %v517, %v516
  %v612 = vpack.c.b16 %v519, %v518
  %v613 = vpack.c.b16 %v521, %v520
  %v614 = vpack.c.b16 %v523, %v522
  %v615 = vpack.c.b16 %v525, %v524
  %v616 = vpack.c.b16 %v527, %v526
  %v617 = vpack.c.b16 %v529, %v528
  %v618 = vpack.c.b16 %v531, %v530
  %v619 = vpack.c.b16 %v533, %v532
  %v620 = vpack.c.b16 %v535, %v534
  %v621 = vpack.c.b16 %v537, %v536
  %v622 = vpack.c.b16 %v539, %v538
  %v623 = vpack.c.b16 %v541, %v540
  %v624 = vpack.c.b16 %v543, %v542
  %v625 = vpack.c.b16 %v545, %v544
  %v626 = vpack.c.b16 %v547, %v546
  %v627 = vpack.c.b16 %v549, %v548
  %v628 = vpack.c.b16 %v551, %v550
  %v629 = vpack.c.b16 %v553, %v552
  %v630 = vpack.c.b16 %v555, %v554
  %v631 = vpack.c.b16 %v557, %v556
  %v632 = vpack.c.b16 %v559, %v558
  %v633 = vpack.c.b16 %v561, %v560
  %706 = vmatprep.subr.bf16.mxu0 0
  %707 = vmatpush1.bf16.msra.mxu0 %v562
  %708 = vmatprep.subr.bf16.mxu0 0
  %709 = vmatpush1.bf16.msra.mxu0 %v563
  %710 = vmatprep.subr.bf16.mxu0 0
  %711 = vmatpush1.bf16.msra.mxu0 %v564
  %712 = vmatprep.subr.bf16.mxu0 0
  %713 = vmatpush1.bf16.msra.mxu0 %v565
  %714 = vmatprep.subr.bf16.mxu0 0
  %715 = vmatpush1.bf16.msra.mxu0 %v566
  %716 = vmatprep.subr.bf16.mxu0 0
  %717 = vmatpush1.bf16.msra.mxu0 %v567
  %718 = vmatprep.subr.bf16.mxu0 0
  %719 = vmatpush1.bf16.msra.mxu0 %v568
  %720 = vmatprep.subr.bf16.mxu0 0
  %721 = vmatpush1.bf16.msra.mxu0 %v569
  %722 = vmatprep.subr.bf16.mxu0 0
  %723 = vmatpush1.bf16.msra.mxu0 %v570
  %724 = vmatprep.subr.bf16.mxu0 0
  %725 = vmatpush1.bf16.msra.mxu0 %v571
  %726 = vmatprep.subr.bf16.mxu0 0
  %727 = vmatpush1.bf16.msra.mxu0 %v572
  %728 = vmatprep.subr.bf16.mxu0 0
  %729 = vmatpush1.bf16.msra.mxu0 %v573
  %730 = vmatprep.subr.bf16.mxu0 0
  %731 = vmatpush1.bf16.msra.mxu0 %v574
  %732 = vmatprep.subr.bf16.mxu0 0
  %733 = vmatpush1.bf16.msra.mxu0 %v575
  %734 = vmatprep.subr.bf16.mxu0 0
  %735 = vmatpush1.bf16.msra.mxu0 %v576
  %736 = vmatprep.subr.bf16.mxu0 0
  %737 = vmatpush1.bf16.msra.mxu0 %v577
  %738 = vmatprep.mubr.bf16.mxu0 %v239
  %739 = vmatmul.mubr.bf16.gmra.mrb[0].mxu0 %v238
  %v740 = vpop.f32.mrb[0].mxu0
  %v741 = vadd.f32 0.0, %v740
  %v742 = vpop.f32.mrb[0].mxu0
  %v743 = vpop.f32.mrb[0].mxu0
  %v744 = vadd.f32 0.0, %v743
  %v745 = vpop.f32.mrb[0].mxu0
  %746 = vmatprep.mubr.bf16.mxu0 %v248
  %747 = vmatmul.mubr.bf16.gmra.mrb[0].mxu0 %v247
  %v748 = vpop.f32.mrb[0].mxu0
  %v749 = vadd.f32 0.0, %v748
  %v750 = vpop.f32.mrb[0].mxu0
  %v751 = vpop.f32.mrb[0].mxu0
  %v752 = vadd.f32 0.0, %v751
  %v753 = vpop.f32.mrb[0].mxu0
  %754 = vdwg.mxu0
  %755 = vmatprep.subr.bf16.mxu0 0
  %756 = vmatpush1.bf16.msra.mxu0 %v578
  %757 = vmatprep.subr.bf16.mxu0 0
  %758 = vmatpush1.bf16.msra.mxu0 %v579
  %759 = vmatprep.subr.bf16.mxu0 0
  %760 = vmatpush1.bf16.msra.mxu0 %v580
  %761 = vmatprep.subr.bf16.mxu0 0
  %762 = vmatpush1.bf16.msra.mxu0 %v581
  %763 = vmatprep.subr.bf16.mxu0 0
  %764 = vmatpush1.bf16.msra.mxu0 %v582
  %765 = vmatprep.subr.bf16.mxu0 0
  %766 = vmatpush1.bf16.msra.mxu0 %v583
  %767 = vmatprep.subr.bf16.mxu0 0
  %768 = vmatpush1.bf16.msra.mxu0 %v584
  %769 = vmatprep.subr.bf16.mxu0 0
  %770 = vmatpush1.bf16.msra.mxu0 %v585
  %771 = vmatprep.subr.bf16.mxu0 0
  %772 = vmatpush1.bf16.msra.mxu0 %v586
  %773 = vmatprep.subr.bf16.mxu0 0
  %774 = vmatpush1.bf16.msra.mxu0 %v587
  %775 = vmatprep.subr.bf16.mxu0 0
  %776 = vmatpush1.bf16.msra.mxu0 %v588
  %777 = vmatprep.subr.bf16.mxu0 0
  %778 = vmatpush1.bf16.msra.mxu0 %v589
  %779 = vmatprep.subr.bf16.mxu0 0
  %780 = vmatpush1.bf16.msra.mxu0 %v590
  %781 = vmatprep.subr.bf16.mxu0 0
  %782 = vmatpush1.bf16.msra.mxu0 %v591
  %783 = vmatprep.subr.bf16.mxu0 0
  %784 = vmatpush1.bf16.msra.mxu0 %v592
  %785 = vmatprep.subr.bf16.mxu0 0
  %786 = vmatpush1.bf16.msra.mxu0 %v593
  %787 = vmatprep.mubr.bf16.mxu0 %v241
  %788 = vmatmul.mubr.bf16.gmra.mrb[0].mxu0 %v240
  %v789 = vpop.f32.mrb[0].mxu0
  %v790 = vadd.f32 %v741, %v789
  %v791 = vpop.f32.mrb[0].mxu0
  %v792 = vpop.f32.mrb[0].mxu0
  %v793 = vadd.f32 %v744, %v792
  %v794 = vpop.f32.mrb[0].mxu0
  %795 = vmatprep.mubr.bf16.mxu0 %v250
  %796 = vmatmul.mubr.bf16.gmra.mrb[0].mxu0 %v249
  %v797 = vpop.f32.mrb[0].mxu0
  %v798 = vadd.f32 %v749, %v797
  %v799 = vpop.f32.mrb[0].mxu0
  %v800 = vpop.f32.mrb[0].mxu0
  %v801 = vadd.f32 %v752, %v800
  %v802 = vpop.f32.mrb[0].mxu0
  %803 = vdwg.mxu0
  %804 = vmatprep.subr.bf16.mxu0 0
  %805 = vmatpush1.bf16.msra.mxu0 %v594
  %806 = vmatprep.subr.bf16.mxu0 0
  %807 = vmatpush1.bf16.msra.mxu0 %v595
  %808 = vmatprep.subr.bf16.mxu0 0
  %809 = vmatpush1.bf16.msra.mxu0 %v596
  %810 = vmatprep.subr.bf16.mxu0 0
  %811 = vmatpush1.bf16.msra.mxu0 %v597
  %812 = vmatprep.subr.bf16.mxu0 0
  %813 = vmatpush1.bf16.msra.mxu0 %v598
  %814 = vmatprep.subr.bf16.mxu0 0
  %815 = vmatpush1.bf16.msra.mxu0 %v599
  %816 = vmatprep.subr.bf16.mxu0 0
  %817 = vmatpush1.bf16.msra.mxu0 %v600
  %818 = vmatprep.subr.bf16.mxu0 0
  %819 = vmatpush1.bf16.msra.mxu0 %v601
  %820 = vmatprep.subr.bf16.mxu0 0
  %821 = vmatpush1.bf16.msra.mxu0 %v602
  %822 = vmatprep.subr.bf16.mxu0 0
  %823 = vmatpush1.bf16.msra.mxu0 %v603
  %824 = vmatprep.subr.bf16.mxu0 0
  %825 = vmatpush1.bf16.msra.mxu0 %v604
  %826 = vmatprep.subr.bf16.mxu0 0
  %827 = vmatpush1.bf16.msra.mxu0 %v605
  %828 = vmatprep.subr.bf16.mxu0 0
  %829 = vmatpush1.bf16.msra.mxu0 %v606
  %830 = vmatprep.subr.bf16.mxu0 0
  %831 = vmatpush1.bf16.msra.mxu0 %v607
  %832 = vmatprep.subr.bf16.mxu0 0
  %833 = vmatpush1.bf16.msra.mxu0 %v608
  %834 = vmatprep.subr.bf16.mxu0 0
  %835 = vmatpush1.bf16.msra.mxu0 %v609
  %836 = vmatprep.mubr.bf16.mxu0 %v243
  %837 = vmatmul.mubr.bf16.gmra.mrb[0].mxu0 %v242
  %v838 = vpop.f32.mrb[0].mxu0
  %v839 = vadd.f32 %v790, %v838
  %v840 = vpop.f32.mrb[0].mxu0
  %v841 = vpop.f32.mrb[0].mxu0
  %v842 = vadd.f32 %v793, %v841
  %v843 = vpop.f32.mrb[0].mxu0
  %844 = vmatprep.mubr.bf16.mxu0 %v252
  %845 = vmatmul.mubr.bf16.gmra.mrb[0].mxu0 %v251
  %v846 = vpop.f32.mrb[0].mxu0
  %v847 = vadd.f32 %v798, %v846
  %v848 = vpop.f32.mrb[0].mxu0
  %v849 = vpop.f32.mrb[0].mxu0
  %v850 = vadd.f32 %v801, %v849
  %v851 = vpop.f32.mrb[0].mxu0
  %852 = vdwg.mxu0
  %853 = vmatprep.subr.bf16.mxu0 0
  %854 = vmatpush1.bf16.msra.mxu0 %v610
  %855 = vmatprep.subr.bf16.mxu0 0
  %856 = vmatpush1.bf16.msra.mxu0 %v611
  %857 = vmatprep.subr.bf16.mxu0 0
  %858 = vmatpush1.bf16.msra.mxu0 %v612
  %859 = vmatprep.subr.bf16.mxu0 0
  %860 = vmatpush1.bf16.msra.mxu0 %v613
  %861 = vmatprep.subr.bf16.mxu0 0
  %862 = vmatpush1.bf16.msra.mxu0 %v614
  %863 = vmatprep.subr.bf16.mxu0 0
  %864 = vmatpush1.bf16.msra.mxu0 %v615
  %865 = vmatprep.subr.bf16.mxu0 0
  %866 = vmatpush1.bf16.msra.mxu0 %v616
  %867 = vmatprep.subr.bf16.mxu0 0
  %868 = vmatpush1.bf16.msra.mxu0 %v617
  %869 = vmatprep.subr.bf16.mxu0 0
  %870 = vmatpush1.bf16.msra.mxu0 %v618
  %871 = vmatprep.subr.bf16.mxu0 0
  %872 = vmatpush1.bf16.msra.mxu0 %v619
  %873 = vmatprep.subr.bf16.mxu0 0
  %874 = vmatpush1.bf16.msra.mxu0 %v620
  %875 = vmatprep.subr.bf16.mxu0 0
  %876 = vmatpush1.bf16.msra.mxu0 %v621
  %877 = vmatprep.subr.bf16.mxu0 0
  %878 = vmatpush1.bf16.msra.mxu0 %v622
  %879 = vmatprep.subr.bf16.mxu0 0
  %880 = vmatpush1.bf16.msra.mxu0 %v623
  %881 = vmatprep.subr.bf16.mxu0 0
  %882 = vmatpush1.bf16.msra.mxu0 %v624
  %883 = vmatprep.subr.bf16.mxu0 0
  %884 = vmatpush1.bf16.msra.mxu0 %v625
  %885 = vmatprep.mubr.bf16.mxu0 %v245
  %886 = vmatmul.mubr.bf16.gmra.mrb[0].mxu0 %v244
  %v887 = vpop.f32.mrb[0].mxu0
  %v888 = vadd.f32 %v839, %v887
  %v889 = vpop.f32.mrb[0].mxu0
  %v890 = vpop.f32.mrb[0].mxu0
  %v891 = vadd.f32 %v842, %v890
  %v892 = vpop.f32.mrb[0].mxu0
  %893 = vmatprep.mubr.bf16.mxu0 %v254
  %894 = vmatmul.mubr.bf16.gmra.mrb[0].mxu0 %v253
  %v895 = vpop.f32.mrb[0].mxu0
  %v896 = vadd.f32 %v847, %v895
  %v897 = vpop.f32.mrb[0].mxu0
  %v898 = vpop.f32.mrb[0].mxu0
  %v899 = vadd.f32 %v850, %v898
  %v900 = vpop.f32.mrb[0].mxu0
  %901 = vdwg.mxu0
  %902 = vmatprep.subr.bf16.mxu0 0
  %903 = vmatpush1.bf16.msra.mxu0 %v626
  %904 = vmatprep.subr.bf16.mxu0 0
  %905 = vmatpush1.bf16.msra.mxu0 %v627
  %906 = vmatprep.subr.bf16.mxu0 0
  %907 = vmatpush1.bf16.msra.mxu0 %v628
  %908 = vmatprep.subr.bf16.mxu0 0
  %909 = vmatpush1.bf16.msra.mxu0 %v629
  %910 = vmatprep.subr.bf16.mxu0 0
  %911 = vmatpush1.bf16.msra.mxu0 %v630
  %912 = vmatprep.subr.bf16.mxu0 0
  %913 = vmatpush1.bf16.msra.mxu0 %v631
  %914 = vmatprep.subr.bf16.mxu0 0
  %915 = vmatpush1.bf16.msra.mxu0 %v632
  %916 = vmatprep.subr.bf16.mxu0 0
  %917 = vmatpush1.bf16.msra.mxu0 %v633
  %918 = vmatprep.subr.bf16.mxu0 0
  %919 = vmatpush1.bf16.msra.mxu0 0
  %920 = vmatprep.subr.bf16.mxu0 0
  %921 = vmatpush1.bf16.msra.mxu0 0
  %922 = vmatprep.subr.bf16.mxu0 0
  %923 = vmatpush1.bf16.msra.mxu0 0
  %924 = vmatprep.subr.bf16.mxu0 0
  %925 = vmatpush1.bf16.msra.mxu0 0
  %926 = vmatprep.subr.bf16.mxu0 0
  %927 = vmatpush1.bf16.msra.mxu0 0
  %928 = vmatprep.subr.bf16.mxu0 0
  %929 = vmatpush1.bf16.msra.mxu0 0
  %930 = vmatprep.subr.bf16.mxu0 0
  %931 = vmatpush1.bf16.msra.mxu0 0
  %932 = vmatprep.subr.bf16.mxu0 0
  %933 = vmatpush1.bf16.msra.mxu0 0
  %934 = vmatprep.mubr.bf16.mxu0 0
  %935 = vmatmul.mubr.bf16.gmra.mrb[0].mxu0 %v246
  %v936 = vpop.f32.mrb[0].mxu0
  %v937 = vadd.f32 %v888, %v936
  %v938 = vpop.f32.mrb[0].mxu0
  %v939 = vpop.f32.mrb[0].mxu0
  %v940 = vadd.f32 %v891, %v939
  %v941 = vpop.f32.mrb[0].mxu0
  %942 = vmatprep.mubr.bf16.mxu0 0
  %943 = vmatmul.mubr.bf16.gmra.mrb[0].mxu0 %v255
  %v944 = vpop.f32.mrb[0].mxu0
  %v945 = vadd.f32 %v896, %v944
  %v946 = vpop.f32.mrb[0].mxu0
  %v947 = vpop.f32.mrb[0].mxu0
  %v948 = vadd.f32 %v899, %v947
  %v949 = vpop.f32.mrb[0].mxu0
  %950 = vdwg.mxu0
  %v951 = vld [vmem:[%s2] sm:$0x1]
  %v953 = vlaneseq
  %v954 = vshrl.u32 %v953, 7
  %v955 = vsub.s32 0, %v954
  %v956 = vrot.slane %v951, %v955
  %v958 = vmul.f32 %v937, %v956
  %v959 = vmul.f32 %v940, %v956
  %v960 = vmul.f32 %v945, %v956
  %v961 = vmul.f32 %v948, %v956
  %v962 = vld [vmem:[%s3] sm:$0x1]
  %v964 = vlaneseq
  %v965 = vshrl.u32 %v964, 7
  %v966 = vsub.s32 0, %v965
  %v967 = vrot.slane %v962, %v966
  %v969 = vadd.f32 %v958, %v967
  %v970 = vadd.f32 %v959, %v967
  %v971 = vadd.f32 %v960, %v967
  %v972 = vadd.f32 %v961, %v967
  %v973 = vmax.f32 %v969, 0.0
  %v974 = vmax.f32 %v970, 0.0
  %v975 = vmax.f32 %v971, 0.0
  %v976 = vmax.f32 %v972, 0.0
  %v977 = vpack.c.bf16 %v974, %v973
  %v978 = vpack.c.bf16 %v976, %v975
  %v981 = vunpack.c.l.b16 %v977
  %v982 = vunpack.c.h.b16 %v977
  %v983 = vunpack.c.l.b16 %v978
  %v984 = vunpack.c.h.b16 %v978
  %v985 = vpack.c.b16 %v981, %v981
  %v986 = vpack.c.b16 %v982, %v982
  %v987 = vpack.c.b16 %v983, %v983
  %v988 = vpack.c.b16 %v984, %v984
  %993 = vst [vmem:[%s4] sm:$0xf] %v985
  %994 = vst [vmem:[%s4 + $0x4] sm:$0xf] %v986
  %995 = vst [vmem:[%s4 + $0x8] sm:$0xf] %v987
  %996 = vst [vmem:[%s4 + $0xc] sm:$0xf] %v988
  // Predicated region
  $region18: #{model_forward.8} parent=0 // pred_check
    _
  $region19: #{model_forward.8} parent=0 // pred_check_branch
    %998 = sbr.rel (0) target = $region21
  $region20: #{model_forward.8} parent=0 // pred_region
    _
  $region21: #{model_forward.8} parent=0 // pred_fallthru
    _
  // Predicated region
  $region22: #{model_forward.8} parent=0 // pred_check
    _
  $region23: #{model_forward.8} parent=0 // pred_check_branch
    %1000 = sbr.rel (0) target = $region25
  $region24: #{model_forward.8} parent=0 // pred_region
    _
  $region25: #{model_forward.8} parent=0 // pred_fallthru
    _

// kernel: model_forward.9
$region0: #{model_forward.9}
  #allocation0 [shape = 'u32[]', space=smem, size = 0x4, offset = 0x4, fixed_abs, tag = 'smem constant byte address 0x4 - core index']
  #allocation1 [shape = 'u32[144,128]{1,0:T(1,128)}', space=vmem, size = 0x12000, scoped, tag = 'internal scratch']
  %s0 = inlined_call_operand.vmem [shape: bf16[32,1152], index: 0, kind: input, shape index: {}]
  %s1 = inlined_call_operand.vmem [shape: bf16[1152,128], index: 1, kind: input, shape index: {}]
  %s2 = inlined_call_operand.vmem [shape: f32[1,128], index: 2, kind: input, shape index: {}]
  %s3 = inlined_call_operand.vmem [shape: f32[1,128], index: 3, kind: input, shape index: {}]
  %s4 = inlined_call_operand.vmem [shape: bf16[32,128], index: 4, kind: input, shape index: {}]
  %s5 = inlined_call_operand.vmem [shape: bf16[128,128], index: 5, kind: input, shape index: {}]
  %s6 = inlined_call_operand.vmem [shape: f32[1,128], index: 6, kind: input, shape index: {}]
  %s7 = inlined_call_operand.vmem [shape: f32[1,128], index: 7, kind: input, shape index: {}]
  %s8 = inlined_call_operand.vmem [shape: f32[2,32], index: 8, kind: input, shape index: {}]
  %s9 = inlined_call_operand.vmem [shape: f32[128,10], index: 9, kind: input, shape index: {}]
  %s10 = inlined_call_operand.vmem [shape: f32[1,10], index: 10, kind: input, shape index: {}]
  %s11 = inlined_call_operand.hbm [shape: f32[2,10], index: 11, kind: output, shape index: {}]
  %s12 = sld [smem:[#allocation0]]
  $region54: #{model_forward.9} parent=0
    _
  %s14 = ssub.s32 1, %s12
  %s15 = scalar_select 0, %s14, %s12
  $region1: #{model_forward.9} parent=0
    #allocation2 [shape = 'u8[1024]{0}', space=vmem, size = 0x400, scoped, tag = 'output window, operand 0, single buffered']
    #allocation3 [shape = 's32[1]{0}', space=sflag, size = 0x4, scoped, tag = 'scoped memory for model_forward.9']
    %16 = vsyncpa [#allocation3], 0
    // Predicated region
    $region2: #{model_forward.9} parent=1 // pred_check
      _
    $region3: #{model_forward.9} parent=1 // pred_check_branch
      %18 = sbr.rel (0) target = $region5
    $region4: #{model_forward.9} parent=1 // pred_region
      _
    $region5: #{model_forward.9} parent=1 // pred_fallthru
      _
    // Predicated region
    $region6: #{model_forward.9} parent=1 // pred_check
      _
    $region7: #{model_forward.9} parent=1 // pred_check_branch
      %20 = sbr.rel (0) target = $region9
    $region8: #{model_forward.9} parent=1 // pred_region
      _
    $region9: #{model_forward.9} parent=1 // pred_fallthru
      _
    // Predicated region
    $region10: #{model_forward.9} parent=1 // pred_check
      _
    $region11: #{model_forward.9} parent=1 // pred_check_branch
      %22 = sbr.rel (0) target = $region13
    $region12: #{model_forward.9} parent=1 // pred_region
      _
    $region13: #{model_forward.9} parent=1 // pred_fallthru
      _
    // Predicated region
    $region14: #{model_forward.9} parent=1 // pred_check
      _
    $region15: #{model_forward.9} parent=1 // pred_check_branch
      %24 = sbr.rel (0) target = $region17
    $region16: #{model_forward.9} parent=1 // pred_region
      _
    $region17: #{model_forward.9} parent=1 // pred_fallthru
      _
    // Predicated region
    $region18: #{model_forward.9} parent=1 // pred_check
      _
    $region19: #{model_forward.9} parent=1 // pred_check_branch
      %26 = sbr.rel (0) target = $region21
    $region20: #{model_forward.9} parent=1 // pred_region
      _
    $region21: #{model_forward.9} parent=1 // pred_fallthru
      _
    // Predicated region
    $region22: #{model_forward.9} parent=1 // pred_check
      _
    $region23: #{model_forward.9} parent=1 // pred_check_branch
      %28 = sbr.rel (0) target = $region25
    $region24: #{model_forward.9} parent=1 // pred_region
      _
    $region25: #{model_forward.9} parent=1 // pred_fallthru
      _
    // Predicated region
    $region26: #{model_forward.9} parent=1 // pred_check
      _
    $region27: #{model_forward.9} parent=1 // pred_check_branch
      %30 = sbr.rel (0) target = $region29
    $region28: #{model_forward.9} parent=1 // pred_region
      _
    $region29: #{model_forward.9} parent=1 // pred_fallthru
      _
    // Predicated region
    $region30: #{model_forward.9} parent=1 // pred_check
      _
    $region31: #{model_forward.9} parent=1 // pred_check_branch
      %32 = sbr.rel (0) target = $region33
    $region32: #{model_forward.9} parent=1 // pred_region
      _
    $region33: #{model_forward.9} parent=1 // pred_fallthru
      _
    // Predicated region
    $region34: #{model_forward.9} parent=1 // pred_check
      _
    $region35: #{model_forward.9} parent=1 // pred_check_branch
      %34 = sbr.rel (0) target = $region37
    $region36: #{model_forward.9} parent=1 // pred_region
      _
    $region37: #{model_forward.9} parent=1 // pred_fallthru
      _
    // Predicated region
    $region38: #{model_forward.9} parent=1 // pred_check
      _
    $region39: #{model_forward.9} parent=1 // pred_check_branch
      %36 = sbr.rel (0) target = $region41
    $region40: #{model_forward.9} parent=1 // pred_region
      _
    $region41: #{model_forward.9} parent=1 // pred_fallthru
      _
    // Predicated region
    $region42: #{model_forward.9} parent=1 // pred_check
      _
    $region43: #{model_forward.9} parent=1 // pred_check_branch
      %38 = sbr.rel (0) target = $region45
    $region44: #{model_forward.9} parent=1 // pred_region
      _
    $region45: #{model_forward.9} parent=1 // pred_fallthru
      _
    %v40 = vld [vmem:[%s0] sm:$0xff]
    %v41 = vld [vmem:[%s0 + $0x8] sm:$0xff]
    %v42 = vld [vmem:[%s0 + $0x10] sm:$0xff]
    %v43 = vld [vmem:[%s0 + $0x18] sm:$0xff]
    %v44 = vld [vmem:[%s0 + $0x20] sm:$0xf]
    %v45 = vld [vmem:[%s0 + $0x24] sm:$0xff]
    %v46 = vld [vmem:[%s0 + $0x2c] sm:$0xff]
    %v47 = vld [vmem:[%s0 + $0x34] sm:$0xff]
    %v48 = vld [vmem:[%s0 + $0x3c] sm:$0xff]
    %v49 = vld [vmem:[%s0 + $0x44] sm:$0xf]
    %v50 = vld [vmem:[%s0 + $0x48] sm:$0xff]
    %v51 = vld [vmem:[%s0 + $0x50] sm:$0xff]
    %v52 = vld [vmem:[%s0 + $0x58] sm:$0xff]
    %v53 = vld [vmem:[%s0 + $0x60] sm:$0xff]
    %v54 = vld [vmem:[%s0 + $0x68] sm:$0xf]
    %v55 = vld [vmem:[%s0 + $0x6c] sm:$0xff]
    %v56 = vld [vmem:[%s0 + $0x74] sm:$0xff]
    %v57 = vld [vmem:[%s0 + $0x7c] sm:$0xff]
    %v58 = vld [vmem:[%s0 + $0x84] sm:$0xff]
    %v59 = vld [vmem:[%s0 + $0x8c] sm:$0xf]
    %v60 = vld [vmem:[%s1] sm:$0xf]
    %v61 = vld [vmem:[%s1 + $0x4] sm:$0xf]
    %v62 = vld [vmem:[%s1 + $0x8] sm:$0xf]
    %v63 = vld [vmem:[%s1 + $0xc] sm:$0xf]
    %v64 = vld [vmem:[%s1 + $0x10] sm:$0xf]
    %v65 = vld [vmem:[%s1 + $0x14] sm:$0xf]
    %v66 = vld [vmem:[%s1 + $0x18] sm:$0xf]
    %v67 = vld [vmem:[%s1 + $0x1c] sm:$0xf]
    %v68 = vld [vmem:[%s1 + $0x20] sm:$0xf]
    %v69 = vld [vmem:[%s1 + $0x24] sm:$0xf]
    %v70 = vld [vmem:[%s1 + $0x28] sm:$0xf]
    %v71 = vld [vmem:[%s1 + $0x2c] sm:$0xf]
    %v72 = vld [vmem:[%s1 + $0x30] sm:$0xf]
    %v73 = vld [vmem:[%s1 + $0x34] sm:$0xf]
    %v74 = vld [vmem:[%s1 + $0x38] sm:$0xf]
    %v75 = vld [vmem:[%s1 + $0x3c] sm:$0xf]
    %v76 = vld [vmem:[%s1 + $0x40] sm:$0xf]
    %v77 = vld [vmem:[%s1 + $0x44] sm:$0xf]
    %v78 = vld [vmem:[%s1 + $0x48] sm:$0xf]
    %v79 = vld [vmem:[%s1 + $0x4c] sm:$0xf]
    %v80 = vld [vmem:[%s1 + $0x50] sm:$0xf]
    %v81 = vld [vmem:[%s1 + $0x54] sm:$0xf]
    %v82 = vld [vmem:[%s1 + $0x58] sm:$0xf]
    %v83 = vld [vmem:[%s1 + $0x5c] sm:$0xf]
    %v84 = vld [vmem:[%s1 + $0x60] sm:$0xf]
    %v85 = vld [vmem:[%s1 + $0x64] sm:$0xf]
    %v86 = vld [vmem:[%s1 + $0x68] sm:$0xf]
    %v87 = vld [vmem:[%s1 + $0x6c] sm:$0xf]
    %v88 = vld [vmem:[%s1 + $0x70] sm:$0xf]
    %v89 = vld [vmem:[%s1 + $0x74] sm:$0xf]
    %v90 = vld [vmem:[%s1 + $0x78] sm:$0xf]
    %v91 = vld [vmem:[%s1 + $0x7c] sm:$0xf]
    %v92 = vld [vmem:[%s1 + $0x80] sm:$0xf]
    %v93 = vld [vmem:[%s1 + $0x84] sm:$0xf]
    %v94 = vld [vmem:[%s1 + $0x88] sm:$0xf]
    %v95 = vld [vmem:[%s1 + $0x8c] sm:$0xf]
    %v96 = vld [vmem:[%s1 + $0x90] sm:$0xf]
    %v97 = vld [vmem:[%s1 + $0x94] sm:$0xf]
    %v98 = vld [vmem:[%s1 + $0x98] sm:$0xf]
    %v99 = vld [vmem:[%s1 + $0x9c] sm:$0xf]
    %v100 = vld [vmem:[%s1 + $0xa0] sm:$0xf]
    %v101 = vld [vmem:[%s1 + $0xa4] sm:$0xf]
    %v102 = vld [vmem:[%s1 + $0xa8] sm:$0xf]
    %v103 = vld [vmem:[%s1 + $0xac] sm:$0xf]
    %v104 = vld [vmem:[%s1 + $0xb0] sm:$0xf]
    %v105 = vld [vmem:[%s1 + $0xb4] sm:$0xf]
    %v106 = vld [vmem:[%s1 + $0xb8] sm:$0xf]
    %v107 = vld [vmem:[%s1 + $0xbc] sm:$0xf]
    %v108 = vld [vmem:[%s1 + $0xc0] sm:$0xf]
    %v109 = vld [vmem:[%s1 + $0xc4] sm:$0xf]
    %v110 = vld [vmem:[%s1 + $0xc8] sm:$0xf]
    %v111 = vld [vmem:[%s1 + $0xcc] sm:$0xf]
    %v112 = vld [vmem:[%s1 + $0xd0] sm:$0xf]
    %v113 = vld [vmem:[%s1 + $0xd4] sm:$0xf]
    %v114 = vld [vmem:[%s1 + $0xd8] sm:$0xf]
    %v115 = vld [vmem:[%s1 + $0xdc] sm:$0xf]
    %v116 = vld [vmem:[%s1 + $0xe0] sm:$0xf]
    %v117 = vld [vmem:[%s1 + $0xe4] sm:$0xf]
    %v118 = vld [vmem:[%s1 + $0xe8] sm:$0xf]
    %v119 = vld [vmem:[%s1 + $0xec] sm:$0xf]
    %v120 = vld [vmem:[%s1 + $0xf0] sm:$0xf]
    %v121 = vld [vmem:[%s1 + $0xf4] sm:$0xf]
    %v122 = vld [vmem:[%s1 + $0xf8] sm:$0xf]
    %v123 = vld [vmem:[%s1 + $0xfc] sm:$0xf]
    %v124 = vld [vmem:[%s1 + $0x100] sm:$0xf]
    %v125 = vld [vmem:[%s1 + $0x104] sm:$0xf]
    %v126 = vld [vmem:[%s1 + $0x108] sm:$0xf]
    %v127 = vld [vmem:[%s1 + $0x10c] sm:$0xf]
    %v128 = vld [vmem:[%s1 + $0x110] sm:$0xf]
    %v129 = vld [vmem:[%s1 + $0x114] sm:$0xf]
    %v130 = vld [vmem:[%s1 + $0x118] sm:$0xf]
    %v131 = vld [vmem:[%s1 + $0x11c] sm:$0xf]
    %v132 = vld [vmem:[%s1 + $0x120] sm:$0xf]
    %v133 = vld [vmem:[%s1 + $0x124] sm:$0xf]
    %v134 = vld [vmem:[%s1 + $0x128] sm:$0xf]
    %v135 = vld [vmem:[%s1 + $0x12c] sm:$0xf]
    %v136 = vld [vmem:[%s1 + $0x130] sm:$0xf]
    %v137 = vld [vmem:[%s1 + $0x134] sm:$0xf]
    %v138 = vld [vmem:[%s1 + $0x138] sm:$0xf]
    %v139 = vld [vmem:[%s1 + $0x13c] sm:$0xf]
    %v140 = vld [vmem:[%s1 + $0x140] sm:$0xf]
    %v141 = vld [vmem:[%s1 + $0x144] sm:$0xf]
    %v142 = vld [vmem:[%s1 + $0x148] sm:$0xf]
    %v143 = vld [vmem:[%s1 + $0x14c] sm:$0xf]
    %v144 = vld [vmem:[%s1 + $0x150] sm:$0xf]
    %v145 = vld [vmem:[%s1 + $0x154] sm:$0xf]
    %v146 = vld [vmem:[%s1 + $0x158] sm:$0xf]
    %v147 = vld [vmem:[%s1 + $0x15c] sm:$0xf]
    %v148 = vld [vmem:[%s1 + $0x160] sm:$0xf]
    %v149 = vld [vmem:[%s1 + $0x164] sm:$0xf]
    %v150 = vld [vmem:[%s1 + $0x168] sm:$0xf]
    %v151 = vld [vmem:[%s1 + $0x16c] sm:$0xf]
    %v152 = vld [vmem:[%s1 + $0x170] sm:$0xf]
    %v153 = vld [vmem:[%s1 + $0x174] sm:$0xf]
    %v154 = vld [vmem:[%s1 + $0x178] sm:$0xf]
    %v155 = vld [vmem:[%s1 + $0x17c] sm:$0xf]
    %v156 = vld [vmem:[%s1 + $0x180] sm:$0xf]
    %v157 = vld [vmem:[%s1 + $0x184] sm:$0xf]
    %v158 = vld [vmem:[%s1 + $0x188] sm:$0xf]
    %v159 = vld [vmem:[%s1 + $0x18c] sm:$0xf]
    %v160 = vld [vmem:[%s1 + $0x190] sm:$0xf]
    %v161 = vld [vmem:[%s1 + $0x194] sm:$0xf]
    %v162 = vld [vmem:[%s1 + $0x198] sm:$0xf]
    %v163 = vld [vmem:[%s1 + $0x19c] sm:$0xf]
    %v164 = vld [vmem:[%s1 + $0x1a0] sm:$0xf]
    %v165 = vld [vmem:[%s1 + $0x1a4] sm:$0xf]
    %v166 = vld [vmem:[%s1 + $0x1a8] sm:$0xf]
    %v167 = vld [vmem:[%s1 + $0x1ac] sm:$0xf]
    %v168 = vld [vmem:[%s1 + $0x1b0] sm:$0xf]
    %v169 = vld [vmem:[%s1 + $0x1b4] sm:$0xf]
    %v170 = vld [vmem:[%s1 + $0x1b8] sm:$0xf]
    %v171 = vld [vmem:[%s1 + $0x1bc] sm:$0xf]
    %v172 = vld [vmem:[%s1 + $0x1c0] sm:$0xf]
    %v173 = vld [vmem:[%s1 + $0x1c4] sm:$0xf]
    %v174 = vld [vmem:[%s1 + $0x1c8] sm:$0xf]
    %v175 = vld [vmem:[%s1 + $0x1cc] sm:$0xf]
    %v176 = vld [vmem:[%s1 + $0x1d0] sm:$0xf]
    %v177 = vld [vmem:[%s1 + $0x1d4] sm:$0xf]
    %v178 = vld [vmem:[%s1 + $0x1d8] sm:$0xf]
    %v179 = vld [vmem:[%s1 + $0x1dc] sm:$0xf]
    %v180 = vld [vmem:[%s1 + $0x1e0] sm:$0xf]
    %v181 = vld [vmem:[%s1 + $0x1e4] sm:$0xf]
    %v182 = vld [vmem:[%s1 + $0x1e8] sm:$0xf]
    %v183 = vld [vmem:[%s1 + $0x1ec] sm:$0xf]
    %v184 = vld [vmem:[%s1 + $0x1f0] sm:$0xf]
    %v185 = vld [vmem:[%s1 + $0x1f4] sm:$0xf]
    %v186 = vld [vmem:[%s1 + $0x1f8] sm:$0xf]
    %v187 = vld [vmem:[%s1 + $0x1fc] sm:$0xf]
    %v188 = vld [vmem:[%s1 + $0x200] sm:$0xf]
    %v189 = vld [vmem:[%s1 + $0x204] sm:$0xf]
    %v190 = vld [vmem:[%s1 + $0x208] sm:$0xf]
    %v191 = vld [vmem:[%s1 + $0x20c] sm:$0xf]
    %v192 = vld [vmem:[%s1 + $0x210] sm:$0xf]
    %v193 = vld [vmem:[%s1 + $0x214] sm:$0xf]
    %v194 = vld [vmem:[%s1 + $0x218] sm:$0xf]
    %v195 = vld [vmem:[%s1 + $0x21c] sm:$0xf]
    %v196 = vld [vmem:[%s1 + $0x220] sm:$0xf]
    %v197 = vld [vmem:[%s1 + $0x224] sm:$0xf]
    %v198 = vld [vmem:[%s1 + $0x228] sm:$0xf]
    %v199 = vld [vmem:[%s1 + $0x22c] sm:$0xf]
    %v200 = vld [vmem:[%s1 + $0x230] sm:$0xf]
    %v201 = vld [vmem:[%s1 + $0x234] sm:$0xf]
    %v202 = vld [vmem:[%s1 + $0x238] sm:$0xf]
    %v203 = vld [vmem:[%s1 + $0x23c] sm:$0xf]
    %v224 = vunpack.c.l.b16 %v40
    %v225 = vunpack.c.h.b16 %v40
    %v226 = vunpack.c.l.b16 %v41
    %v227 = vunpack.c.h.b16 %v41
    %v228 = vunpack.c.l.b16 %v42
    %v229 = vunpack.c.h.b16 %v42
    %v230 = vunpack.c.l.b16 %v43
    %v231 = vunpack.c.h.b16 %v43
    %v232 = vunpack.c.l.b16 %v44
    %v233 = vunpack.c.l.b16 %v45
    %v234 = vunpack.c.h.b16 %v45
    %v235 = vunpack.c.l.b16 %v46
    %v236 = vunpack.c.h.b16 %v46
    %v237 = vunpack.c.l.b16 %v47
    %v238 = vunpack.c.h.b16 %v47
    %v239 = vunpack.c.l.b16 %v48
    %v240 = vunpack.c.h.b16 %v48
    %v241 = vunpack.c.l.b16 %v49
    %v242 = vunpack.c.l.b16 %v50
    %v243 = vunpack.c.h.b16 %v50
    %v244 = vunpack.c.l.b16 %v51
    %v245 = vunpack.c.h.b16 %v51
    %v246 = vunpack.c.l.b16 %v52
    %v247 = vunpack.c.h.b16 %v52
    %v248 = vunpack.c.l.b16 %v53
    %v249 = vunpack.c.h.b16 %v53
    %v250 = vunpack.c.l.b16 %v54
    %v251 = vunpack.c.l.b16 %v55
    %v252 = vunpack.c.h.b16 %v55
    %v253 = vunpack.c.l.b16 %v56
    %v254 = vunpack.c.h.b16 %v56
    %v255 = vunpack.c.l.b16 %v57
    %v256 = vunpack.c.h.b16 %v57
    %v257 = vunpack.c.l.b16 %v58
    %v258 = vunpack.c.h.b16 %v58
    %v259 = vunpack.c.l.b16 %v59
    %v260 = vpack.c.b16 %v233, %v224
    %v261 = vpack.c.b16 %v234, %v225
    %v262 = vpack.c.b16 %v235, %v226
    %v263 = vpack.c.b16 %v236, %v227
    %v264 = vpack.c.b16 %v237, %v228
    %v265 = vpack.c.b16 %v238, %v229
    %v266 = vpack.c.b16 %v239, %v230
    %v267 = vpack.c.b16 %v240, %v231
    %v268 = vpack.c.b16 %v241, %v232
    %v269 = vpack.c.b16 %v251, %v242
    %v270 = vpack.c.b16 %v252, %v243
    %v271 = vpack.c.b16 %v253, %v244
    %v272 = vpack.c.b16 %v254, %v245
    %v273 = vpack.c.b16 %v255, %v246
    %v274 = vpack.c.b16 %v256, %v247
    %v275 = vpack.c.b16 %v257, %v248
    %v276 = vpack.c.b16 %v258, %v249
    %v277 = vpack.c.b16 %v259, %v250
    %v440 = vunpack.c.l.b16 %v60
    %v441 = vunpack.c.l.b16 %v61
    %v442 = vunpack.c.l.b16 %v62
    %v443 = vunpack.c.l.b16 %v63
    %v444 = vunpack.c.l.b16 %v64
    %v445 = vunpack.c.l.b16 %v65
    %v446 = vunpack.c.l.b16 %v66
    %v447 = vunpack.c.l.b16 %v67
    %v448 = vunpack.c.l.b16 %v68
    %v449 = vunpack.c.l.b16 %v69
    %v450 = vunpack.c.l.b16 %v70
    %v451 = vunpack.c.l.b16 %v71
    %v452 = vunpack.c.l.b16 %v72
    %v453 = vunpack.c.l.b16 %v73
    %v454 = vunpack.c.l.b16 %v74
    %v455 = vunpack.c.l.b16 %v75
    %v456 = vunpack.c.l.b16 %v76
    %v457 = vunpack.c.l.b16 %v77
    %v458 = vunpack.c.l.b16 %v78
    %v459 = vunpack.c.l.b16 %v79
    %v460 = vunpack.c.l.b16 %v80
    %v461 = vunpack.c.l.b16 %v81
    %v462 = vunpack.c.l.b16 %v82
    %v463 = vunpack.c.l.b16 %v83
    %v464 = vunpack.c.l.b16 %v84
    %v465 = vunpack.c.l.b16 %v85
    %v466 = vunpack.c.l.b16 %v86
    %v467 = vunpack.c.l.b16 %v87
    %v468 = vunpack.c.l.b16 %v88
    %v469 = vunpack.c.l.b16 %v89
    %v470 = vunpack.c.l.b16 %v90
    %v471 = vunpack.c.l.b16 %v91
    %v472 = vunpack.c.l.b16 %v92
    %v473 = vunpack.c.l.b16 %v93
    %v474 = vunpack.c.l.b16 %v94
    %v475 = vunpack.c.l.b16 %v95
    %v476 = vunpack.c.l.b16 %v96
    %v477 = vunpack.c.l.b16 %v97
    %v478 = vunpack.c.l.b16 %v98
    %v479 = vunpack.c.l.b16 %v99
    %v480 = vunpack.c.l.b16 %v100
    %v481 = vunpack.c.l.b16 %v101
    %v482 = vunpack.c.l.b16 %v102
    %v483 = vunpack.c.l.b16 %v103
    %v484 = vunpack.c.l.b16 %v104
    %v485 = vunpack.c.l.b16 %v105
    %v486 = vunpack.c.l.b16 %v106
    %v487 = vunpack.c.l.b16 %v107
    %v488 = vunpack.c.l.b16 %v108
    %v489 = vunpack.c.l.b16 %v109
    %v490 = vunpack.c.l.b16 %v110
    %v491 = vunpack.c.l.b16 %v111
    %v492 = vunpack.c.l.b16 %v112
    %v493 = vunpack.c.l.b16 %v113
    %v494 = vunpack.c.l.b16 %v114
    %v495 = vunpack.c.l.b16 %v115
    %v496 = vunpack.c.l.b16 %v116
    %v497 = vunpack.c.l.b16 %v117
    %v498 = vunpack.c.l.b16 %v118
    %v499 = vunpack.c.l.b16 %v119
    %v500 = vunpack.c.l.b16 %v120
    %v501 = vunpack.c.l.b16 %v121
    %v502 = vunpack.c.l.b16 %v122
    %v503 = vunpack.c.l.b16 %v123
    %v504 = vunpack.c.l.b16 %v124
    %v505 = vunpack.c.l.b16 %v125
    %v506 = vunpack.c.l.b16 %v126
    %v507 = vunpack.c.l.b16 %v127
    %v508 = vunpack.c.l.b16 %v128
    %v509 = vunpack.c.l.b16 %v129
    %v510 = vunpack.c.l.b16 %v130
    %v511 = vunpack.c.l.b16 %v131
    %v512 = vunpack.c.l.b16 %v132
    %v513 = vunpack.c.l.b16 %v133
    %v514 = vunpack.c.l.b16 %v134
    %v515 = vunpack.c.l.b16 %v135
    %v516 = vunpack.c.l.b16 %v136
    %v517 = vunpack.c.l.b16 %v137
    %v518 = vunpack.c.l.b16 %v138
    %v519 = vunpack.c.l.b16 %v139
    %v520 = vunpack.c.l.b16 %v140
    %v521 = vunpack.c.l.b16 %v141
    %v522 = vunpack.c.l.b16 %v142
    %v523 = vunpack.c.l.b16 %v143
    %v524 = vunpack.c.l.b16 %v144
    %v525 = vunpack.c.l.b16 %v145
    %v526 = vunpack.c.l.b16 %v146
    %v527 = vunpack.c.l.b16 %v147
    %v528 = vunpack.c.l.b16 %v148
    %v529 = vunpack.c.l.b16 %v149
    %v530 = vunpack.c.l.b16 %v150
    %v531 = vunpack.c.l.b16 %v151
    %v532 = vunpack.c.l.b16 %v152
    %v533 = vunpack.c.l.b16 %v153
    %v534 = vunpack.c.l.b16 %v154
    %v535 = vunpack.c.l.b16 %v155
    %v536 = vunpack.c.l.b16 %v156
    %v537 = vunpack.c.l.b16 %v157
    %v538 = vunpack.c.l.b16 %v158
    %v539 = vunpack.c.l.b16 %v159
    %v540 = vunpack.c.l.b16 %v160
    %v541 = vunpack.c.l.b16 %v161
    %v542 = vunpack.c.l.b16 %v162
    %v543 = vunpack.c.l.b16 %v163
    %v544 = vunpack.c.l.b16 %v164
    %v545 = vunpack.c.l.b16 %v165
    %v546 = vunpack.c.l.b16 %v166
    %v547 = vunpack.c.l.b16 %v167
    %v548 = vunpack.c.l.b16 %v168
    %v549 = vunpack.c.l.b16 %v169
    %v550 = vunpack.c.l.b16 %v170
    %v551 = vunpack.c.l.b16 %v171
    %v552 = vunpack.c.l.b16 %v172
    %v553 = vunpack.c.l.b16 %v173
    %v554 = vunpack.c.l.b16 %v174
    %v555 = vunpack.c.l.b16 %v175
    %v556 = vunpack.c.l.b16 %v176
    %v557 = vunpack.c.l.b16 %v177
    %v558 = vunpack.c.l.b16 %v178
    %v559 = vunpack.c.l.b16 %v179
    %v560 = vunpack.c.l.b16 %v180
    %v561 = vunpack.c.l.b16 %v181
    %v562 = vunpack.c.l.b16 %v182
    %v563 = vunpack.c.l.b16 %v183
    %v564 = vunpack.c.l.b16 %v184
    %v565 = vunpack.c.l.b16 %v185
    %v566 = vunpack.c.l.b16 %v186
    %v567 = vunpack.c.l.b16 %v187
    %v568 = vunpack.c.l.b16 %v188
    %v569 = vunpack.c.l.b16 %v189
    %v570 = vunpack.c.l.b16 %v190
    %v571 = vunpack.c.l.b16 %v191
    %v572 = vunpack.c.l.b16 %v192
    %v573 = vunpack.c.l.b16 %v193
    %v574 = vunpack.c.l.b16 %v194
    %v575 = vunpack.c.l.b16 %v195
    %v576 = vunpack.c.l.b16 %v196
    %v577 = vunpack.c.l.b16 %v197
    %v578 = vunpack.c.l.b16 %v198
    %v579 = vunpack.c.l.b16 %v199
    %v580 = vunpack.c.l.b16 %v200
    %v581 = vunpack.c.l.b16 %v201
    %v582 = vunpack.c.l.b16 %v202
    %v583 = vunpack.c.l.b16 %v203
    %v584 = vpack.c.b16 %v441, %v440
    %v585 = vpack.c.b16 %v443, %v442
    %v586 = vpack.c.b16 %v445, %v444
    %v587 = vpack.c.b16 %v447, %v446
    %v588 = vpack.c.b16 %v449, %v448
    %v589 = vpack.c.b16 %v451, %v450
    %v590 = vpack.c.b16 %v453, %v452
    %v591 = vpack.c.b16 %v455, %v454
    %v592 = vpack.c.b16 %v457, %v456
    %v593 = vpack.c.b16 %v459, %v458
    %v594 = vpack.c.b16 %v461, %v460
    %v595 = vpack.c.b16 %v463, %v462
    %v596 = vpack.c.b16 %v465, %v464
    %v597 = vpack.c.b16 %v467, %v466
    %v598 = vpack.c.b16 %v469, %v468
    %v599 = vpack.c.b16 %v471, %v470
    %v600 = vpack.c.b16 %v473, %v472
    %v601 = vpack.c.b16 %v475, %v474
    %v602 = vpack.c.b16 %v477, %v476
    %v603 = vpack.c.b16 %v479, %v478
    %v604 = vpack.c.b16 %v481, %v480
    %v605 = vpack.c.b16 %v483, %v482
    %v606 = vpack.c.b16 %v485, %v484
    %v607 = vpack.c.b16 %v487, %v486
    %v608 = vpack.c.b16 %v489, %v488
    %v609 = vpack.c.b16 %v491, %v490
    %v610 = vpack.c.b16 %v493, %v492
    %v611 = vpack.c.b16 %v495, %v494
    %v612 = vpack.c.b16 %v497, %v496
    %v613 = vpack.c.b16 %v499, %v498
    %v614 = vpack.c.b16 %v501, %v500
    %v615 = vpack.c.b16 %v503, %v502
    %v616 = vpack.c.b16 %v505, %v504
    %v617 = vpack.c.b16 %v507, %v506
    %v618 = vpack.c.b16 %v509, %v508
    %v619 = vpack.c.b16 %v511, %v510
    %v620 = vpack.c.b16 %v513, %v512
    %v621 = vpack.c.b16 %v515, %v514
    %v622 = vpack.c.b16 %v517, %v516
    %v623 = vpack.c.b16 %v519, %v518
    %v624 = vpack.c.b16 %v521, %v520
    %v625 = vpack.c.b16 %v523, %v522
    %v626 = vpack.c.b16 %v525, %v524
    %v627 = vpack.c.b16 %v527, %v526
    %v628 = vpack.c.b16 %v529, %v528
    %v629 = vpack.c.b16 %v531, %v530
    %v630 = vpack.c.b16 %v533, %v532
    %v631 = vpack.c.b16 %v535, %v534
    %v632 = vpack.c.b16 %v537, %v536
    %v633 = vpack.c.b16 %v539, %v538
    %v634 = vpack.c.b16 %v541, %v540
    %v635 = vpack.c.b16 %v543, %v542
    %v636 = vpack.c.b16 %v545, %v544
    %v637 = vpack.c.b16 %v547, %v546
    %v638 = vpack.c.b16 %v549, %v548
    %v639 = vpack.c.b16 %v551, %v550
    %v640 = vpack.c.b16 %v553, %v552
    %v641 = vpack.c.b16 %v555, %v554
    %v642 = vpack.c.b16 %v557, %v556
    %v643 = vpack.c.b16 %v559, %v558
    %v644 = vpack.c.b16 %v561, %v560
    %v645 = vpack.c.b16 %v563, %v562
    %v646 = vpack.c.b16 %v565, %v564
    %v647 = vpack.c.b16 %v567, %v566
    %v648 = vpack.c.b16 %v569, %v568
    %v649 = vpack.c.b16 %v571, %v570
    %v650 = vpack.c.b16 %v573, %v572
    %v651 = vpack.c.b16 %v575, %v574
    %v652 = vpack.c.b16 %v577, %v576
    %v653 = vpack.c.b16 %v579, %v578
    %v654 = vpack.c.b16 %v581, %v580
    %v655 = vpack.c.b16 %v583, %v582
    %728 = vmatprep.subr.bf16.mxu0 0
    %729 = vmatpush1.bf16.msra.mxu0 %v584
    %730 = vmatprep.subr.bf16.mxu0 0
    %731 = vmatpush1.bf16.msra.mxu0 %v585
    %732 = vmatprep.subr.bf16.mxu0 0
    %733 = vmatpush1.bf16.msra.mxu0 %v586
    %734 = vmatprep.subr.bf16.mxu0 0
    %735 = vmatpush1.bf16.msra.mxu0 %v587
    %736 = vmatprep.subr.bf16.mxu0 0
    %737 = vmatpush1.bf16.msra.mxu0 %v588
    %738 = vmatprep.subr.bf16.mxu0 0
    %739 = vmatpush1.bf16.msra.mxu0 %v589
    %740 = vmatprep.subr.bf16.mxu0 0
    %741 = vmatpush1.bf16.msra.mxu0 %v590
    %742 = vmatprep.subr.bf16.mxu0 0
    %743 = vmatpush1.bf16.msra.mxu0 %v591
    %744 = vmatprep.subr.bf16.mxu0 0
    %745 = vmatpush1.bf16.msra.mxu0 %v592
    %746 = vmatprep.subr.bf16.mxu0 0
    %747 = vmatpush1.bf16.msra.mxu0 %v593
    %748 = vmatprep.subr.bf16.mxu0 0
    %749 = vmatpush1.bf16.msra.mxu0 %v594
    %750 = vmatprep.subr.bf16.mxu0 0
    %751 = vmatpush1.bf16.msra.mxu0 %v595
    %752 = vmatprep.subr.bf16.mxu0 0
    %753 = vmatpush1.bf16.msra.mxu0 %v596
    %754 = vmatprep.subr.bf16.mxu0 0
    %755 = vmatpush1.bf16.msra.mxu0 %v597
    %756 = vmatprep.subr.bf16.mxu0 0
    %757 = vmatpush1.bf16.msra.mxu0 %v598
    %758 = vmatprep.subr.bf16.mxu0 0
    %759 = vmatpush1.bf16.msra.mxu0 %v599
    %760 = vmatprep.mubr.bf16.mxu0 %v261
    %761 = vmatmul.mubr.bf16.gmra.mrb[0].mxu0 %v260
    %v762 = vpop.f32.mrb[0].mxu0
    %v763 = vadd.f32 0.0, %v762
    %v764 = vpop.f32.mrb[0].mxu0
    %v765 = vpop.f32.mrb[0].mxu0
    %v766 = vadd.f32 0.0, %v765
    %v767 = vpop.f32.mrb[0].mxu0
    %768 = vmatprep.mubr.bf16.mxu0 %v270
    %769 = vmatmul.mubr.bf16.gmra.mrb[0].mxu0 %v269
    %v770 = vpop.f32.mrb[0].mxu0
    %v771 = vadd.f32 0.0, %v770
    %v772 = vpop.f32.mrb[0].mxu0
    %v773 = vpop.f32.mrb[0].mxu0
    %v774 = vadd.f32 0.0, %v773
    %v775 = vpop.f32.mrb[0].mxu0
    %776 = vdwg.mxu0
    %777 = vmatprep.subr.bf16.mxu0 0
    %778 = vmatpush1.bf16.msra.mxu0 %v600
    %779 = vmatprep.subr.bf16.mxu0 0
    %780 = vmatpush1.bf16.msra.mxu0 %v601
    %781 = vmatprep.subr.bf16.mxu0 0
    %782 = vmatpush1.bf16.msra.mxu0 %v602
    %783 = vmatprep.subr.bf16.mxu0 0
    %784 = vmatpush1.bf16.msra.mxu0 %v603
    %785 = vmatprep.subr.bf16.mxu0 0
    %786 = vmatpush1.bf16.msra.mxu0 %v604
    %787 = vmatprep.subr.bf16.mxu0 0
    %788 = vmatpush1.bf16.msra.mxu0 %v605
    %789 = vmatprep.subr.bf16.mxu0 0
    %790 = vmatpush1.bf16.msra.mxu0 %v606
    %791 = vmatprep.subr.bf16.mxu0 0
    %792 = vmatpush1.bf16.msra.mxu0 %v607
    %793 = vmatprep.subr.bf16.mxu0 0
    %794 = vmatpush1.bf16.msra.mxu0 %v608
    %795 = vmatprep.subr.bf16.mxu0 0
    %796 = vmatpush1.bf16.msra.mxu0 %v609
    %797 = vmatprep.subr.bf16.mxu0 0
    %798 = vmatpush1.bf16.msra.mxu0 %v610
    %799 = vmatprep.subr.bf16.mxu0 0
    %800 = vmatpush1.bf16.msra.mxu0 %v611
    %801 = vmatprep.subr.bf16.mxu0 0
    %802 = vmatpush1.bf16.msra.mxu0 %v612
    %803 = vmatprep.subr.bf16.mxu0 0
    %804 = vmatpush1.bf16.msra.mxu0 %v613
    %805 = vmatprep.subr.bf16.mxu0 0
    %806 = vmatpush1.bf16.msra.mxu0 %v614
    %807 = vmatprep.subr.bf16.mxu0 0
    %808 = vmatpush1.bf16.msra.mxu0 %v615
    %809 = vmatprep.mubr.bf16.mxu0 %v263
    %810 = vmatmul.mubr.bf16.gmra.mrb[0].mxu0 %v262
    %v811 = vpop.f32.mrb[0].mxu0
    %v812 = vadd.f32 %v763, %v811
    %v813 = vpop.f32.mrb[0].mxu0
    %v814 = vpop.f32.mrb[0].mxu0
    %v815 = vadd.f32 %v766, %v814
    %v816 = vpop.f32.mrb[0].mxu0
    %817 = vmatprep.mubr.bf16.mxu0 %v272
    %818 = vmatmul.mubr.bf16.gmra.mrb[0].mxu0 %v271
    %v819 = vpop.f32.mrb[0].mxu0
    %v820 = vadd.f32 %v771, %v819
    %v821 = vpop.f32.mrb[0].mxu0
    %v822 = vpop.f32.mrb[0].mxu0
    %v823 = vadd.f32 %v774, %v822
    %v824 = vpop.f32.mrb[0].mxu0
    %825 = vdwg.mxu0
    %826 = vmatprep.subr.bf16.mxu0 0
    %827 = vmatpush1.bf16.msra.mxu0 %v616
    %828 = vmatprep.subr.bf16.mxu0 0
    %829 = vmatpush1.bf16.msra.mxu0 %v617
    %830 = vmatprep.subr.bf16.mxu0 0
    %831 = vmatpush1.bf16.msra.mxu0 %v618
    %832 = vmatprep.subr.bf16.mxu0 0
    %833 = vmatpush1.bf16.msra.mxu0 %v619
    %834 = vmatprep.subr.bf16.mxu0 0
    %835 = vmatpush1.bf16.msra.mxu0 %v620
    %836 = vmatprep.subr.bf16.mxu0 0
    %837 = vmatpush1.bf16.msra.mxu0 %v621
    %838 = vmatprep.subr.bf16.mxu0 0
    %839 = vmatpush1.bf16.msra.mxu0 %v622
    %840 = vmatprep.subr.bf16.mxu0 0
    %841 = vmatpush1.bf16.msra.mxu0 %v623
    %842 = vmatprep.subr.bf16.mxu0 0
    %843 = vmatpush1.bf16.msra.mxu0 %v624
    %844 = vmatprep.subr.bf16.mxu0 0
    %845 = vmatpush1.bf16.msra.mxu0 %v625
    %846 = vmatprep.subr.bf16.mxu0 0
    %847 = vmatpush1.bf16.msra.mxu0 %v626
    %848 = vmatprep.subr.bf16.mxu0 0
    %849 = vmatpush1.bf16.msra.mxu0 %v627
    %850 = vmatprep.subr.bf16.mxu0 0
    %851 = vmatpush1.bf16.msra.mxu0 %v628
    %852 = vmatprep.subr.bf16.mxu0 0
    %853 = vmatpush1.bf16.msra.mxu0 %v629
    %854 = vmatprep.subr.bf16.mxu0 0
    %855 = vmatpush1.bf16.msra.mxu0 %v630
    %856 = vmatprep.subr.bf16.mxu0 0
    %857 = vmatpush1.bf16.msra.mxu0 %v631
    %858 = vmatprep.mubr.bf16.mxu0 %v265
    %859 = vmatmul.mubr.bf16.gmra.mrb[0].mxu0 %v264
    %v860 = vpop.f32.mrb[0].mxu0
    %v861 = vadd.f32 %v812, %v860
    %v862 = vpop.f32.mrb[0].mxu0
    %v863 = vpop.f32.mrb[0].mxu0
    %v864 = vadd.f32 %v815, %v863
    %v865 = vpop.f32.mrb[0].mxu0
    %866 = vmatprep.mubr.bf16.mxu0 %v274
    %867 = vmatmul.mubr.bf16.gmra.mrb[0].mxu0 %v273
    %v868 = vpop.f32.mrb[0].mxu0
    %v869 = vadd.f32 %v820, %v868
    %v870 = vpop.f32.mrb[0].mxu0
    %v871 = vpop.f32.mrb[0].mxu0
    %v872 = vadd.f32 %v823, %v871
    %v873 = vpop.f32.mrb[0].mxu0
    %874 = vdwg.mxu0
    %875 = vmatprep.subr.bf16.mxu0 0
    %876 = vmatpush1.bf16.msra.mxu0 %v632
    %877 = vmatprep.subr.bf16.mxu0 0
    %878 = vmatpush1.bf16.msra.mxu0 %v633
    %879 = vmatprep.subr.bf16.mxu0 0
    %880 = vmatpush1.bf16.msra.mxu0 %v634
    %881 = vmatprep.subr.bf16.mxu0 0
    %882 = vmatpush1.bf16.msra.mxu0 %v635
    %883 = vmatprep.subr.bf16.mxu0 0
    %884 = vmatpush1.bf16.msra.mxu0 %v636
    %885 = vmatprep.subr.bf16.mxu0 0
    %886 = vmatpush1.bf16.msra.mxu0 %v637
    %887 = vmatprep.subr.bf16.mxu0 0
    %888 = vmatpush1.bf16.msra.mxu0 %v638
    %889 = vmatprep.subr.bf16.mxu0 0
    %890 = vmatpush1.bf16.msra.mxu0 %v639
    %891 = vmatprep.subr.bf16.mxu0 0
    %892 = vmatpush1.bf16.msra.mxu0 %v640
    %893 = vmatprep.subr.bf16.mxu0 0
    %894 = vmatpush1.bf16.msra.mxu0 %v641
    %895 = vmatprep.subr.bf16.mxu0 0
    %896 = vmatpush1.bf16.msra.mxu0 %v642
    %897 = vmatprep.subr.bf16.mxu0 0
    %898 = vmatpush1.bf16.msra.mxu0 %v643
    %899 = vmatprep.subr.bf16.mxu0 0
    %900 = vmatpush1.bf16.msra.mxu0 %v644
    %901 = vmatprep.subr.bf16.mxu0 0
    %902 = vmatpush1.bf16.msra.mxu0 %v645
    %903 = vmatprep.subr.bf16.mxu0 0
    %904 = vmatpush1.bf16.msra.mxu0 %v646
    %905 = vmatprep.subr.bf16.mxu0 0
    %906 = vmatpush1.bf16.msra.mxu0 %v647
    %907 = vmatprep.mubr.bf16.mxu0 %v267
    %908 = vmatmul.mubr.bf16.gmra.mrb[0].mxu0 %v266
    %v909 = vpop.f32.mrb[0].mxu0
    %v910 = vadd.f32 %v861, %v909
    %v911 = vpop.f32.mrb[0].mxu0
    %v912 = vpop.f32.mrb[0].mxu0
    %v913 = vadd.f32 %v864, %v912
    %v914 = vpop.f32.mrb[0].mxu0
    %915 = vmatprep.mubr.bf16.mxu0 %v276
    %916 = vmatmul.mubr.bf16.gmra.mrb[0].mxu0 %v275
    %v917 = vpop.f32.mrb[0].mxu0
    %v918 = vadd.f32 %v869, %v917
    %v919 = vpop.f32.mrb[0].mxu0
    %v920 = vpop.f32.mrb[0].mxu0
    %v921 = vadd.f32 %v872, %v920
    %v922 = vpop.f32.mrb[0].mxu0
    %923 = vdwg.mxu0
    %924 = vmatprep.subr.bf16.mxu0 0
    %925 = vmatpush1.bf16.msra.mxu0 %v648
    %926 = vmatprep.subr.bf16.mxu0 0
    %927 = vmatpush1.bf16.msra.mxu0 %v649
    %928 = vmatprep.subr.bf16.mxu0 0
    %929 = vmatpush1.bf16.msra.mxu0 %v650
    %930 = vmatprep.subr.bf16.mxu0 0
    %931 = vmatpush1.bf16.msra.mxu0 %v651
    %932 = vmatprep.subr.bf16.mxu0 0
    %933 = vmatpush1.bf16.msra.mxu0 %v652
    %934 = vmatprep.subr.bf16.mxu0 0
    %935 = vmatpush1.bf16.msra.mxu0 %v653
    %936 = vmatprep.subr.bf16.mxu0 0
    %937 = vmatpush1.bf16.msra.mxu0 %v654
    %938 = vmatprep.subr.bf16.mxu0 0
    %939 = vmatpush1.bf16.msra.mxu0 %v655
    %940 = vmatprep.subr.bf16.mxu0 0
    %941 = vmatpush1.bf16.msra.mxu0 0
    %942 = vmatprep.subr.bf16.mxu0 0
    %943 = vmatpush1.bf16.msra.mxu0 0
    %944 = vmatprep.subr.bf16.mxu0 0
    %945 = vmatpush1.bf16.msra.mxu0 0
    %946 = vmatprep.subr.bf16.mxu0 0
    %947 = vmatpush1.bf16.msra.mxu0 0
    %948 = vmatprep.subr.bf16.mxu0 0
    %949 = vmatpush1.bf16.msra.mxu0 0
    %950 = vmatprep.subr.bf16.mxu0 0
    %951 = vmatpush1.bf16.msra.mxu0 0
    %952 = vmatprep.subr.bf16.mxu0 0
    %953 = vmatpush1.bf16.msra.mxu0 0
    %954 = vmatprep.subr.bf16.mxu0 0
    %955 = vmatpush1.bf16.msra.mxu0 0
    %956 = vmatprep.mubr.bf16.mxu0 0
    %957 = vmatmul.mubr.bf16.gmra.mrb[0].mxu0 %v268
    %v958 = vpop.f32.mrb[0].mxu0
    %v959 = vadd.f32 %v910, %v958
    %v960 = vpop.f32.mrb[0].mxu0
    %v961 = vpop.f32.mrb[0].mxu0
    %v962 = vadd.f32 %v913, %v961
    %v963 = vpop.f32.mrb[0].mxu0
    %964 = vmatprep.mubr.bf16.mxu0 0
    %965 = vmatmul.mubr.bf16.gmra.mrb[0].mxu0 %v277
    %v966 = vpop.f32.mrb[0].mxu0
    %v967 = vadd.f32 %v918, %v966
    %v968 = vpop.f32.mrb[0].mxu0
    %v969 = vpop.f32.mrb[0].mxu0
    %v970 = vadd.f32 %v921, %v969
    %v971 = vpop.f32.mrb[0].mxu0
    %972 = vdwg.mxu0
    %v973 = vld [vmem:[%s2] sm:$0x1]
    %v975 = vlaneseq
    %v976 = vshrl.u32 %v975, 7
    %v977 = vsub.s32 0, %v976
    %v978 = vrot.slane %v973, %v977
    %v980 = vmul.f32 %v959, %v978
    %v981 = vmul.f32 %v962, %v978
    %v982 = vmul.f32 %v967, %v978
    %v983 = vmul.f32 %v970, %v978
    %v984 = vld [vmem:[%s3] sm:$0x1]
    %v986 = vlaneseq
    %v987 = vshrl.u32 %v986, 7
    %v988 = vsub.s32 0, %v987
    %v989 = vrot.slane %v984, %v988
    %v991 = vadd.f32 %v980, %v989
    %v992 = vadd.f32 %v981, %v989
    %v993 = vadd.f32 %v982, %v989
    %v994 = vadd.f32 %v983, %v989
    %v995 = vld [vmem:[%s4] sm:$0xf]
    %v996 = vld [vmem:[%s4 + $0x4] sm:$0xf]
    %v997 = vld [vmem:[%s4 + $0x8] sm:$0xf]
    %v998 = vld [vmem:[%s4 + $0xc] sm:$0xf]
    %v999 = vld [vmem:[%s5] sm:$0xf]
    %v1000 = vld [vmem:[%s5 + $0x4] sm:$0xf]
    %v1001 = vld [vmem:[%s5 + $0x8] sm:$0xf]
    %v1002 = vld [vmem:[%s5 + $0xc] sm:$0xf]
    %v1003 = vld [vmem:[%s5 + $0x10] sm:$0xf]
    %v1004 = vld [vmem:[%s5 + $0x14] sm:$0xf]
    %v1005 = vld [vmem:[%s5 + $0x18] sm:$0xf]
    %v1006 = vld [vmem:[%s5 + $0x1c] sm:$0xf]
    %v1007 = vld [vmem:[%s5 + $0x20] sm:$0xf]
    %v1008 = vld [vmem:[%s5 + $0x24] sm:$0xf]
    %v1009 = vld [vmem:[%s5 + $0x28] sm:$0xf]
    %v1010 = vld [vmem:[%s5 + $0x2c] sm:$0xf]
    %v1011 = vld [vmem:[%s5 + $0x30] sm:$0xf]
    %v1012 = vld [vmem:[%s5 + $0x34] sm:$0xf]
    %v1013 = vld [vmem:[%s5 + $0x38] sm:$0xf]
    %v1014 = vld [vmem:[%s5 + $0x3c] sm:$0xf]
    %v1019 = vunpack.c.l.b16 %v995
    %v1020 = vunpack.c.l.b16 %v996
    %v1021 = vunpack.c.l.b16 %v997
    %v1022 = vunpack.c.l.b16 %v998
    %v1023 = vpack.c.b16 %v1020, %v1019
    %v1024 = vpack.c.b16 %v1022, %v1021
    %v1043 = vunpack.c.l.b16 %v999
    %v1044 = vunpack.c.l.b16 %v1000
    %v1045 = vunpack.c.l.b16 %v1001
    %v1046 = vunpack.c.l.b16 %v1002
    %v1047 = vunpack.c.l.b16 %v1003
    %v1048 = vunpack.c.l.b16 %v1004
    %v1049 = vunpack.c.l.b16 %v1005
    %v1050 = vunpack.c.l.b16 %v1006
    %v1051 = vunpack.c.l.b16 %v1007
    %v1052 = vunpack.c.l.b16 %v1008
    %v1053 = vunpack.c.l.b16 %v1009
    %v1054 = vunpack.c.l.b16 %v1010
    %v1055 = vunpack.c.l.b16 %v1011
    %v1056 = vunpack.c.l.b16 %v1012
    %v1057 = vunpack.c.l.b16 %v1013
    %v1058 = vunpack.c.l.b16 %v1014
    %v1059 = vpack.c.b16 %v1044, %v1043
    %v1060 = vpack.c.b16 %v1046, %v1045
    %v1061 = vpack.c.b16 %v1048, %v1047
    %v1062 = vpack.c.b16 %v1050, %v1049
    %v1063 = vpack.c.b16 %v1052, %v1051
    %v1064 = vpack.c.b16 %v1054, %v1053
    %v1065 = vpack.c.b16 %v1056, %v1055
    %v1066 = vpack.c.b16 %v1058, %v1057
    %1075 = vmatprep.subr.bf16.mxu0 0
    %1076 = vmatpush1.bf16.msra.mxu0 %v1059
    %1077 = vmatprep.subr.bf16.mxu0 0
    %1078 = vmatpush1.bf16.msra.mxu0 %v1060
    %1079 = vmatprep.subr.bf16.mxu0 0
    %1080 = vmatpush1.bf16.msra.mxu0 %v1061
    %1081 = vmatprep.subr.bf16.mxu0 0
    %1082 = vmatpush1.bf16.msra.mxu0 %v1062
    %1083 = vmatprep.subr.bf16.mxu0 0
    %1084 = vmatpush1.bf16.msra.mxu0 %v1063
    %1085 = vmatprep.subr.bf16.mxu0 0
    %1086 = vmatpush1.bf16.msra.mxu0 %v1064
    %1087 = vmatprep.subr.bf16.mxu0 0
    %1088 = vmatpush1.bf16.msra.mxu0 %v1065
    %1089 = vmatprep.subr.bf16.mxu0 0
    %1090 = vmatpush1.bf16.msra.mxu0 %v1066
    %1091 = vmatprep.subr.bf16.mxu0 0
    %1092 = vmatpush1.bf16.msra.mxu0 0
    %1093 = vmatprep.subr.bf16.mxu0 0
    %1094 = vmatpush1.bf16.msra.mxu0 0
    %1095 = vmatprep.subr.bf16.mxu0 0
    %1096 = vmatpush1.bf16.msra.mxu0 0
    %1097 = vmatprep.subr.bf16.mxu0 0
    %1098 = vmatpush1.bf16.msra.mxu0 0
    %1099 = vmatprep.subr.bf16.mxu0 0
    %1100 = vmatpush1.bf16.msra.mxu0 0
    %1101 = vmatprep.subr.bf16.mxu0 0
    %1102 = vmatpush1.bf16.msra.mxu0 0
    %1103 = vmatprep.subr.bf16.mxu0 0
    %1104 = vmatpush1.bf16.msra.mxu0 0
    %1105 = vmatprep.subr.bf16.mxu0 0
    %1106 = vmatpush1.bf16.msra.mxu0 0
    %1107 = vmatprep.mubr.bf16.mxu0 0
    %1108 = vmatmul.mubr.bf16.gmra.mrb[0].mxu0 %v1023
    %v1109 = vpop.f32.mrb[0].mxu0
    %v1110 = vadd.f32 0.0, %v1109
    %v1111 = vpop.f32.mrb[0].mxu0
    %v1112 = vpop.f32.mrb[0].mxu0
    %v1113 = vadd.f32 0.0, %v1112
    %v1114 = vpop.f32.mrb[0].mxu0
    %1115 = vmatprep.mubr.bf16.mxu0 0
    %1116 = vmatmul.mubr.bf16.gmra.mrb[0].mxu0 %v1024
    %v1117 = vpop.f32.mrb[0].mxu0
    %v1118 = vadd.f32 0.0, %v1117
    %v1119 = vpop.f32.mrb[0].mxu0
    %v1120 = vpop.f32.mrb[0].mxu0
    %v1121 = vadd.f32 0.0, %v1120
    %v1122 = vpop.f32.mrb[0].mxu0
    %1123 = vdwg.mxu0
    %v1124 = vld [vmem:[%s6] sm:$0x1]
    %v1126 = vlaneseq
    %v1127 = vshrl.u32 %v1126, 7
    %v1128 = vsub.s32 0, %v1127
    %v1129 = vrot.slane %v1124, %v1128
    %v1131 = vmul.f32 %v1110, %v1129
    %v1132 = vmul.f32 %v1113, %v1129
    %v1133 = vmul.f32 %v1118, %v1129
    %v1134 = vmul.f32 %v1121, %v1129
    %v1135 = vld [vmem:[%s7] sm:$0x1]
    %v1137 = vlaneseq
    %v1138 = vshrl.u32 %v1137, 7
    %v1139 = vsub.s32 0, %v1138
    %v1140 = vrot.slane %v1135, %v1139
    %v1142 = vadd.f32 %v1131, %v1140
    %v1143 = vadd.f32 %v1132, %v1140
    %v1144 = vadd.f32 %v1133, %v1140
    %v1145 = vadd.f32 %v1134, %v1140
    %v1146 = vadd.f32 %v991, %v1142
    %v1147 = vadd.f32 %v992, %v1143
    %v1148 = vadd.f32 %v993, %v1144
    %v1149 = vadd.f32 %v994, %v1145
    %v1150 = vmax.f32 %v1146, 0.0
    %v1151 = vmax.f32 %v1147, 0.0
    %v1152 = vmax.f32 %v1148, 0.0
    %v1153 = vmax.f32 %v1149, 0.0
    %v1154 = vld [vmem:[%s8] sm:$0x3]
    %vm1155 = vcmask 261120
    %v1157 = vsel %vm1155, %v1154, 0
    %1159 = vmatprep.subr.mxu0 0.0
    %1160 = vmatpush1.msra.mxu0 %v1150
    %1161 = vmatprep.subr.mxu0 0.0
    %1162 = vmatpush1.msra.mxu0 %v1151
    %1163 = vmatprep.subr.mxu0 0.0
    %1164 = vmatpush1.msra.mxu0 %v1152
    %1165 = vmatprep.subr.mxu0 0.0
    %1166 = vmatpush1.msra.mxu0 %v1153
    %1167 = vmatprep.subr.mxu0 0.0
    %1168 = vmatpush1.msra.mxu0 0.0
    %1169 = vmatprep.subr.mxu0 0.0
    %1170 = vmatpush1.msra.mxu0 0.0
    %1171 = vmatprep.subr.mxu0 0.0
    %1172 = vmatpush1.msra.mxu0 0.0
    %1173 = vmatprep.subr.mxu0 0.0
    %1174 = vmatpush1.msra.mxu0 0.0
    %1175 = vmatprep.subr.mxu0 0.0
    %1176 = vmatpush1.msra.mxu0 0.0
    %1177 = vmatprep.subr.mxu0 0.0
    %1178 = vmatpush1.msra.mxu0 0.0
    %1179 = vmatprep.subr.mxu0 0.0
    %1180 = vmatpush1.msra.mxu0 0.0
    %1181 = vmatprep.subr.mxu0 0.0
    %1182 = vmatpush1.msra.mxu0 0.0
    %1183 = vmatprep.subr.mxu0 0.0
    %1184 = vmatpush1.msra.mxu0 0.0
    %1185 = vmatprep.subr.mxu0 0.0
    %1186 = vmatpush1.msra.mxu0 0.0
    %1187 = vmatprep.subr.mxu0 0.0
    %1188 = vmatpush1.msra.mxu0 0.0
    %1189 = vmatprep.subr.mxu0 0.0
    %1190 = vmatpush1.msra.mxu0 0.0
    %1191 = vmatprep.subr.mxu0 0.0
    %1192 = vmatpush1.msra.mxu0 0.0
    %1193 = vmatprep.subr.mxu0 0.0
    %1194 = vmatpush1.msra.mxu0 0.0
    %1195 = vmatprep.subr.mxu0 0.0
    %1196 = vmatpush1.msra.mxu0 0.0
    %1197 = vmatprep.subr.mxu0 0.0
    %1198 = vmatpush1.msra.mxu0 0.0
    %1199 = vmatprep.subr.mxu0 0.0
    %1200 = vmatpush1.msra.mxu0 0.0
    %1201 = vmatprep.subr.mxu0 0.0
    %1202 = vmatpush1.msra.mxu0 0.0
    %1203 = vmatprep.subr.mxu0 0.0
    %1204 = vmatpush1.msra.mxu0 0.0
    %1205 = vmatprep.subr.mxu0 0.0
    %1206 = vmatpush1.msra.mxu0 0.0
    %1207 = vmatprep.subr.mxu0 0.0
    %1208 = vmatpush1.msra.mxu0 0.0
    %1209 = vmatprep.subr.mxu0 0.0
    %1210 = vmatpush1.msra.mxu0 0.0
    %1211 = vmatprep.subr.mxu0 0.0
    %1212 = vmatpush1.msra.mxu0 0.0
    %1213 = vmatprep.subr.mxu0 0.0
    %1214 = vmatpush1.msra.mxu0 0.0
    %1215 = vmatprep.subr.mxu0 0.0
    %1216 = vmatpush1.msra.mxu0 0.0
    %1217 = vmatprep.subr.mxu0 0.0
    %1218 = vmatpush1.msra.mxu0 0.0
    %1219 = vmatprep.subr.mxu0 0.0
    %1220 = vmatpush1.msra.mxu0 0.0
    %1221 = vmatprep.subr.mxu0 0.0
    %1222 = vmatpush1.msra.mxu0 0.0
    %1223 = vmatprep.mubr.f32.mxu0 0.0
    %1224 = vmatmul.mubr.f32.gmra.mrb[0].mxu0 %v1157
    %v1225 = vpop.f32.mrb[0].mxu0
    %v1226 = vadd.f32 0.0, %v1225
    %v1227 = vpop.f32.mrb[0].mxu0
    %1228 = vdwg.mxu0
    %v1229 = vld [vmem:[%s9] sm:$0xff]
    %v1230 = vld [vmem:[%s9 + $0x8] sm:$0xff]
    %v1231 = vld [vmem:[%s9 + $0x10] sm:$0xff]
    %v1232 = vld [vmem:[%s9 + $0x18] sm:$0xff]
    %v1233 = vld [vmem:[%s9 + $0x20] sm:$0xff]
    %v1234 = vld [vmem:[%s9 + $0x28] sm:$0xff]
    %v1235 = vld [vmem:[%s9 + $0x30] sm:$0xff]
    %v1236 = vld [vmem:[%s9 + $0x38] sm:$0xff]
    %v1237 = vld [vmem:[%s9 + $0x40] sm:$0xff]
    %v1238 = vld [vmem:[%s9 + $0x48] sm:$0xff]
    %v1239 = vld [vmem:[%s9 + $0x50] sm:$0xff]
    %v1240 = vld [vmem:[%s9 + $0x58] sm:$0xff]
    %v1241 = vld [vmem:[%s9 + $0x60] sm:$0xff]
    %v1242 = vld [vmem:[%s9 + $0x68] sm:$0xff]
    %v1243 = vld [vmem:[%s9 + $0x70] sm:$0xff]
    %v1244 = vld [vmem:[%s9 + $0x78] sm:$0xff]
    %v1245 = vld [vmem:[%s10] sm:$0x1]
    %v1247 = vlaneseq
    %v1248 = vshrl.u32 %v1247, 7
    %v1249 = vsub.s32 0, %v1248
    %v1250 = vrot.slane %v1245, %v1249
    %1252 = vmatprep.subr.mxu0 0.0
    %1253 = vmatpush1.msra.mxu0 %v1229
    %1254 = vmatprep.subr.mxu0 0.0
    %1255 = vmatpush1.msra.mxu0 %v1230
    %1256 = vmatprep.subr.mxu0 0.0
    %1257 = vmatpush1.msra.mxu0 %v1231
    %1258 = vmatprep.subr.mxu0 0.0
    %1259 = vmatpush1.msra.mxu0 %v1232
    %1260 = vmatprep.subr.mxu0 0.0
    %1261 = vmatpush1.msra.mxu0 %v1233
    %1262 = vmatprep.subr.mxu0 0.0
    %1263 = vmatpush1.msra.mxu0 %v1234
    %1264 = vmatprep.subr.mxu0 0.0
    %1265 = vmatpush1.msra.mxu0 %v1235
    %1266 = vmatprep.subr.mxu0 0.0
    %1267 = vmatpush1.msra.mxu0 %v1236
    %1268 = vmatprep.subr.mxu0 0.0
    %1269 = vmatpush1.msra.mxu0 %v1237
    %1270 = vmatprep.subr.mxu0 0.0
    %1271 = vmatpush1.msra.mxu0 %v1238
    %1272 = vmatprep.subr.mxu0 0.0
    %1273 = vmatpush1.msra.mxu0 %v1239
    %1274 = vmatprep.subr.mxu0 0.0
    %1275 = vmatpush1.msra.mxu0 %v1240
    %1276 = vmatprep.subr.mxu0 0.0
    %1277 = vmatpush1.msra.mxu0 %v1241
    %1278 = vmatprep.subr.mxu0 0.0
    %1279 = vmatpush1.msra.mxu0 %v1242
    %1280 = vmatprep.subr.mxu0 0.0
    %1281 = vmatpush1.msra.mxu0 %v1243
    %1282 = vmatprep.subr.mxu0 0.0
    %1283 = vmatpush1.msra.mxu0 %v1244
    %1284 = vmatprep.subr.mxu0 0.0
    %1285 = vmatpush1.msra.mxu0 0.0
    %1286 = vmatprep.subr.mxu0 0.0
    %1287 = vmatpush1.msra.mxu0 0.0
    %1288 = vmatprep.subr.mxu0 0.0
    %1289 = vmatpush1.msra.mxu0 0.0
    %1290 = vmatprep.subr.mxu0 0.0
    %1291 = vmatpush1.msra.mxu0 0.0
    %1292 = vmatprep.subr.mxu0 0.0
    %1293 = vmatpush1.msra.mxu0 0.0
    %1294 = vmatprep.subr.mxu0 0.0
    %1295 = vmatpush1.msra.mxu0 0.0
    %1296 = vmatprep.subr.mxu0 0.0
    %1297 = vmatpush1.msra.mxu0 0.0
    %1298 = vmatprep.subr.mxu0 0.0
    %1299 = vmatpush1.msra.mxu0 0.0
    %1300 = vmatprep.subr.mxu0 0.0
    %1301 = vmatpush1.msra.mxu0 0.0
    %1302 = vmatprep.subr.mxu0 0.0
    %1303 = vmatpush1.msra.mxu0 0.0
    %1304 = vmatprep.subr.mxu0 0.0
    %1305 = vmatpush1.msra.mxu0 0.0
    %1306 = vmatprep.subr.mxu0 0.0
    %1307 = vmatpush1.msra.mxu0 0.0
    %1308 = vmatprep.subr.mxu0 0.0
    %1309 = vmatpush1.msra.mxu0 0.0
    %1310 = vmatprep.subr.mxu0 0.0
    %1311 = vmatpush1.msra.mxu0 0.0
    %1312 = vmatprep.subr.mxu0 0.0
    %1313 = vmatpush1.msra.mxu0 0.0
    %1314 = vmatprep.subr.mxu0 0.0
    %1315 = vmatpush1.msra.mxu0 0.0
    %1316 = vmatprep.mubr.f32.mxu0 0.0
    %1317 = vmatmul.mubr.f32.gmra.mrb[0].mxu0 %v1226
    %v1318 = vpop.f32.mrb[0].mxu0
    %v1319 = vadd.f32 %v1250, %v1318
    %v1320 = vpop.f32.mrb[0].mxu0
    %1321 = vdwg.mxu0
    %vm1322 = vcmask 74752
    %1323 = vst.msk [vmem:[#allocation2] sm:$0x3] %vm1322, %v1319
    // Predicated region
    $region46: #{model_forward.9} parent=1 // pred_check
      _
    $region47: #{model_forward.9} parent=1 // pred_check_branch
      %1325 = sbr.rel (0) target = $region49
    $region48: #{model_forward.9} parent=1 // pred_region
      %s1327 = ssub.s32 32, 32
      %1328 = vsyncadd [#allocation3], %s1327
      %s1330 = sshll.u32 [#allocation2], 4
      %s1331 = int_to_ptr.vmem [resolvable:$true] %s1330
      %1333 = dma.vmem_to_hbm [thread:$0]  %s1331, 32, %s11, [#allocation3]
    $region49: #{model_forward.9} parent=1 // pred_fallthru
      _
    // Predicated region
    $region50: #{model_forward.9} parent=1 // pred_check
      _
    $region51: #{model_forward.9} parent=1 // pred_check_branch
      %1335 = sbr.rel (0) target = $region53
    $region52: #{model_forward.9} parent=1 // pred_region
      %1336 = dma.done [#allocation3], 32
    $region53: #{model_forward.9} parent=1 // pred_fallthru
      _
    %1337 = vsyncpa [#allocation3], 1

</llo_original>
